<compile_context>
chip_gen: v7x
topology: tpu7x:2x2x1
jax: 0.10.0
libtpu: 0.0.40
codegen_flags: <defaults>
</compile_context>

<pallas_src>
import jax
import jax.numpy as jnp
from jax.experimental import pallas as pl
from jax.experimental.pallas import tpu as pltpu

EPS = 1e-5  # torch nn.LayerNorm default eps


def _layernorm(x, w, b):
    # x: (TB, P, D), w/b: (1, D); normalize over last dim (biased variance, torch-style)
    mean = jnp.mean(x, axis=-1, keepdims=True)
    var = jnp.mean(jnp.square(x - mean), axis=-1, keepdims=True)
    return (x - mean) * jax.lax.rsqrt(var + EPS) * w + b


def _gelu(x):
    # tanh-approximate GELU (EUP); ~1e-3 abs deviation from torch's exact erf GELU.
    # TODO(synk): switch back to the erf form if exact parity with torch.nn.GELU is required.
    c = 0.7978845608028654  # sqrt(2/pi)
    return 0.5 * x * (1.0 + jnp.tanh(c * (x + 0.044715 * x * x * x)))


def _token_matmul(w, x):
    """out[b, p, :] = sum_q w[p, q] * x[b, q, :]   (VPU broadcast-MACs).

    P is tiny (e.g. 8): a systolic MXU pass would run at <1% fill on every TPU
    generation, so the contraction is unrolled as P broadcast multiply-adds
    over the (TB, D) rows instead.  No weight broadcast is materialized.
    """
    TB, P, D = x.shape
    out = None
    for q in range(P):  # static unroll; P is a compile-time constant
        col = w[:, q:q + 1]                        # (P, 1) weight column q
        term = col[None, :, :] * x[:, q:q + 1, :]  # (1,P,1) * (TB,1,D) -> (TB,P,D)
        out = term if out is None else out + term
    return out


def fused_mixer_kernel(
    x_ref,                                   # (TB, P, D) input slab (read only at layer 0)
    ln1w_ref, ln1b_ref,                      # (L, 1, D) f32 (VMEM-resident, whole stack)
    pw1_ref, pb1_ref, pw2_ref, pb2_ref,      # (L, P, P) f32, (L, P, 1) f32, ...
    ln2w_ref, ln2b_ref,                      # (L, 1, D) f32
    cw1t_ref, cb1_ref, cw2t_ref, cb2_ref,    # (L, D, D) bf16, (L, 1, D) f32, ...
    out_ref,                                 # (TB, P, D) f32: resident activations + output
):
    l = pl.program_id(1)
    TB, P, D = out_ref.shape

    # Layer 0 of each batch block: load activations into the resident output buffer.
    @pl.when(l == 0)
    def _():
        out_ref[...] = x_ref[...]

    x = out_ref[...]  # (TB, P, D) f32

    # ---- token (patch) mixing: LN -> Linear(P,P) -> GELU -> Linear(P,P) -> residual ----
    # TODO(synk): Dropout(0.2) has no effect in eval; treated as identity.
    xn = _layernorm(x, ln1w_ref[l], ln1b_ref[l])
    h = _token_matmul(pw1_ref[l], xn) + pb1_ref[l]         # bias (P,1) broadcasts over (TB,P,D)
    h = _gelu(h)
    h = _token_matmul(pw2_ref[l], h) + pb2_ref[l]
    # Stage the token-mix residual through the resident VMEM buffer (bounds liveness).
    out_ref[...] = h + x

    # ---- channel mixing: LN -> Linear(D,D) -> GELU -> Linear(D,D) -> residual ----
    # Fold batch into M: (TB*P, D) @ (D, D) fills the MXU M dimension (TB*P >= 256).
    x = out_ref[...]
    xn2 = _layernorm(x, ln2w_ref[l], ln2b_ref[l])
    xn2_2d = xn2.reshape(TB * P, D).astype(jnp.bfloat16)
    h2 = jnp.dot(xn2_2d, cw1t_ref[l], preferred_element_type=jnp.float32) + cb1_ref[l]
    h2 = _gelu(h2)
    h2 = jnp.dot(h2.astype(jnp.bfloat16), cw2t_ref[l],
                 preferred_element_type=jnp.float32) + cb2_ref[l]
    out_ref[...] = h2.reshape(TB, P, D) + x
    # No final copy needed: out_ref IS the resident accumulator; its block index is
    # constant across the layer axis, so HBM writeback happens once per batch block.


def _pick_tb(B, P):
    """Pick the per-step batch tile.

    Two batch blocks keep both v7x TensorCores busy via the "parallel" axis,
    provided TB*P still fills the MXU M dimension; otherwise fall back to a
    single block (best for single-TC v5e/v6e).  Weights are fully VMEM-resident,
    so multiple batch blocks cost no extra weight HBM traffic.
    """
    if B % 2 == 0 and (B // 2) * P >= 128:
        return B // 2
    return B


def stacked_mixer(x, params, *, tb=None):
    """Run the full stacked mixer in one fused Pallas kernel.

    x: (B, P, D) float32.  params: tuple of 12 arrays, each with a leading L axis.
    The whole stacked weight tensor is kept VMEM-resident (fine for small L*D*D).
    TODO(synk): for production-sized P/D, switch w_specs back to per-layer
    (l, 0, 0) indexing and set pltpu.CompilerParams(vmem_limit_bytes=...) with a
    per-generation TB (v7x has only 64 MiB physical VMEM).
    """
    B, P, D = x.shape
    if tb is None:
        tb = _pick_tb(B, P)
    assert B % tb == 0, f"tb={tb} must divide B={B}"
    L = params[0].shape[0]

    x_spec = pl.BlockSpec((tb, P, D), lambda b, l: (b, 0, 0))
    out_spec = pl.BlockSpec((tb, P, D), lambda b, l: (b, 0, 0))
    # Whole stacked weight arrays, constant block index -> DMA'd once, VMEM-resident;
    # the kernel indexes the layer with pl.program_id(1).
    w_specs = [pl.BlockSpec(p.shape, lambda b, l: (0, 0, 0)) for p in params]

    return pl.pallas_call(
        fused_mixer_kernel,
        out_shape=jax.ShapeDtypeStruct((B, P, D), x.dtype),
        grid_spec=pltpu.PrefetchScalarGridSpec(
            num_scalar_prefetch=0,
            grid=(B // tb, L),
            in_specs=[x_spec] + w_specs,
            out_specs=out_spec,
            scratch_shapes=[],
        ),
        compiler_params=pltpu.CompilerParams(
            dimension_semantics=("parallel", "arbitrary"),
        ),
    )(x, *params)


# ----------------------- parameter init (deterministic, PyTorch-like) -----------------------
def _linear_init(key, fan_in, out_dim, in_dim):
    kw, kb = jax.random.split(key)
    bound = 1.0 / jnp.sqrt(fan_in)
    W = jax.random.uniform(kw, (out_dim, in_dim), jnp.float32, -bound, bound)
    b = jax.random.uniform(kb, (out_dim,), jnp.float32, -bound, bound)
    return W, b


def init_params(key, patch, dim, layers):
    """Build stacked (L, ...) parameter arrays.

    Channel-mix (DxD) weights are stored bf16 (MXU operands); patch-mix (PxP)
    weights stay f32 (they are consumed on the VPU).
    """
    pW1s, pb1s, pW2s, pb2s = [], [], [], []
    cW1s, cb1s, cW2s, cb2s = [], [], [], []
    for _ in range(layers):
        key, k1, k2, k3, k4 = jax.random.split(key, 5)
        W, b = _linear_init(k1, patch, patch, patch)
        pW1s.append(W); pb1s.append(b.reshape(patch, 1))
        W, b = _linear_init(k2, patch, patch, patch)
        pW2s.append(W); pb2s.append(b.reshape(patch, 1))
        W, b = _linear_init(k3, dim, dim, dim)
        cW1s.append(W.T); cb1s.append(b.reshape(1, dim))   # pre-transposed: x @ W.T
        W, b = _linear_init(k4, dim, dim, dim)
        cW2s.append(W.T); cb2s.append(b.reshape(1, dim))

    stack = lambda xs: jnp.stack(xs, axis=0)
    L = layers
    ln1w = jnp.ones((L, 1, dim), jnp.float32)
    ln1b = jnp.zeros((L, 1, dim), jnp.float32)
    ln2w = jnp.ones((L, 1, dim), jnp.float32)
    ln2b = jnp.zeros((L, 1, dim), jnp.float32)

    return (
        ln1w, ln1b,
        stack(pW1s), stack(pb1s),
        stack(pW2s), stack(pb2s),
        ln2w, ln2b,
        stack(cW1s).astype(jnp.bfloat16), stack(cb1s),
        stack(cW2s).astype(jnp.bfloat16), stack(cb2s),
    )


# -------- pure-JAX reference (torch semantics, f32 math, exact erf GELU) --------
def reference_forward(x, params):
    (ln1w, ln1b, pW1, pb1, pW2, pb2, ln2w, ln2b, cW1t, cb1, cW2t, cb2) = params
    L = ln1w.shape[0]

    def ln(x, w, b):
        m = jnp.mean(x, axis=-1, keepdims=True)
        v = jnp.mean((x - m) ** 2, axis=-1, keepdims=True)
        return (x - m) / jnp.sqrt(v + EPS) * w + b

    gelu = lambda t: 0.5 * t * (1.0 + jax.lax.erf(t / jnp.sqrt(2.0)))

    for l in range(L):
        W1 = pW1[l].astype(jnp.float32)
        W2 = pW2[l].astype(jnp.float32)
        C1 = cW1t[l].astype(jnp.float32)
        C2 = cW2t[l].astype(jnp.float32)

        xn = ln(x, ln1w[l], ln1b[l])                  # (B, P, D)
        xt = jnp.swapaxes(xn, -2, -1)                 # (B, D, P)
        h = gelu(xt @ W1.T + pb1[l].reshape(-1)) @ W2.T + pb2[l].reshape(-1)
        x = jnp.swapaxes(h, -2, -1) + x               # residual
        patch_x = x
        xn2 = ln(x, ln2w[l], ln2b[l])
        h2 = gelu(xn2 @ C1 + cb1[l]) @ C2 + cb2[l]
        x = h2 + patch_x
    return x


if __name__ == "__main__":
    # batch, max_length (patch), feature_dim (dim), layers.
    # D is a multiple of 128 (lane-dense stores).  TB = B//2 = 32 so that
    # TB*P = 256 rows fill the v6e/v7x MXU M dimension while the two batch
    # blocks keep both v7x TensorCores busy on the "parallel" grid axis.
    B, P, D, L = 64, 8, 128, 2

    key = jax.random.PRNGKey(0)
    kx, kp = jax.random.split(key)
    x = jax.random.normal(kx, (B, P, D), jnp.float32)
    params = init_params(kp, P, D, L)

    out = stacked_mixer(x, params)          # auto TB = B // 2 = 32
    out = jax.block_until_ready(out)

    ref = reference_forward(x, params)
    assert out.shape == (B, P, D)
    max_err = float(jnp.max(jnp.abs(out - ref)))
    # Tolerance loosened for bf16 channel matmuls + tanh-approx GELU vs f32/erf reference.
    assert jnp.allclose(out, ref, atol=5e-2, rtol=5e-2), f"mismatch vs reference (max abs err {max_err})"

    print("KERNEL_OK")
</pallas_src>

<mosaic_0001>
module attributes {stable_mosaic.version = 11 : i64} {
  func.func @fused_mixer_kernel(%arg0: i32, %arg1: i32, %arg2: memref<32x8x128xf32, #tpu.memory_space<vmem>>, %arg3: memref<2x1x128xf32, #tpu.memory_space<vmem>>, %arg4: memref<2x1x128xf32, #tpu.memory_space<vmem>>, %arg5: memref<2x8x8xf32, #tpu.memory_space<vmem>>, %arg6: memref<2x8x1xf32, #tpu.memory_space<vmem>>, %arg7: memref<2x8x8xf32, #tpu.memory_space<vmem>>, %arg8: memref<2x8x1xf32, #tpu.memory_space<vmem>>, %arg9: memref<2x1x128xf32, #tpu.memory_space<vmem>>, %arg10: memref<2x1x128xf32, #tpu.memory_space<vmem>>, %arg11: memref<2x128x128xbf16, #tpu.memory_space<vmem>>, %arg12: memref<2x1x128xf32, #tpu.memory_space<vmem>>, %arg13: memref<2x128x128xbf16, #tpu.memory_space<vmem>>, %arg14: memref<2x1x128xf32, #tpu.memory_space<vmem>>, %arg15: memref<32x8x128xf32, #tpu.memory_space<vmem>>) attributes {dimension_semantics = [#tpu.dimension_semantics<parallel>, #tpu.dimension_semantics<arbitrary>], iteration_bounds = array<i64: 2, 2>, scalar_prefetch = 0 : i64, scratch_operands = 0 : i64, tpu.core_type = #tpu.core_type<tc>, window_params = [{transform_indices = @transform_0, window_bounds = array<i64: 32, 8, 128>}, {pipeline_mode = #tpu.pipeline_mode<synchronous>, transform_indices = @transform_1, window_bounds = array<i64: 2, 1, 128>}, {pipeline_mode = #tpu.pipeline_mode<synchronous>, transform_indices = @transform_2, window_bounds = array<i64: 2, 1, 128>}, {pipeline_mode = #tpu.pipeline_mode<synchronous>, transform_indices = @transform_3, window_bounds = array<i64: 2, 8, 8>}, {pipeline_mode = #tpu.pipeline_mode<synchronous>, transform_indices = @transform_4, window_bounds = array<i64: 2, 8, 1>}, {pipeline_mode = #tpu.pipeline_mode<synchronous>, transform_indices = @transform_5, window_bounds = array<i64: 2, 8, 8>}, {pipeline_mode = #tpu.pipeline_mode<synchronous>, transform_indices = @transform_6, window_bounds = array<i64: 2, 8, 1>}, {pipeline_mode = #tpu.pipeline_mode<synchronous>, transform_indices = @transform_7, window_bounds = array<i64: 2, 1, 128>}, {pipeline_mode = #tpu.pipeline_mode<synchronous>, transform_indices = @transform_8, window_bounds = array<i64: 2, 1, 128>}, {pipeline_mode = #tpu.pipeline_mode<synchronous>, transform_indices = @transform_9, window_bounds = array<i64: 2, 128, 128>}, {pipeline_mode = #tpu.pipeline_mode<synchronous>, transform_indices = @transform_10, window_bounds = array<i64: 2, 1, 128>}, {pipeline_mode = #tpu.pipeline_mode<synchronous>, transform_indices = @transform_11, window_bounds = array<i64: 2, 128, 128>}, {pipeline_mode = #tpu.pipeline_mode<synchronous>, transform_indices = @transform_12, window_bounds = array<i64: 2, 1, 128>}, {transform_indices = @transform_13, window_bounds = array<i64: 32, 8, 128>}]} {
    %c0_i32 = arith.constant 0 : i32
    %0 = arith.cmpi eq, %arg1, %c0_i32 : i32
    %1 = arith.extui %0 : i1 to i32
    %c0_i32_0 = arith.constant 0 : i32
    %2 = arith.cmpi ne, %1, %c0_i32_0 : i32
    scf.if %2 {
      %c0_55 = arith.constant 0 : index
      %c0_56 = arith.constant 0 : index
      %c0_57 = arith.constant 0 : index
      %245 = vector.load %arg2[%c0_55, %c0_56, %c0_57] : memref<32x8x128xf32, #tpu.memory_space<vmem>>, vector<32x8x128xf32>
      %c0_58 = arith.constant 0 : index
      %c0_59 = arith.constant 0 : index
      %c0_60 = arith.constant 0 : index
      %246 = vector.load %arg15[%c0_58, %c0_59, %c0_60] : memref<32x8x128xf32, #tpu.memory_space<vmem>>, vector<32x8x128xf32>
      tpu.vector_store %arg15[%c0_58, %c0_59, %c0_60], %245 {strides = array<i32>} : memref<32x8x128xf32, #tpu.memory_space<vmem>>, vector<32x8x128xf32>,
    } else {
    }
    %c0 = arith.constant 0 : index
    %c0_1 = arith.constant 0 : index
    %c0_2 = arith.constant 0 : index
    %3 = vector.load %arg15[%c0, %c0_1, %c0_2] : memref<32x8x128xf32, #tpu.memory_space<vmem>>, vector<32x8x128xf32>
    %4 = arith.index_cast %arg1 : i32 to index
    %c0_3 = arith.constant 0 : index
    %c0_4 = arith.constant 0 : index
    %5 = vector.load %arg3[%4, %c0_3, %c0_4] : memref<2x1x128xf32, #tpu.memory_space<vmem>>, vector<1x1x128xf32>
    %6 = vector.shape_cast %5 : vector<1x1x128xf32> to vector<1x128xf32>
    %7 = arith.index_cast %arg1 : i32 to index
    %c0_5 = arith.constant 0 : index
    %c0_6 = arith.constant 0 : index
    %8 = vector.load %arg4[%7, %c0_5, %c0_6] : memref<2x1x128xf32, #tpu.memory_space<vmem>>, vector<1x1x128xf32>
    %9 = vector.shape_cast %8 : vector<1x1x128xf32> to vector<1x128xf32>
    %cst = arith.constant dense<0.000000e+00> : vector<32x8xf32>
    %10 = vector.multi_reduction <add>, %3, %cst [2] : vector<32x8x128xf32> to vector<32x8xf32>
    %11 = vector.shape_cast %10 : vector<32x8xf32> to vector<32x8x1xf32>
    %cst_7 = arith.constant 1.280000e+02 : f32
    %12 = vector.broadcast %cst_7 : f32 to vector<32x8x1xf32>
    %13 = arith.divf %11, %12 : vector<32x8x1xf32>
    %14 = vector.broadcast %13 : vector<32x8x1xf32> to vector<32x8x128xf32>
    %15 = arith.subf %3, %14 : vector<32x8x128xf32>
    %16 = arith.mulf %15, %15 : vector<32x8x128xf32>
    %cst_8 = arith.constant dense<0.000000e+00> : vector<32x8xf32>
    %17 = vector.multi_reduction <add>, %16, %cst_8 [2] : vector<32x8x128xf32> to vector<32x8xf32>
    %18 = vector.shape_cast %17 : vector<32x8xf32> to vector<32x8x1xf32>
    %cst_9 = arith.constant 1.280000e+02 : f32
    %19 = vector.broadcast %cst_9 : f32 to vector<32x8x1xf32>
    %20 = arith.divf %18, %19 : vector<32x8x1xf32>
    %21 = vector.broadcast %13 : vector<32x8x1xf32> to vector<32x8x128xf32>
    %22 = arith.subf %3, %21 : vector<32x8x128xf32>
    %cst_10 = arith.constant 9.99999974E-6 : f32
    %23 = vector.broadcast %cst_10 : f32 to vector<32x8x1xf32>
    %24 = arith.addf %20, %23 : vector<32x8x1xf32>
    %25 = math.rsqrt %24 : vector<32x8x1xf32>
    %26 = vector.broadcast %25 : vector<32x8x1xf32> to vector<32x8x128xf32>
    %27 = arith.mulf %22, %26 : vector<32x8x128xf32>
    %28 = vector.shape_cast %6 : vector<1x128xf32> to vector<1x1x128xf32>
    %29 = vector.broadcast %28 : vector<1x1x128xf32> to vector<32x8x128xf32>
    %30 = arith.mulf %27, %29 : vector<32x8x128xf32>
    %31 = vector.shape_cast %9 : vector<1x128xf32> to vector<1x1x128xf32>
    %32 = vector.broadcast %31 : vector<1x1x128xf32> to vector<32x8x128xf32>
    %33 = arith.addf %30, %32 : vector<32x8x128xf32>
    %34 = arith.index_cast %arg1 : i32 to index
    %c0_11 = arith.constant 0 : index
    %c0_12 = arith.constant 0 : index
    %35 = vector.load %arg5[%34, %c0_11, %c0_12] : memref<2x8x8xf32, #tpu.memory_space<vmem>>, vector<1x8x8xf32>
    %36 = vector.shape_cast %35 : vector<1x8x8xf32> to vector<8x8xf32>
    %37 = vector.extract_strided_slice %36 {offsets = [0, 0], sizes = [8, 1], strides = [1, 1]} : vector<8x8xf32> to vector<8x1xf32>
    %38 = vector.shape_cast %37 : vector<8x1xf32> to vector<1x8x1xf32>
    %39 = vector.extract_strided_slice %33 {offsets = [0, 0, 0], sizes = [32, 1, 128], strides = [1, 1, 1]} : vector<32x8x128xf32> to vector<32x1x128xf32>
    %40 = vector.broadcast %38 : vector<1x8x1xf32> to vector<32x8x128xf32>
    %41 = vector.broadcast %39 : vector<32x1x128xf32> to vector<32x8x128xf32>
    %42 = arith.mulf %40, %41 : vector<32x8x128xf32>
    %43 = vector.extract_strided_slice %36 {offsets = [0, 1], sizes = [8, 1], strides = [1, 1]} : vector<8x8xf32> to vector<8x1xf32>
    %44 = vector.shape_cast %43 : vector<8x1xf32> to vector<1x8x1xf32>
    %45 = vector.extract_strided_slice %33 {offsets = [0, 1, 0], sizes = [32, 1, 128], strides = [1, 1, 1]} : vector<32x8x128xf32> to vector<32x1x128xf32>
    %46 = vector.broadcast %44 : vector<1x8x1xf32> to vector<32x8x128xf32>
    %47 = vector.broadcast %45 : vector<32x1x128xf32> to vector<32x8x128xf32>
    %48 = arith.mulf %46, %47 : vector<32x8x128xf32>
    %49 = arith.addf %42, %48 : vector<32x8x128xf32>
    %50 = vector.extract_strided_slice %36 {offsets = [0, 2], sizes = [8, 1], strides = [1, 1]} : vector<8x8xf32> to vector<8x1xf32>
    %51 = vector.shape_cast %50 : vector<8x1xf32> to vector<1x8x1xf32>
    %52 = vector.extract_strided_slice %33 {offsets = [0, 2, 0], sizes = [32, 1, 128], strides = [1, 1, 1]} : vector<32x8x128xf32> to vector<32x1x128xf32>
    %53 = vector.broadcast %51 : vector<1x8x1xf32> to vector<32x8x128xf32>
    %54 = vector.broadcast %52 : vector<32x1x128xf32> to vector<32x8x128xf32>
    %55 = arith.mulf %53, %54 : vector<32x8x128xf32>
    %56 = arith.addf %49, %55 : vector<32x8x128xf32>
    %57 = vector.extract_strided_slice %36 {offsets = [0, 3], sizes = [8, 1], strides = [1, 1]} : vector<8x8xf32> to vector<8x1xf32>
    %58 = vector.shape_cast %57 : vector<8x1xf32> to vector<1x8x1xf32>
    %59 = vector.extract_strided_slice %33 {offsets = [0, 3, 0], sizes = [32, 1, 128], strides = [1, 1, 1]} : vector<32x8x128xf32> to vector<32x1x128xf32>
    %60 = vector.broadcast %58 : vector<1x8x1xf32> to vector<32x8x128xf32>
    %61 = vector.broadcast %59 : vector<32x1x128xf32> to vector<32x8x128xf32>
    %62 = arith.mulf %60, %61 : vector<32x8x128xf32>
    %63 = arith.addf %56, %62 : vector<32x8x128xf32>
    %64 = vector.extract_strided_slice %36 {offsets = [0, 4], sizes = [8, 1], strides = [1, 1]} : vector<8x8xf32> to vector<8x1xf32>
    %65 = vector.shape_cast %64 : vector<8x1xf32> to vector<1x8x1xf32>
    %66 = vector.extract_strided_slice %33 {offsets = [0, 4, 0], sizes = [32, 1, 128], strides = [1, 1, 1]} : vector<32x8x128xf32> to vector<32x1x128xf32>
    %67 = vector.broadcast %65 : vector<1x8x1xf32> to vector<32x8x128xf32>
    %68 = vector.broadcast %66 : vector<32x1x128xf32> to vector<32x8x128xf32>
    %69 = arith.mulf %67, %68 : vector<32x8x128xf32>
    %70 = arith.addf %63, %69 : vector<32x8x128xf32>
    %71 = vector.extract_strided_slice %36 {offsets = [0, 5], sizes = [8, 1], strides = [1, 1]} : vector<8x8xf32> to vector<8x1xf32>
    %72 = vector.shape_cast %71 : vector<8x1xf32> to vector<1x8x1xf32>
    %73 = vector.extract_strided_slice %33 {offsets = [0, 5, 0], sizes = [32, 1, 128], strides = [1, 1, 1]} : vector<32x8x128xf32> to vector<32x1x128xf32>
    %74 = vector.broadcast %72 : vector<1x8x1xf32> to vector<32x8x128xf32>
    %75 = vector.broadcast %73 : vector<32x1x128xf32> to vector<32x8x128xf32>
    %76 = arith.mulf %74, %75 : vector<32x8x128xf32>
    %77 = arith.addf %70, %76 : vector<32x8x128xf32>
    %78 = vector.extract_strided_slice %36 {offsets = [0, 6], sizes = [8, 1], strides = [1, 1]} : vector<8x8xf32> to vector<8x1xf32>
    %79 = vector.shape_cast %78 : vector<8x1xf32> to vector<1x8x1xf32>
    %80 = vector.extract_strided_slice %33 {offsets = [0, 6, 0], sizes = [32, 1, 128], strides = [1, 1, 1]} : vector<32x8x128xf32> to vector<32x1x128xf32>
    %81 = vector.broadcast %79 : vector<1x8x1xf32> to vector<32x8x128xf32>
    %82 = vector.broadcast %80 : vector<32x1x128xf32> to vector<32x8x128xf32>
    %83 = arith.mulf %81, %82 : vector<32x8x128xf32>
    %84 = arith.addf %77, %83 : vector<32x8x128xf32>
    %85 = vector.extract_strided_slice %36 {offsets = [0, 7], sizes = [8, 1], strides = [1, 1]} : vector<8x8xf32> to vector<8x1xf32>
    %86 = vector.shape_cast %85 : vector<8x1xf32> to vector<1x8x1xf32>
    %87 = vector.extract_strided_slice %33 {offsets = [0, 7, 0], sizes = [32, 1, 128], strides = [1, 1, 1]} : vector<32x8x128xf32> to vector<32x1x128xf32>
    %88 = vector.broadcast %86 : vector<1x8x1xf32> to vector<32x8x128xf32>
    %89 = vector.broadcast %87 : vector<32x1x128xf32> to vector<32x8x128xf32>
    %90 = arith.mulf %88, %89 : vector<32x8x128xf32>
    %91 = arith.addf %84, %90 : vector<32x8x128xf32>
    %92 = arith.index_cast %arg1 : i32 to index
    %c0_13 = arith.constant 0 : index
    %c0_14 = arith.constant 0 : index
    %93 = vector.load %arg6[%92, %c0_13, %c0_14] : memref<2x8x1xf32, #tpu.memory_space<vmem>>, vector<1x8x1xf32>
    %94 = vector.shape_cast %93 : vector<1x8x1xf32> to vector<8x1xf32>
    %95 = vector.shape_cast %94 : vector<8x1xf32> to vector<1x8x1xf32>
    %96 = vector.broadcast %95 : vector<1x8x1xf32> to vector<32x8x128xf32>
    %97 = arith.addf %91, %96 : vector<32x8x128xf32>
    %cst_15 = arith.constant 5.000000e-01 : f32
    %98 = vector.broadcast %cst_15 : f32 to vector<32x8x128xf32>
    %99 = arith.mulf %98, %97 : vector<32x8x128xf32>
    %cst_16 = arith.constant 4.471500e-02 : f32
    %100 = vector.broadcast %cst_16 : f32 to vector<32x8x128xf32>
    %101 = arith.mulf %100, %97 : vector<32x8x128xf32>
    %102 = arith.mulf %101, %97 : vector<32x8x128xf32>
    %103 = arith.mulf %102, %97 : vector<32x8x128xf32>
    %104 = arith.addf %97, %103 : vector<32x8x128xf32>
    %cst_17 = arith.constant 0.797884583 : f32
    %105 = vector.broadcast %cst_17 : f32 to vector<32x8x128xf32>
    %106 = arith.mulf %105, %104 : vector<32x8x128xf32>
    %107 = math.tanh %106 : vector<32x8x128xf32>
    %cst_18 = arith.constant 1.000000e+00 : f32
    %108 = vector.broadcast %cst_18 : f32 to vector<32x8x128xf32>
    %109 = arith.addf %108, %107 : vector<32x8x128xf32>
    %110 = arith.mulf %99, %109 : vector<32x8x128xf32>
    %111 = arith.index_cast %arg1 : i32 to index
    %c0_19 = arith.constant 0 : index
    %c0_20 = arith.constant 0 : index
    %112 = vector.load %arg7[%111, %c0_19, %c0_20] : memref<2x8x8xf32, #tpu.memory_space<vmem>>, vector<1x8x8xf32>
    %113 = vector.shape_cast %112 : vector<1x8x8xf32> to vector<8x8xf32>
    %114 = vector.extract_strided_slice %113 {offsets = [0, 0], sizes = [8, 1], strides = [1, 1]} : vector<8x8xf32> to vector<8x1xf32>
    %115 = vector.shape_cast %114 : vector<8x1xf32> to vector<1x8x1xf32>
    %116 = vector.extract_strided_slice %110 {offsets = [0, 0, 0], sizes = [32, 1, 128], strides = [1, 1, 1]} : vector<32x8x128xf32> to vector<32x1x128xf32>
    %117 = vector.broadcast %115 : vector<1x8x1xf32> to vector<32x8x128xf32>
    %118 = vector.broadcast %116 : vector<32x1x128xf32> to vector<32x8x128xf32>
    %119 = arith.mulf %117, %118 : vector<32x8x128xf32>
    %120 = vector.extract_strided_slice %113 {offsets = [0, 1], sizes = [8, 1], strides = [1, 1]} : vector<8x8xf32> to vector<8x1xf32>
    %121 = vector.shape_cast %120 : vector<8x1xf32> to vector<1x8x1xf32>
    %122 = vector.extract_strided_slice %110 {offsets = [0, 1, 0], sizes = [32, 1, 128], strides = [1, 1, 1]} : vector<32x8x128xf32> to vector<32x1x128xf32>
    %123 = vector.broadcast %121 : vector<1x8x1xf32> to vector<32x8x128xf32>
    %124 = vector.broadcast %122 : vector<32x1x128xf32> to vector<32x8x128xf32>
    %125 = arith.mulf %123, %124 : vector<32x8x128xf32>
    %126 = arith.addf %119, %125 : vector<32x8x128xf32>
    %127 = vector.extract_strided_slice %113 {offsets = [0, 2], sizes = [8, 1], strides = [1, 1]} : vector<8x8xf32> to vector<8x1xf32>
    %128 = vector.shape_cast %127 : vector<8x1xf32> to vector<1x8x1xf32>
    %129 = vector.extract_strided_slice %110 {offsets = [0, 2, 0], sizes = [32, 1, 128], strides = [1, 1, 1]} : vector<32x8x128xf32> to vector<32x1x128xf32>
    %130 = vector.broadcast %128 : vector<1x8x1xf32> to vector<32x8x128xf32>
    %131 = vector.broadcast %129 : vector<32x1x128xf32> to vector<32x8x128xf32>
    %132 = arith.mulf %130, %131 : vector<32x8x128xf32>
    %133 = arith.addf %126, %132 : vector<32x8x128xf32>
    %134 = vector.extract_strided_slice %113 {offsets = [0, 3], sizes = [8, 1], strides = [1, 1]} : vector<8x8xf32> to vector<8x1xf32>
    %135 = vector.shape_cast %134 : vector<8x1xf32> to vector<1x8x1xf32>
    %136 = vector.extract_strided_slice %110 {offsets = [0, 3, 0], sizes = [32, 1, 128], strides = [1, 1, 1]} : vector<32x8x128xf32> to vector<32x1x128xf32>
    %137 = vector.broadcast %135 : vector<1x8x1xf32> to vector<32x8x128xf32>
    %138 = vector.broadcast %136 : vector<32x1x128xf32> to vector<32x8x128xf32>
    %139 = arith.mulf %137, %138 : vector<32x8x128xf32>
    %140 = arith.addf %133, %139 : vector<32x8x128xf32>
    %141 = vector.extract_strided_slice %113 {offsets = [0, 4], sizes = [8, 1], strides = [1, 1]} : vector<8x8xf32> to vector<8x1xf32>
    %142 = vector.shape_cast %141 : vector<8x1xf32> to vector<1x8x1xf32>
    %143 = vector.extract_strided_slice %110 {offsets = [0, 4, 0], sizes = [32, 1, 128], strides = [1, 1, 1]} : vector<32x8x128xf32> to vector<32x1x128xf32>
    %144 = vector.broadcast %142 : vector<1x8x1xf32> to vector<32x8x128xf32>
    %145 = vector.broadcast %143 : vector<32x1x128xf32> to vector<32x8x128xf32>
    %146 = arith.mulf %144, %145 : vector<32x8x128xf32>
    %147 = arith.addf %140, %146 : vector<32x8x128xf32>
    %148 = vector.extract_strided_slice %113 {offsets = [0, 5], sizes = [8, 1], strides = [1, 1]} : vector<8x8xf32> to vector<8x1xf32>
    %149 = vector.shape_cast %148 : vector<8x1xf32> to vector<1x8x1xf32>
    %150 = vector.extract_strided_slice %110 {offsets = [0, 5, 0], sizes = [32, 1, 128], strides = [1, 1, 1]} : vector<32x8x128xf32> to vector<32x1x128xf32>
    %151 = vector.broadcast %149 : vector<1x8x1xf32> to vector<32x8x128xf32>
    %152 = vector.broadcast %150 : vector<32x1x128xf32> to vector<32x8x128xf32>
    %153 = arith.mulf %151, %152 : vector<32x8x128xf32>
    %154 = arith.addf %147, %153 : vector<32x8x128xf32>
    %155 = vector.extract_strided_slice %113 {offsets = [0, 6], sizes = [8, 1], strides = [1, 1]} : vector<8x8xf32> to vector<8x1xf32>
    %156 = vector.shape_cast %155 : vector<8x1xf32> to vector<1x8x1xf32>
    %157 = vector.extract_strided_slice %110 {offsets = [0, 6, 0], sizes = [32, 1, 128], strides = [1, 1, 1]} : vector<32x8x128xf32> to vector<32x1x128xf32>
    %158 = vector.broadcast %156 : vector<1x8x1xf32> to vector<32x8x128xf32>
    %159 = vector.broadcast %157 : vector<32x1x128xf32> to vector<32x8x128xf32>
    %160 = arith.mulf %158, %159 : vector<32x8x128xf32>
    %161 = arith.addf %154, %160 : vector<32x8x128xf32>
    %162 = vector.extract_strided_slice %113 {offsets = [0, 7], sizes = [8, 1], strides = [1, 1]} : vector<8x8xf32> to vector<8x1xf32>
    %163 = vector.shape_cast %162 : vector<8x1xf32> to vector<1x8x1xf32>
    %164 = vector.extract_strided_slice %110 {offsets = [0, 7, 0], sizes = [32, 1, 128], strides = [1, 1, 1]} : vector<32x8x128xf32> to vector<32x1x128xf32>
    %165 = vector.broadcast %163 : vector<1x8x1xf32> to vector<32x8x128xf32>
    %166 = vector.broadcast %164 : vector<32x1x128xf32> to vector<32x8x128xf32>
    %167 = arith.mulf %165, %166 : vector<32x8x128xf32>
    %168 = arith.addf %161, %167 : vector<32x8x128xf32>
    %169 = arith.index_cast %arg1 : i32 to index
    %c0_21 = arith.constant 0 : index
    %c0_22 = arith.constant 0 : index
    %170 = vector.load %arg8[%169, %c0_21, %c0_22] : memref<2x8x1xf32, #tpu.memory_space<vmem>>, vector<1x8x1xf32>
    %171 = vector.shape_cast %170 : vector<1x8x1xf32> to vector<8x1xf32>
    %172 = vector.shape_cast %171 : vector<8x1xf32> to vector<1x8x1xf32>
    %173 = vector.broadcast %172 : vector<1x8x1xf32> to vector<32x8x128xf32>
    %174 = arith.addf %168, %173 : vector<32x8x128xf32>
    %175 = arith.addf %174, %3 : vector<32x8x128xf32>
    %c0_23 = arith.constant 0 : index
    %c0_24 = arith.constant 0 : index
    %c0_25 = arith.constant 0 : index
    %176 = vector.load %arg15[%c0_23, %c0_24, %c0_25] : memref<32x8x128xf32, #tpu.memory_space<vmem>>, vector<32x8x128xf32>
    tpu.vector_store %arg15[%c0_23, %c0_24, %c0_25], %175 {strides = array<i32>} : memref<32x8x128xf32, #tpu.memory_space<vmem>>, vector<32x8x128xf32>,
    %c0_26 = arith.constant 0 : index
    %c0_27 = arith.constant 0 : index
    %c0_28 = arith.constant 0 : index
    %177 = vector.load %arg15[%c0_26, %c0_27, %c0_28] : memref<32x8x128xf32, #tpu.memory_space<vmem>>, vector<32x8x128xf32>
    %178 = arith.index_cast %arg1 : i32 to index
    %c0_29 = arith.constant 0 : index
    %c0_30 = arith.constant 0 : index
    %179 = vector.load %arg9[%178, %c0_29, %c0_30] : memref<2x1x128xf32, #tpu.memory_space<vmem>>, vector<1x1x128xf32>
    %180 = vector.shape_cast %179 : vector<1x1x128xf32> to vector<1x128xf32>
    %181 = arith.index_cast %arg1 : i32 to index
    %c0_31 = arith.constant 0 : index
    %c0_32 = arith.constant 0 : index
    %182 = vector.load %arg10[%181, %c0_31, %c0_32] : memref<2x1x128xf32, #tpu.memory_space<vmem>>, vector<1x1x128xf32>
    %183 = vector.shape_cast %182 : vector<1x1x128xf32> to vector<1x128xf32>
    %cst_33 = arith.constant dense<0.000000e+00> : vector<32x8xf32>
    %184 = vector.multi_reduction <add>, %177, %cst_33 [2] : vector<32x8x128xf32> to vector<32x8xf32>
    %185 = vector.shape_cast %184 : vector<32x8xf32> to vector<32x8x1xf32>
    %cst_34 = arith.constant 1.280000e+02 : f32
    %186 = vector.broadcast %cst_34 : f32 to vector<32x8x1xf32>
    %187 = arith.divf %185, %186 : vector<32x8x1xf32>
    %188 = vector.broadcast %187 : vector<32x8x1xf32> to vector<32x8x128xf32>
    %189 = arith.subf %177, %188 : vector<32x8x128xf32>
    %190 = arith.mulf %189, %189 : vector<32x8x128xf32>
    %cst_35 = arith.constant dense<0.000000e+00> : vector<32x8xf32>
    %191 = vector.multi_reduction <add>, %190, %cst_35 [2] : vector<32x8x128xf32> to vector<32x8xf32>
    %192 = vector.shape_cast %191 : vector<32x8xf32> to vector<32x8x1xf32>
    %cst_36 = arith.constant 1.280000e+02 : f32
    %193 = vector.broadcast %cst_36 : f32 to vector<32x8x1xf32>
    %194 = arith.divf %192, %193 : vector<32x8x1xf32>
    %195 = vector.broadcast %187 : vector<32x8x1xf32> to vector<32x8x128xf32>
    %196 = arith.subf %177, %195 : vector<32x8x128xf32>
    %cst_37 = arith.constant 9.99999974E-6 : f32
    %197 = vector.broadcast %cst_37 : f32 to vector<32x8x1xf32>
    %198 = arith.addf %194, %197 : vector<32x8x1xf32>
    %199 = math.rsqrt %198 : vector<32x8x1xf32>
    %200 = vector.broadcast %199 : vector<32x8x1xf32> to vector<32x8x128xf32>
    %201 = arith.mulf %196, %200 : vector<32x8x128xf32>
    %202 = vector.shape_cast %180 : vector<1x128xf32> to vector<1x1x128xf32>
    %203 = vector.broadcast %202 : vector<1x1x128xf32> to vector<32x8x128xf32>
    %204 = arith.mulf %201, %203 : vector<32x8x128xf32>
    %205 = vector.shape_cast %183 : vector<1x128xf32> to vector<1x1x128xf32>
    %206 = vector.broadcast %205 : vector<1x1x128xf32> to vector<32x8x128xf32>
    %207 = arith.addf %204, %206 : vector<32x8x128xf32>
    %208 = vector.shape_cast %207 : vector<32x8x128xf32> to vector<256x128xf32>
    %209 = arith.truncf %208 : vector<256x128xf32> to vector<256x128xbf16>
    %210 = arith.index_cast %arg1 : i32 to index
    %c0_38 = arith.constant 0 : index
    %c0_39 = arith.constant 0 : index
    %211 = vector.load %arg11[%210, %c0_38, %c0_39] : memref<2x128x128xbf16, #tpu.memory_space<vmem>>, vector<1x128x128xbf16>
    %212 = vector.shape_cast %211 : vector<1x128x128xbf16> to vector<128x128xbf16>
    %cst_40 = arith.constant dense<0.000000e+00> : vector<256x128xf32>
    %213 = tpu.matmul %209, %212, %cst_40 {dimension_numbers = #tpu.dot_dimension_numbers<[1], [0], [0], [1], [0, 0, 1, 1], [], []>} : vector<256x128xbf16>, vector<128x128xbf16>, vector<256x128xf32> -> vector<256x128xf32>
    %214 = arith.index_cast %arg1 : i32 to index
    %c0_41 = arith.constant 0 : index
    %c0_42 = arith.constant 0 : index
    %215 = vector.load %arg12[%214, %c0_41, %c0_42] : memref<2x1x128xf32, #tpu.memory_space<vmem>>, vector<1x1x128xf32>
    %216 = vector.shape_cast %215 : vector<1x1x128xf32> to vector<1x128xf32>
    %217 = vector.broadcast %216 : vector<1x128xf32> to vector<256x128xf32>
    %218 = arith.addf %213, %217 : vector<256x128xf32>
    %cst_43 = arith.constant 5.000000e-01 : f32
    %219 = vector.broadcast %cst_43 : f32 to vector<256x128xf32>
    %220 = arith.mulf %219, %218 : vector<256x128xf32>
    %cst_44 = arith.constant 4.471500e-02 : f32
    %221 = vector.broadcast %cst_44 : f32 to vector<256x128xf32>
    %222 = arith.mulf %221, %218 : vector<256x128xf32>
    %223 = arith.mulf %222, %218 : vector<256x128xf32>
    %224 = arith.mulf %223, %218 : vector<256x128xf32>
    %225 = arith.addf %218, %224 : vector<256x128xf32>
    %cst_45 = arith.constant 0.797884583 : f32
    %226 = vector.broadcast %cst_45 : f32 to vector<256x128xf32>
    %227 = arith.mulf %226, %225 : vector<256x128xf32>
    %228 = math.tanh %227 : vector<256x128xf32>
    %cst_46 = arith.constant 1.000000e+00 : f32
    %229 = vector.broadcast %cst_46 : f32 to vector<256x128xf32>
    %230 = arith.addf %229, %228 : vector<256x128xf32>
    %231 = arith.mulf %220, %230 : vector<256x128xf32>
    %232 = arith.truncf %231 : vector<256x128xf32> to vector<256x128xbf16>
    %233 = arith.index_cast %arg1 : i32 to index
    %c0_47 = arith.constant 0 : index
    %c0_48 = arith.constant 0 : index
    %234 = vector.load %arg13[%233, %c0_47, %c0_48] : memref<2x128x128xbf16, #tpu.memory_space<vmem>>, vector<1x128x128xbf16>
    %235 = vector.shape_cast %234 : vector<1x128x128xbf16> to vector<128x128xbf16>
    %cst_49 = arith.constant dense<0.000000e+00> : vector<256x128xf32>
    %236 = tpu.matmul %232, %235, %cst_49 {dimension_numbers = #tpu.dot_dimension_numbers<[1], [0], [0], [1], [0, 0, 1, 1], [], []>} : vector<256x128xbf16>, vector<128x128xbf16>, vector<256x128xf32> -> vector<256x128xf32>
    %237 = arith.index_cast %arg1 : i32 to index
    %c0_50 = arith.constant 0 : index
    %c0_51 = arith.constant 0 : index
    %238 = vector.load %arg14[%237, %c0_50, %c0_51] : memref<2x1x128xf32, #tpu.memory_space<vmem>>, vector<1x1x128xf32>
    %239 = vector.shape_cast %238 : vector<1x1x128xf32> to vector<1x128xf32>
    %240 = vector.broadcast %239 : vector<1x128xf32> to vector<256x128xf32>
    %241 = arith.addf %236, %240 : vector<256x128xf32>
    %242 = vector.shape_cast %241 : vector<256x128xf32> to vector<32x8x128xf32>
    %243 = arith.addf %242, %177 : vector<32x8x128xf32>
    %c0_52 = arith.constant 0 : index
    %c0_53 = arith.constant 0 : index
    %c0_54 = arith.constant 0 : index
    %244 = vector.load %arg15[%c0_52, %c0_53, %c0_54] : memref<32x8x128xf32, #tpu.memory_space<vmem>>, vector<32x8x128xf32>
    tpu.vector_store %arg15[%c0_52, %c0_53, %c0_54], %243 {strides = array<i32>} : memref<32x8x128xf32, #tpu.memory_space<vmem>>, vector<32x8x128xf32>,
    return
  }
  func.func @transform_0(%arg0: i32, %arg1: i32) -> (i32, i32, i32) {
    %c0_i32 = arith.constant 0 : i32
    %c0_i32_0 = arith.constant 0 : i32
    %c0_i32_1 = arith.constant 0 : i32
    return %arg0, %c0_i32, %c0_i32_0 : i32, i32, i32
  }
  func.func @transform_1(%arg0: i32, %arg1: i32) -> (i32, i32, i32) {
    %c0_i32 = arith.constant 0 : i32
    %c0_i32_0 = arith.constant 0 : i32
    %c0_i32_1 = arith.constant 0 : i32
    %c0_i32_2 = arith.constant 0 : i32
    return %c0_i32, %c0_i32_0, %c0_i32_1 : i32, i32, i32
  }
  func.func @transform_2(%arg0: i32, %arg1: i32) -> (i32, i32, i32) {
    %c0_i32 = arith.constant 0 : i32
    %c0_i32_0 = arith.constant 0 : i32
    %c0_i32_1 = arith.constant 0 : i32
    %c0_i32_2 = arith.constant 0 : i32
    return %c0_i32, %c0_i32_0, %c0_i32_1 : i32, i32, i32
  }
  func.func @transform_3(%arg0: i32, %arg1: i32) -> (i32, i32, i32) {
    %c0_i32 = arith.constant 0 : i32
    %c0_i32_0 = arith.constant 0 : i32
    %c0_i32_1 = arith.constant 0 : i32
    %c0_i32_2 = arith.constant 0 : i32
    return %c0_i32, %c0_i32_0, %c0_i32_1 : i32, i32, i32
  }
  func.func @transform_4(%arg0: i32, %arg1: i32) -> (i32, i32, i32) {
    %c0_i32 = arith.constant 0 : i32
    %c0_i32_0 = arith.constant 0 : i32
    %c0_i32_1 = arith.constant 0 : i32
    %c0_i32_2 = arith.constant 0 : i32
    return %c0_i32, %c0_i32_0, %c0_i32_1 : i32, i32, i32
  }
  func.func @transform_5(%arg0: i32, %arg1: i32) -> (i32, i32, i32) {
    %c0_i32 = arith.constant 0 : i32
    %c0_i32_0 = arith.constant 0 : i32
    %c0_i32_1 = arith.constant 0 : i32
    %c0_i32_2 = arith.constant 0 : i32
    return %c0_i32, %c0_i32_0, %c0_i32_1 : i32, i32, i32
  }
  func.func @transform_6(%arg0: i32, %arg1: i32) -> (i32, i32, i32) {
    %c0_i32 = arith.constant 0 : i32
    %c0_i32_0 = arith.constant 0 : i32
    %c0_i32_1 = arith.constant 0 : i32
    %c0_i32_2 = arith.constant 0 : i32
    return %c0_i32, %c0_i32_0, %c0_i32_1 : i32, i32, i32
  }
  func.func @transform_7(%arg0: i32, %arg1: i32) -> (i32, i32, i32) {
    %c0_i32 = arith.constant 0 : i32
    %c0_i32_0 = arith.constant 0 : i32
    %c0_i32_1 = arith.constant 0 : i32
    %c0_i32_2 = arith.constant 0 : i32
    return %c0_i32, %c0_i32_0, %c0_i32_1 : i32, i32, i32
  }
  func.func @transform_8(%arg0: i32, %arg1: i32) -> (i32, i32, i32) {
    %c0_i32 = arith.constant 0 : i32
    %c0_i32_0 = arith.constant 0 : i32
    %c0_i32_1 = arith.constant 0 : i32
    %c0_i32_2 = arith.constant 0 : i32
    return %c0_i32, %c0_i32_0, %c0_i32_1 : i32, i32, i32
  }
  func.func @transform_9(%arg0: i32, %arg1: i32) -> (i32, i32, i32) {
    %c0_i32 = arith.constant 0 : i32
    %c0_i32_0 = arith.constant 0 : i32
    %c0_i32_1 = arith.constant 0 : i32
    %c0_i32_2 = arith.constant 0 : i32
    return %c0_i32, %c0_i32_0, %c0_i32_1 : i32, i32, i32
  }
  func.func @transform_10(%arg0: i32, %arg1: i32) -> (i32, i32, i32) {
    %c0_i32 = arith.constant 0 : i32
    %c0_i32_0 = arith.constant 0 : i32
    %c0_i32_1 = arith.constant 0 : i32
    %c0_i32_2 = arith.constant 0 : i32
    return %c0_i32, %c0_i32_0, %c0_i32_1 : i32, i32, i32
  }
  func.func @transform_11(%arg0: i32, %arg1: i32) -> (i32, i32, i32) {
    %c0_i32 = arith.constant 0 : i32
    %c0_i32_0 = arith.constant 0 : i32
    %c0_i32_1 = arith.constant 0 : i32
    %c0_i32_2 = arith.constant 0 : i32
    return %c0_i32, %c0_i32_0, %c0_i32_1 : i32, i32, i32
  }
  func.func @transform_12(%arg0: i32, %arg1: i32) -> (i32, i32, i32) {
    %c0_i32 = arith.constant 0 : i32
    %c0_i32_0 = arith.constant 0 : i32
    %c0_i32_1 = arith.constant 0 : i32
    %c0_i32_2 = arith.constant 0 : i32
    return %c0_i32, %c0_i32_0, %c0_i32_1 : i32, i32, i32
  }
  func.func @transform_13(%arg0: i32, %arg1: i32) -> (i32, i32, i32) {
    %c0_i32 = arith.constant 0 : i32
    %c0_i32_0 = arith.constant 0 : i32
    %c0_i32_1 = arith.constant 0 : i32
    return %arg0, %c0_i32, %c0_i32_0 : i32, i32, i32
  }
}

</mosaic_0001>

<llo_original>
// kernel: tpu_custom_call.1
$region0: #{tpu_custom_call.1}
  #allocation0 [shape = 'u32[]', space=smem, size = 0x4, offset = 0x4, fixed_abs, tag = 'smem constant byte address 0x4 - core index']
  #allocation1 [shape = 'u32[144,128]{1,0:T(1,128)}', space=vmem, size = 0x12000, scoped, tag = 'internal scratch']
  %s0 = inlined_call_operand.hbm [shape: f32[64,8,128], index: 0, kind: input, shape index: {}]
  %s1 = inlined_call_operand.vmem [shape: f32[2,1,128], index: 1, kind: input, shape index: {}]
  %s2 = inlined_call_operand.vmem [shape: f32[2,1,128], index: 2, kind: input, shape index: {}]
  %s3 = inlined_call_operand.vmem [shape: f32[2,8,8], index: 3, kind: input, shape index: {}]
  %s4 = inlined_call_operand.vmem [shape: f32[2,8,1], index: 4, kind: input, shape index: {}]
  %s5 = inlined_call_operand.vmem [shape: f32[2,8,8], index: 5, kind: input, shape index: {}]
  %s6 = inlined_call_operand.vmem [shape: f32[2,8,1], index: 6, kind: input, shape index: {}]
  %s7 = inlined_call_operand.vmem [shape: f32[2,1,128], index: 7, kind: input, shape index: {}]
  %s8 = inlined_call_operand.vmem [shape: f32[2,1,128], index: 8, kind: input, shape index: {}]
  %s9 = inlined_call_operand.hbm [shape: bf16[2,128,128], index: 9, kind: input, shape index: {}]
  %s10 = inlined_call_operand.vmem [shape: f32[2,1,128], index: 10, kind: input, shape index: {}]
  %s11 = inlined_call_operand.hbm [shape: bf16[2,128,128], index: 11, kind: input, shape index: {}]
  %s12 = inlined_call_operand.vmem [shape: f32[2,1,128], index: 12, kind: input, shape index: {}]
  %s13 = inlined_call_operand.hbm [shape: f32[64,8,128], index: 13, kind: output, shape index: {}]
  %s14 = sld [smem:[#allocation0]]
  $region101: #{tpu_custom_call.1} parent=0
    _
  %s16 = ssub.s32 1, %s14
  %s17 = scalar_select 0, %s16, %s14
  $region1: #{tpu_custom_call.1} parent=0
    #allocation2 [shape = 'u8[262144]{0}', space=vmem, size = 0x40000, scoped, tag = 'input window, operand 0']
    #allocation3 [shape = 's32[2]{0}', space=sflag, size = 0x8, scoped, tag = 'scoped memory for tpu_custom_call.1']
    #allocation4 [shape = 's32[2]{0}', space=sflag, size = 0x8, scoped, tag = 'scoped memory for tpu_custom_call.1']
    #allocation5 [shape = 'u8[65536]{0}', space=vmem, size = 0x10000, scoped, tag = 'input window, operand 9, single buffered']
    #allocation6 [shape = 's32[1]{0}', space=sflag, size = 0x4, scoped, tag = 'scoped memory for tpu_custom_call.1']
    #allocation7 [shape = 'u8[65536]{0}', space=vmem, size = 0x10000, scoped, tag = 'input window, operand 11, single buffered']
    #allocation8 [shape = 'u8[262144]{0}', space=vmem, size = 0x40000, scoped, tag = 'output window, operand 0']
    %18 = vsyncpa [#allocation3], 0
    %s19 = scalar_lea.sflag [#allocation3], 1
    %20 = vsyncpa %s19, 0
    %21 = vsyncpa [#allocation6], 0
    %22 = vsyncpa [#allocation4], 0
    %s23 = scalar_lea.sflag [#allocation4], 1
    %24 = vsyncpa %s23, 0
    loop: start=0, step=1, limit=6
    $region2: #{tpu_custom_call.1} parent=1 // loop_pre_header
      _
    $region3: #{tpu_custom_call.1} parent=1 // loop_header
      %s26 = sphi 0, %s30
      %p27 = scmp.ge.s32.totalorder %s26, 6
      %s33 = sphi 0, %s45
      %s34 = sphi 0, %s41
      %s35 = sphi 0, %s33
      %s36 = sphi 0, %s34
      %s37 = sphi 0, %s35
      %s38 = sphi 0, %s36
      %s48 = sphi 0, %s50
      %s51 = sphi 0, %s48
      %s52 = sphi 0, %s51
      %s68 = sphi 0, %s52
      %s72 = sphi 0, %s72
      %s74 = sphi 0, %s72
      %s75 = sphi 0, %s74
      %s89 = sphi 0, %s75
      %s93 = sphi 0, %s93
      %s95 = sphi 0, %s93
      %s96 = sphi 0, %s95
      %s110 = sphi 0, %s96
      %s114 = sphi 0, %s114
      %s116 = sphi 0, %s114
      %s117 = sphi 0, %s116
      %s131 = sphi 0, %s117
      %s135 = sphi 0, %s135
      %s137 = sphi 0, %s135
      %s138 = sphi 0, %s137
      %s152 = sphi 0, %s138
      %s156 = sphi 0, %s156
      %s158 = sphi 0, %s156
      %s159 = sphi 0, %s158
      %s173 = sphi 0, %s159
      %s177 = sphi 0, %s177
      %s179 = sphi 0, %s177
      %s180 = sphi 0, %s179
      %s194 = sphi 0, %s180
      %s198 = sphi 0, %s198
      %s200 = sphi 0, %s198
      %s201 = sphi 0, %s200
      %s215 = sphi 0, %s201
      %s219 = sphi 0, %s219
      %s221 = sphi 0, %s219
      %s222 = sphi 0, %s221
      %s236 = sphi 0, %s222
      %s240 = sphi 0, %s240
      %s242 = sphi 0, %s240
      %s243 = sphi 0, %s242
      %s257 = sphi 0, %s243
      %s261 = sphi 0, %s261
      %s263 = sphi 0, %s261
      %s264 = sphi 0, %s263
      %s278 = sphi 0, %s264
      %s282 = sphi 0, %s282
      %s284 = sphi 0, %s282
      %s285 = sphi 0, %s284
      %s299 = sphi 0, %s285
      %s303 = sphi 0, %s303
      %s305 = sphi 0, %s303
      %s306 = sphi 0, %s305
      %s320 = sphi 0, %s306
      %s326 = sphi 0, %s328
      %s329 = sphi 0, %s326
      %s330 = sphi 0, %s329
      %s346 = sphi 0, %s330
    $region4: #{tpu_custom_call.1} parent=1 // loop_header_branch
      %29 = sbr.rel (%p27) target = $region8
    $region5: #{tpu_custom_call.1} parent=1 // loop_body
      %s31 = ssub.s32 %s26, 1
      %s32 = ssub.s32 %s26, 2
      %s39 = sadd.s32 1, %s34
      %p40 = scmp.ge.s32.totalorder %s39, 2
      %s41 = scalar_select %p40, 0, %s39
      %s42 = sadd.s32 1, %s33
      %s43 = scalar_select %p40, %s42, %s33
      %p44 = scmp.ge.s32.totalorder %s43, 2
      %s45 = scalar_select %p44, 0, %s43
      %s46 = ssub.s32 %s33, %s45
      %p47 = scmp.eq.s32.totalorder %s46, 0
      %s49 = sadd.s32 %s48, 1
      %s50 = scalar_select %p47, %s48, %s49
      %p53 = pneg %p47
      %p54 = scmp.eq.s32.totalorder %s26, 3
      %p55 = por %p53, %p54
      %p56 = scmp.ne.s32.totalorder %s48, %s51
      %p57 = scmp.eq.s32.totalorder %s26, 0
      %p58 = por %p56, %p57
      %p59 = scmp.ne.s32.totalorder %s48, %s51
      %p60 = scmp.eq.s32.totalorder %s31, 3
      %p61 = por %p59, %p60
      %p62 = scmp.ne.s32.totalorder %s51, %s52
      %p63 = scmp.eq.s32.totalorder %s31, 0
      %p64 = por %p62, %p63
      %p65 = scmp.ne.s32.totalorder %s51, %s52
      %p66 = scmp.eq.s32.totalorder %s32, 3
      %p67 = por %p65, %p66
      %p69 = scmp.ne.s32.totalorder %s52, %s68
      %p70 = scmp.eq.s32.totalorder %s32, 0
      %p71 = por %p69, %p70
      %s73 = sadd.s32 %s72, 1
      %p76 = scmp.eq.s32.totalorder %s26, 3
      %p77 = scmp.ne.s32.totalorder %s72, %s74
      %p78 = scmp.eq.s32.totalorder %s26, 0
      %p79 = por %p77, %p78
      %p80 = scmp.ne.s32.totalorder %s72, %s74
      %p81 = scmp.eq.s32.totalorder %s31, 3
      %p82 = por %p80, %p81
      %p83 = scmp.ne.s32.totalorder %s74, %s75
      %p84 = scmp.eq.s32.totalorder %s31, 0
      %p85 = por %p83, %p84
      %p86 = scmp.ne.s32.totalorder %s74, %s75
      %p87 = scmp.eq.s32.totalorder %s32, 3
      %p88 = por %p86, %p87
      %p90 = scmp.ne.s32.totalorder %s75, %s89
      %p91 = scmp.eq.s32.totalorder %s32, 0
      %p92 = por %p90, %p91
      %s94 = sadd.s32 %s93, 1
      %p97 = scmp.eq.s32.totalorder %s26, 3
      %p98 = scmp.ne.s32.totalorder %s93, %s95
      %p99 = scmp.eq.s32.totalorder %s26, 0
      %p100 = por %p98, %p99
      %p101 = scmp.ne.s32.totalorder %s93, %s95
      %p102 = scmp.eq.s32.totalorder %s31, 3
      %p103 = por %p101, %p102
      %p104 = scmp.ne.s32.totalorder %s95, %s96
      %p105 = scmp.eq.s32.totalorder %s31, 0
      %p106 = por %p104, %p105
      %p107 = scmp.ne.s32.totalorder %s95, %s96
      %p108 = scmp.eq.s32.totalorder %s32, 3
      %p109 = por %p107, %p108
      %p111 = scmp.ne.s32.totalorder %s96, %s110
      %p112 = scmp.eq.s32.totalorder %s32, 0
      %p113 = por %p111, %p112
      %s115 = sadd.s32 %s114, 1
      %p118 = scmp.eq.s32.totalorder %s26, 3
      %p119 = scmp.ne.s32.totalorder %s114, %s116
      %p120 = scmp.eq.s32.totalorder %s26, 0
      %p121 = por %p119, %p120
      %p122 = scmp.ne.s32.totalorder %s114, %s116
      %p123 = scmp.eq.s32.totalorder %s31, 3
      %p124 = por %p122, %p123
      %p125 = scmp.ne.s32.totalorder %s116, %s117
      %p126 = scmp.eq.s32.totalorder %s31, 0
      %p127 = por %p125, %p126
      %p128 = scmp.ne.s32.totalorder %s116, %s117
      %p129 = scmp.eq.s32.totalorder %s32, 3
      %p130 = por %p128, %p129
      %p132 = scmp.ne.s32.totalorder %s117, %s131
      %p133 = scmp.eq.s32.totalorder %s32, 0
      %p134 = por %p132, %p133
      %s136 = sadd.s32 %s135, 1
      %p139 = scmp.eq.s32.totalorder %s26, 3
      %p140 = scmp.ne.s32.totalorder %s135, %s137
      %p141 = scmp.eq.s32.totalorder %s26, 0
      %p142 = por %p140, %p141
      %p143 = scmp.ne.s32.totalorder %s135, %s137
      %p144 = scmp.eq.s32.totalorder %s31, 3
      %p145 = por %p143, %p144
      %p146 = scmp.ne.s32.totalorder %s137, %s138
      %p147 = scmp.eq.s32.totalorder %s31, 0
      %p148 = por %p146, %p147
      %p149 = scmp.ne.s32.totalorder %s137, %s138
      %p150 = scmp.eq.s32.totalorder %s32, 3
      %p151 = por %p149, %p150
      %p153 = scmp.ne.s32.totalorder %s138, %s152
      %p154 = scmp.eq.s32.totalorder %s32, 0
      %p155 = por %p153, %p154
      %s157 = sadd.s32 %s156, 1
      %p160 = scmp.eq.s32.totalorder %s26, 3
      %p161 = scmp.ne.s32.totalorder %s156, %s158
      %p162 = scmp.eq.s32.totalorder %s26, 0
      %p163 = por %p161, %p162
      %p164 = scmp.ne.s32.totalorder %s156, %s158
      %p165 = scmp.eq.s32.totalorder %s31, 3
      %p166 = por %p164, %p165
      %p167 = scmp.ne.s32.totalorder %s158, %s159
      %p168 = scmp.eq.s32.totalorder %s31, 0
      %p169 = por %p167, %p168
      %p170 = scmp.ne.s32.totalorder %s158, %s159
      %p171 = scmp.eq.s32.totalorder %s32, 3
      %p172 = por %p170, %p171
      %p174 = scmp.ne.s32.totalorder %s159, %s173
      %p175 = scmp.eq.s32.totalorder %s32, 0
      %p176 = por %p174, %p175
      %s178 = sadd.s32 %s177, 1
      %p181 = scmp.eq.s32.totalorder %s26, 3
      %p182 = scmp.ne.s32.totalorder %s177, %s179
      %p183 = scmp.eq.s32.totalorder %s26, 0
      %p184 = por %p182, %p183
      %p185 = scmp.ne.s32.totalorder %s177, %s179
      %p186 = scmp.eq.s32.totalorder %s31, 3
      %p187 = por %p185, %p186
      %p188 = scmp.ne.s32.totalorder %s179, %s180
      %p189 = scmp.eq.s32.totalorder %s31, 0
      %p190 = por %p188, %p189
      %p191 = scmp.ne.s32.totalorder %s179, %s180
      %p192 = scmp.eq.s32.totalorder %s32, 3
      %p193 = por %p191, %p192
      %p195 = scmp.ne.s32.totalorder %s180, %s194
      %p196 = scmp.eq.s32.totalorder %s32, 0
      %p197 = por %p195, %p196
      %s199 = sadd.s32 %s198, 1
      %p202 = scmp.eq.s32.totalorder %s26, 3
      %p203 = scmp.ne.s32.totalorder %s198, %s200
      %p204 = scmp.eq.s32.totalorder %s26, 0
      %p205 = por %p203, %p204
      %p206 = scmp.ne.s32.totalorder %s198, %s200
      %p207 = scmp.eq.s32.totalorder %s31, 3
      %p208 = por %p206, %p207
      %p209 = scmp.ne.s32.totalorder %s200, %s201
      %p210 = scmp.eq.s32.totalorder %s31, 0
      %p211 = por %p209, %p210
      %p212 = scmp.ne.s32.totalorder %s200, %s201
      %p213 = scmp.eq.s32.totalorder %s32, 3
      %p214 = por %p212, %p213
      %p216 = scmp.ne.s32.totalorder %s201, %s215
      %p217 = scmp.eq.s32.totalorder %s32, 0
      %p218 = por %p216, %p217
      %s220 = sadd.s32 %s219, 1
      %p223 = scmp.eq.s32.totalorder %s26, 3
      %p224 = scmp.ne.s32.totalorder %s219, %s221
      %p225 = scmp.eq.s32.totalorder %s26, 0
      %p226 = por %p224, %p225
      %p227 = scmp.ne.s32.totalorder %s219, %s221
      %p228 = scmp.eq.s32.totalorder %s31, 3
      %p229 = por %p227, %p228
      %p230 = scmp.ne.s32.totalorder %s221, %s222
      %p231 = scmp.eq.s32.totalorder %s31, 0
      %p232 = por %p230, %p231
      %p233 = scmp.ne.s32.totalorder %s221, %s222
      %p234 = scmp.eq.s32.totalorder %s32, 3
      %p235 = por %p233, %p234
      %p237 = scmp.ne.s32.totalorder %s222, %s236
      %p238 = scmp.eq.s32.totalorder %s32, 0
      %p239 = por %p237, %p238
      %s241 = sadd.s32 %s240, 1
      %p244 = scmp.eq.s32.totalorder %s26, 3
      %p245 = scmp.ne.s32.totalorder %s240, %s242
      %p246 = scmp.eq.s32.totalorder %s26, 0
      %p247 = por %p245, %p246
      %p248 = scmp.ne.s32.totalorder %s240, %s242
      %p249 = scmp.eq.s32.totalorder %s31, 3
      %p250 = por %p248, %p249
      %p251 = scmp.ne.s32.totalorder %s242, %s243
      %p252 = scmp.eq.s32.totalorder %s31, 0
      %p253 = por %p251, %p252
      %p254 = scmp.ne.s32.totalorder %s242, %s243
      %p255 = scmp.eq.s32.totalorder %s32, 3
      %p256 = por %p254, %p255
      %p258 = scmp.ne.s32.totalorder %s243, %s257
      %p259 = scmp.eq.s32.totalorder %s32, 0
      %p260 = por %p258, %p259
      %s262 = sadd.s32 %s261, 1
      %p265 = scmp.eq.s32.totalorder %s26, 3
      %p266 = scmp.ne.s32.totalorder %s261, %s263
      %p267 = scmp.eq.s32.totalorder %s26, 0
      %p268 = por %p266, %p267
      %p269 = scmp.ne.s32.totalorder %s261, %s263
      %p270 = scmp.eq.s32.totalorder %s31, 3
      %p271 = por %p269, %p270
      %p272 = scmp.ne.s32.totalorder %s263, %s264
      %p273 = scmp.eq.s32.totalorder %s31, 0
      %p274 = por %p272, %p273
      %p275 = scmp.ne.s32.totalorder %s263, %s264
      %p276 = scmp.eq.s32.totalorder %s32, 3
      %p277 = por %p275, %p276
      %p279 = scmp.ne.s32.totalorder %s264, %s278
      %p280 = scmp.eq.s32.totalorder %s32, 0
      %p281 = por %p279, %p280
      %s283 = sadd.s32 %s282, 1
      %p286 = scmp.eq.s32.totalorder %s26, 3
      %p287 = scmp.ne.s32.totalorder %s282, %s284
      %p288 = scmp.eq.s32.totalorder %s26, 0
      %p289 = por %p287, %p288
      %p290 = scmp.ne.s32.totalorder %s282, %s284
      %p291 = scmp.eq.s32.totalorder %s31, 3
      %p292 = por %p290, %p291
      %p293 = scmp.ne.s32.totalorder %s284, %s285
      %p294 = scmp.eq.s32.totalorder %s31, 0
      %p295 = por %p293, %p294
      %p296 = scmp.ne.s32.totalorder %s284, %s285
      %p297 = scmp.eq.s32.totalorder %s32, 3
      %p298 = por %p296, %p297
      %p300 = scmp.ne.s32.totalorder %s285, %s299
      %p301 = scmp.eq.s32.totalorder %s32, 0
      %p302 = por %p300, %p301
      %s304 = sadd.s32 %s303, 1
      %p307 = scmp.eq.s32.totalorder %s26, 3
      %p308 = scmp.ne.s32.totalorder %s303, %s305
      %p309 = scmp.eq.s32.totalorder %s26, 0
      %p310 = por %p308, %p309
      %p311 = scmp.ne.s32.totalorder %s303, %s305
      %p312 = scmp.eq.s32.totalorder %s31, 3
      %p313 = por %p311, %p312
      %p314 = scmp.ne.s32.totalorder %s305, %s306
      %p315 = scmp.eq.s32.totalorder %s31, 0
      %p316 = por %p314, %p315
      %p317 = scmp.ne.s32.totalorder %s305, %s306
      %p318 = scmp.eq.s32.totalorder %s32, 3
      %p319 = por %p317, %p318
      %p321 = scmp.ne.s32.totalorder %s306, %s320
      %p322 = scmp.eq.s32.totalorder %s32, 0
      %p323 = por %p321, %p322
      %s324 = ssub.s32 %s33, %s45
      %p325 = scmp.eq.s32.totalorder %s324, 0
      %s327 = sadd.s32 %s326, 1
      %s328 = scalar_select %p325, %s326, %s327
      %p331 = pneg %p325
      %p332 = scmp.eq.s32.totalorder %s26, 3
      %p333 = por %p331, %p332
      %p334 = scmp.ne.s32.totalorder %s326, %s329
      %p335 = scmp.eq.s32.totalorder %s26, 0
      %p336 = por %p334, %p335
      %p337 = scmp.ne.s32.totalorder %s326, %s329
      %p338 = scmp.eq.s32.totalorder %s31, 3
      %p339 = por %p337, %p338
      %p340 = scmp.ne.s32.totalorder %s329, %s330
      %p341 = scmp.eq.s32.totalorder %s31, 0
      %p342 = por %p340, %p341
      %p343 = scmp.ne.s32.totalorder %s329, %s330
      %p344 = scmp.eq.s32.totalorder %s32, 3
      %p345 = por %p343, %p344
      %p347 = scmp.ne.s32.totalorder %s330, %s346
      %p348 = scmp.eq.s32.totalorder %s32, 0
      %p349 = por %p347, %p348
      %p350 = scmp.le.s32.totalorder 1, %s26
      %p351 = scmp.lt.s32.totalorder %s26, 5
      %p352 = pnand %p350, %p351
      %p353 = pneg %p352
      // Predicated region
      $region9: #{tpu_custom_call.1} parent=5 // pred_check
        _
      $region10: #{tpu_custom_call.1} parent=5 // pred_check_branch
        %355 = sbr.rel (%p352) target = $region12
      $region11: #{tpu_custom_call.1} parent=5 // pred_region
        %s356 = ssub.s32 %s26, 1
        // Predicated region
        $region13: #{tpu_custom_call.1} parent=11 // pred_check
          %p357 = pneg %p85
        $region14: #{tpu_custom_call.1} parent=11 // pred_check_branch
          %359 = sbr.rel (%p357) target = $region16
        $region15: #{tpu_custom_call.1} parent=11 // pred_region
          _
        $region16: #{tpu_custom_call.1} parent=11 // pred_fallthru
          _
        // Predicated region
        $region17: #{tpu_custom_call.1} parent=11 // pred_check
          %p360 = pneg %p106
        $region18: #{tpu_custom_call.1} parent=11 // pred_check_branch
          %362 = sbr.rel (%p360) target = $region20
        $region19: #{tpu_custom_call.1} parent=11 // pred_region
          _
        $region20: #{tpu_custom_call.1} parent=11 // pred_fallthru
          _
        // Predicated region
        $region21: #{tpu_custom_call.1} parent=11 // pred_check
          %p363 = pneg %p127
        $region22: #{tpu_custom_call.1} parent=11 // pred_check_branch
          %365 = sbr.rel (%p363) target = $region24
        $region23: #{tpu_custom_call.1} parent=11 // pred_region
          _
        $region24: #{tpu_custom_call.1} parent=11 // pred_fallthru
          _
        // Predicated region
        $region25: #{tpu_custom_call.1} parent=11 // pred_check
          %p366 = pneg %p148
        $region26: #{tpu_custom_call.1} parent=11 // pred_check_branch
          %368 = sbr.rel (%p366) target = $region28
        $region27: #{tpu_custom_call.1} parent=11 // pred_region
          _
        $region28: #{tpu_custom_call.1} parent=11 // pred_fallthru
          _
        // Predicated region
        $region29: #{tpu_custom_call.1} parent=11 // pred_check
          %p369 = pneg %p169
        $region30: #{tpu_custom_call.1} parent=11 // pred_check_branch
          %371 = sbr.rel (%p369) target = $region32
        $region31: #{tpu_custom_call.1} parent=11 // pred_region
          _
        $region32: #{tpu_custom_call.1} parent=11 // pred_fallthru
          _
        // Predicated region
        $region33: #{tpu_custom_call.1} parent=11 // pred_check
          %p372 = pneg %p190
        $region34: #{tpu_custom_call.1} parent=11 // pred_check_branch
          %374 = sbr.rel (%p372) target = $region36
        $region35: #{tpu_custom_call.1} parent=11 // pred_region
          _
        $region36: #{tpu_custom_call.1} parent=11 // pred_fallthru
          _
        // Predicated region
        $region37: #{tpu_custom_call.1} parent=11 // pred_check
          %p375 = pneg %p211
        $region38: #{tpu_custom_call.1} parent=11 // pred_check_branch
          %377 = sbr.rel (%p375) target = $region40
        $region39: #{tpu_custom_call.1} parent=11 // pred_region
          _
        $region40: #{tpu_custom_call.1} parent=11 // pred_fallthru
          _
        // Predicated region
        $region41: #{tpu_custom_call.1} parent=11 // pred_check
          %p378 = pneg %p232
        $region42: #{tpu_custom_call.1} parent=11 // pred_check_branch
          %380 = sbr.rel (%p378) target = $region44
        $region43: #{tpu_custom_call.1} parent=11 // pred_region
          _
        $region44: #{tpu_custom_call.1} parent=11 // pred_fallthru
          _
        // Predicated region
        $region45: #{tpu_custom_call.1} parent=11 // pred_check
          %p381 = pneg %p253
        $region46: #{tpu_custom_call.1} parent=11 // pred_check_branch
          %383 = sbr.rel (%p381) target = $region48
        $region47: #{tpu_custom_call.1} parent=11 // pred_region
          %s385 = ssub.s32 2048, 2048
          %386 = vsyncadd [#allocation6], %s385
          %s387 = sshll.u32 [#allocation5], 4
          %s388 = int_to_ptr.vmem [resolvable:$true] %s387
          %393 = dma.hbm_to_vmem [thread:$0]  %s9, 2048, %s388, [#allocation6], 64, 64, 4
        $region48: #{tpu_custom_call.1} parent=11 // pred_fallthru
          _
        // Predicated region
        $region49: #{tpu_custom_call.1} parent=11 // pred_check
          %p394 = pneg %p274
        $region50: #{tpu_custom_call.1} parent=11 // pred_check_branch
          %396 = sbr.rel (%p394) target = $region52
        $region51: #{tpu_custom_call.1} parent=11 // pred_region
          _
        $region52: #{tpu_custom_call.1} parent=11 // pred_fallthru
          _
        // Predicated region
        $region53: #{tpu_custom_call.1} parent=11 // pred_check
          %p397 = pneg %p295
        $region54: #{tpu_custom_call.1} parent=11 // pred_check_branch
          %399 = sbr.rel (%p397) target = $region56
        $region55: #{tpu_custom_call.1} parent=11 // pred_region
          %s401 = ssub.s32 2048, 2048
          %402 = vsyncadd [#allocation6], %s401
          %s403 = sshll.u32 [#allocation7], 4
          %s404 = int_to_ptr.vmem [resolvable:$true] %s403
          %409 = dma.hbm_to_vmem [thread:$0]  %s11, 2048, %s404, [#allocation6], 64, 64, 4
        $region56: #{tpu_custom_call.1} parent=11 // pred_fallthru
          _
        // Predicated region
        $region57: #{tpu_custom_call.1} parent=11 // pred_check
          %p410 = pneg %p316
        $region58: #{tpu_custom_call.1} parent=11 // pred_check_branch
          %412 = sbr.rel (%p410) target = $region60
        $region59: #{tpu_custom_call.1} parent=11 // pred_region
          _
        $region60: #{tpu_custom_call.1} parent=11 // pred_fallthru
          _
      $region12: #{tpu_custom_call.1} parent=5 // pred_fallthru
        _
      %p413 = scmp.lt.s32.totalorder %s26, 4
      // Predicated region
      $region61: #{tpu_custom_call.1} parent=5 // pred_check
        %p414 = pneg %p413
      $region62: #{tpu_custom_call.1} parent=5 // pred_check_branch
        %416 = sbr.rel (%p414) target = $region64
      $region63: #{tpu_custom_call.1} parent=5 // pred_region
        // Predicated region
        $region65: #{tpu_custom_call.1} parent=63 // pred_check
          %p417 = pneg %p58
        $region66: #{tpu_custom_call.1} parent=63 // pred_check_branch
          %419 = sbr.rel (%p417) target = $region68
        $region67: #{tpu_custom_call.1} parent=63 // pred_region
          %s420 = sand.u32 %s48, 1
          %s421 = scalar_lea.sflag [#allocation3], %s420
          %s422 = sand.u32 %s48, 1
          %s423 = smul.addr %s422, 256
          %s424 = scalar_lea.vmem [#allocation2], %s423
          %s425 = smul.u32 32, %s33
          %s427 = ssub.s32 4096, 4096
          %428 = vsyncadd %s421, %s427
          %s429 = smul.addr %s425, 128
          %s430 = scalar_lea.hbm %s0, %s429
          %s431 = sshll.u32 %s424, 4
          %s432 = int_to_ptr.vmem [resolvable:$true] %s431
          %437 = dma.hbm_to_vmem [thread:$0]  %s430, 4096, %s432, %s421, 128, 128, 8
        $region68: #{tpu_custom_call.1} parent=63 // pred_fallthru
          _
      $region64: #{tpu_custom_call.1} parent=5 // pred_fallthru
        _
      %p438 = scmp.le.s32.totalorder 1, %s26
      %p439 = scmp.lt.s32.totalorder %s26, 5
      %p440 = pnand %p438, %p439
      %p441 = pneg %p440
      // Predicated region
      $region69: #{tpu_custom_call.1} parent=5 // pred_check
        _
      $region70: #{tpu_custom_call.1} parent=5 // pred_check_branch
        %443 = sbr.rel (%p440) target = $region72
      $region71: #{tpu_custom_call.1} parent=5 // pred_region
        %s444 = ssub.s32 %s26, 1
        %s445 = sand.u32 %s51, 1
        %s446 = scalar_lea.sflag [#allocation3], %s445
        %s447 = sand.u32 %s51, 1
        %s448 = smul.addr %s447, 256
        %s449 = scalar_lea.vmem [#allocation2], %s448
        // Predicated region
        $region73: #{tpu_custom_call.1} parent=71 // pred_check
          %p450 = pneg %p64
        $region74: #{tpu_custom_call.1} parent=71 // pred_check_branch
          %452 = sbr.rel (%p450) target = $region76
        $region75: #{tpu_custom_call.1} parent=71 // pred_region
          %453 = dma.done %s446, 4096
        $region76: #{tpu_custom_call.1} parent=71 // pred_fallthru
          _
        // Predicated region
        $region77: #{tpu_custom_call.1} parent=71 // pred_check
          %p454 = pneg %p253
        $region78: #{tpu_custom_call.1} parent=71 // pred_check_branch
          %456 = sbr.rel (%p454) target = $region80
        $region79: #{tpu_custom_call.1} parent=71 // pred_region
          %457 = dma.done [#allocation6], 2048
        $region80: #{tpu_custom_call.1} parent=71 // pred_fallthru
          _
        // Predicated region
        $region81: #{tpu_custom_call.1} parent=71 // pred_check
          %p458 = pneg %p295
        $region82: #{tpu_custom_call.1} parent=71 // pred_check_branch
          %460 = sbr.rel (%p458) target = $region84
        $region83: #{tpu_custom_call.1} parent=71 // pred_region
          %461 = dma.done [#allocation6], 2048
        $region84: #{tpu_custom_call.1} parent=71 // pred_fallthru
          _
        %s462 = sand.u32 %s51, 1
        %s463 = scalar_lea.sflag [#allocation3], %s462
        %s464 = sand.u32 %s51, 1
        %s465 = smul.addr %s464, 256
        %s466 = scalar_lea.vmem [#allocation2], %s465
        %p467 = pneg %p64
        %p468 = pneg %p61
        %p469 = pneg %p85
        %p470 = pneg %p82
        %p471 = pneg %p106
        %p472 = pneg %p103
        %p473 = pneg %p127
        %p474 = pneg %p124
        %p475 = pneg %p148
        %p476 = pneg %p145
        %p477 = pneg %p169
        %p478 = pneg %p166
        %p479 = pneg %p190
        %p480 = pneg %p187
        %p481 = pneg %p211
        %p482 = pneg %p208
        %p483 = pneg %p232
        %p484 = pneg %p229
        %p485 = pneg %p253
        %p486 = pneg %p250
        %p487 = pneg %p274
        %p488 = pneg %p271
        %p489 = pneg %p295
        %p490 = pneg %p292
        %p491 = pneg %p316
        %p492 = pneg %p313
        %p493 = pneg %p342
        %p494 = pneg %p339
        %s495 = sand.u32 %s329, 1
        %s496 = scalar_lea.sflag [#allocation4], %s495
        %s497 = sand.u32 %s329, 1
        %s498 = smul.addr %s497, 256
        %s499 = scalar_lea.vmem [#allocation8], %s498
        %s500 = smul.u32 32, %s35
        %s501 = smul.u32 32, %s35
        %p503 = scmp.eq.s32.totalorder %s36, 0
        // Predicated region
        $region85: #{tpu_custom_call.1} parent=71 // pred_check
          %p504 = pneg %p503
        $region86: #{tpu_custom_call.1} parent=71 // pred_check_branch
          %506 = sbr.rel (%p504) target = $region88
        $region87: #{tpu_custom_call.1} parent=71 // pred_region
          %v507 = vld [vmem:[%s449] sm:$0xff]
          %v508 = vld [vmem:[%s449 + $0x8] sm:$0xff]
          %v509 = vld [vmem:[%s449 + $0x10] sm:$0xff]
          %v510 = vld [vmem:[%s449 + $0x18] sm:$0xff]
          %v511 = vld [vmem:[%s449 + $0x20] sm:$0xff]
          %v512 = vld [vmem:[%s449 + $0x28] sm:$0xff]
          %v513 = vld [vmem:[%s449 + $0x30] sm:$0xff]
          %v514 = vld [vmem:[%s449 + $0x38] sm:$0xff]
          %v515 = vld [vmem:[%s449 + $0x40] sm:$0xff]
          %v516 = vld [vmem:[%s449 + $0x48] sm:$0xff]
          %v517 = vld [vmem:[%s449 + $0x50] sm:$0xff]
          %v518 = vld [vmem:[%s449 + $0x58] sm:$0xff]
          %v519 = vld [vmem:[%s449 + $0x60] sm:$0xff]
          %v520 = vld [vmem:[%s449 + $0x68] sm:$0xff]
          %v521 = vld [vmem:[%s449 + $0x70] sm:$0xff]
          %v522 = vld [vmem:[%s449 + $0x78] sm:$0xff]
          %v523 = vld [vmem:[%s449 + $0x80] sm:$0xff]
          %v524 = vld [vmem:[%s449 + $0x88] sm:$0xff]
          %v525 = vld [vmem:[%s449 + $0x90] sm:$0xff]
          %v526 = vld [vmem:[%s449 + $0x98] sm:$0xff]
          %v527 = vld [vmem:[%s449 + $0xa0] sm:$0xff]
          %v528 = vld [vmem:[%s449 + $0xa8] sm:$0xff]
          %v529 = vld [vmem:[%s449 + $0xb0] sm:$0xff]
          %v530 = vld [vmem:[%s449 + $0xb8] sm:$0xff]
          %v531 = vld [vmem:[%s449 + $0xc0] sm:$0xff]
          %v532 = vld [vmem:[%s449 + $0xc8] sm:$0xff]
          %v533 = vld [vmem:[%s449 + $0xd0] sm:$0xff]
          %v534 = vld [vmem:[%s449 + $0xd8] sm:$0xff]
          %v535 = vld [vmem:[%s449 + $0xe0] sm:$0xff]
          %v536 = vld [vmem:[%s449 + $0xe8] sm:$0xff]
          %v537 = vld [vmem:[%s449 + $0xf0] sm:$0xff]
          %v538 = vld [vmem:[%s449 + $0xf8] sm:$0xff]
          %539 = vst [vmem:[%s499] sm:$0xff] %v507
          %540 = vst [vmem:[%s499 + $0x8] sm:$0xff] %v508
          %541 = vst [vmem:[%s499 + $0x10] sm:$0xff] %v509
          %542 = vst [vmem:[%s499 + $0x18] sm:$0xff] %v510
          %543 = vst [vmem:[%s499 + $0x20] sm:$0xff] %v511
          %544 = vst [vmem:[%s499 + $0x28] sm:$0xff] %v512
          %545 = vst [vmem:[%s499 + $0x30] sm:$0xff] %v513
          %546 = vst [vmem:[%s499 + $0x38] sm:$0xff] %v514
          %547 = vst [vmem:[%s499 + $0x40] sm:$0xff] %v515
          %548 = vst [vmem:[%s499 + $0x48] sm:$0xff] %v516
          %549 = vst [vmem:[%s499 + $0x50] sm:$0xff] %v517
          %550 = vst [vmem:[%s499 + $0x58] sm:$0xff] %v518
          %551 = vst [vmem:[%s499 + $0x60] sm:$0xff] %v519
          %552 = vst [vmem:[%s499 + $0x68] sm:$0xff] %v520
          %553 = vst [vmem:[%s499 + $0x70] sm:$0xff] %v521
          %554 = vst [vmem:[%s499 + $0x78] sm:$0xff] %v522
          %555 = vst [vmem:[%s499 + $0x80] sm:$0xff] %v523
          %556 = vst [vmem:[%s499 + $0x88] sm:$0xff] %v524
          %557 = vst [vmem:[%s499 + $0x90] sm:$0xff] %v525
          %558 = vst [vmem:[%s499 + $0x98] sm:$0xff] %v526
          %559 = vst [vmem:[%s499 + $0xa0] sm:$0xff] %v527
          %560 = vst [vmem:[%s499 + $0xa8] sm:$0xff] %v528
          %561 = vst [vmem:[%s499 + $0xb0] sm:$0xff] %v529
          %562 = vst [vmem:[%s499 + $0xb8] sm:$0xff] %v530
          %563 = vst [vmem:[%s499 + $0xc0] sm:$0xff] %v531
          %564 = vst [vmem:[%s499 + $0xc8] sm:$0xff] %v532
          %565 = vst [vmem:[%s499 + $0xd0] sm:$0xff] %v533
          %566 = vst [vmem:[%s499 + $0xd8] sm:$0xff] %v534
          %567 = vst [vmem:[%s499 + $0xe0] sm:$0xff] %v535
          %568 = vst [vmem:[%s499 + $0xe8] sm:$0xff] %v536
          %569 = vst [vmem:[%s499 + $0xf0] sm:$0xff] %v537
          %570 = vst [vmem:[%s499 + $0xf8] sm:$0xff] %v538
        $region88: #{tpu_custom_call.1} parent=71 // pred_fallthru
          _
        %v571 = vld [vmem:[%s499] sm:$0xff]
        %v572 = vld [vmem:[%s499 + $0x8] sm:$0xff]
        %v573 = vld [vmem:[%s499 + $0x10] sm:$0xff]
        %v574 = vld [vmem:[%s499 + $0x18] sm:$0xff]
        %v575 = vld [vmem:[%s499 + $0x20] sm:$0xff]
        %v576 = vld [vmem:[%s499 + $0x28] sm:$0xff]
        %v577 = vld [vmem:[%s499 + $0x30] sm:$0xff]
        %v578 = vld [vmem:[%s499 + $0x38] sm:$0xff]
        %v579 = vld [vmem:[%s499 + $0x40] sm:$0xff]
        %v580 = vld [vmem:[%s499 + $0x48] sm:$0xff]
        %v581 = vld [vmem:[%s499 + $0x50] sm:$0xff]
        %v582 = vld [vmem:[%s499 + $0x58] sm:$0xff]
        %v583 = vld [vmem:[%s499 + $0x60] sm:$0xff]
        %v584 = vld [vmem:[%s499 + $0x68] sm:$0xff]
        %v585 = vld [vmem:[%s499 + $0x70] sm:$0xff]
        %v586 = vld [vmem:[%s499 + $0x78] sm:$0xff]
        %v587 = vld [vmem:[%s499 + $0x80] sm:$0xff]
        %v588 = vld [vmem:[%s499 + $0x88] sm:$0xff]
        %v589 = vld [vmem:[%s499 + $0x90] sm:$0xff]
        %v590 = vld [vmem:[%s499 + $0x98] sm:$0xff]
        %v591 = vld [vmem:[%s499 + $0xa0] sm:$0xff]
        %v592 = vld [vmem:[%s499 + $0xa8] sm:$0xff]
        %v593 = vld [vmem:[%s499 + $0xb0] sm:$0xff]
        %v594 = vld [vmem:[%s499 + $0xb8] sm:$0xff]
        %v595 = vld [vmem:[%s499 + $0xc0] sm:$0xff]
        %v596 = vld [vmem:[%s499 + $0xc8] sm:$0xff]
        %v597 = vld [vmem:[%s499 + $0xd0] sm:$0xff]
        %v598 = vld [vmem:[%s499 + $0xd8] sm:$0xff]
        %v599 = vld [vmem:[%s499 + $0xe0] sm:$0xff]
        %v600 = vld [vmem:[%s499 + $0xe8] sm:$0xff]
        %v601 = vld [vmem:[%s499 + $0xf0] sm:$0xff]
        %v602 = vld [vmem:[%s499 + $0xf8] sm:$0xff]
        %s603 = scalar_lea.vmem %s1, %s36
        %v604 = vld [vmem:[%s603] sm:$0x1]
        %s605 = scalar_lea.vmem %s2, %s36
        %v606 = vld [vmem:[%s605] sm:$0x1]
        %607 = vadd.xlane.f32.xlu0 %v571
        %v608 = vpop.xlane.xlu0 %607
        %609 = vadd.xlane.f32.xlu0 %v572
        %v610 = vpop.xlane.xlu0 %609
        %611 = vadd.xlane.f32.xlu0 %v573
        %v612 = vpop.xlane.xlu0 %611
        %613 = vadd.xlane.f32.xlu0 %v574
        %v614 = vpop.xlane.xlu0 %613
        %615 = vadd.xlane.f32.xlu0 %v575
        %v616 = vpop.xlane.xlu0 %615
        %617 = vadd.xlane.f32.xlu0 %v576
        %v618 = vpop.xlane.xlu0 %617
        %619 = vadd.xlane.f32.xlu0 %v577
        %v620 = vpop.xlane.xlu0 %619
        %621 = vadd.xlane.f32.xlu0 %v578
        %v622 = vpop.xlane.xlu0 %621
        %623 = vadd.xlane.f32.xlu0 %v579
        %v624 = vpop.xlane.xlu0 %623
        %625 = vadd.xlane.f32.xlu0 %v580
        %v626 = vpop.xlane.xlu0 %625
        %627 = vadd.xlane.f32.xlu0 %v581
        %v628 = vpop.xlane.xlu0 %627
        %629 = vadd.xlane.f32.xlu0 %v582
        %v630 = vpop.xlane.xlu0 %629
        %631 = vadd.xlane.f32.xlu0 %v583
        %v632 = vpop.xlane.xlu0 %631
        %633 = vadd.xlane.f32.xlu0 %v584
        %v634 = vpop.xlane.xlu0 %633
        %635 = vadd.xlane.f32.xlu0 %v585
        %v636 = vpop.xlane.xlu0 %635
        %637 = vadd.xlane.f32.xlu0 %v586
        %v638 = vpop.xlane.xlu0 %637
        %639 = vadd.xlane.f32.xlu0 %v587
        %v640 = vpop.xlane.xlu0 %639
        %641 = vadd.xlane.f32.xlu0 %v588
        %v642 = vpop.xlane.xlu0 %641
        %643 = vadd.xlane.f32.xlu0 %v589
        %v644 = vpop.xlane.xlu0 %643
        %645 = vadd.xlane.f32.xlu0 %v590
        %v646 = vpop.xlane.xlu0 %645
        %647 = vadd.xlane.f32.xlu0 %v591
        %v648 = vpop.xlane.xlu0 %647
        %649 = vadd.xlane.f32.xlu0 %v592
        %v650 = vpop.xlane.xlu0 %649
        %651 = vadd.xlane.f32.xlu0 %v593
        %v652 = vpop.xlane.xlu0 %651
        %653 = vadd.xlane.f32.xlu0 %v594
        %v654 = vpop.xlane.xlu0 %653
        %655 = vadd.xlane.f32.xlu0 %v595
        %v656 = vpop.xlane.xlu0 %655
        %657 = vadd.xlane.f32.xlu0 %v596
        %v658 = vpop.xlane.xlu0 %657
        %659 = vadd.xlane.f32.xlu0 %v597
        %v660 = vpop.xlane.xlu0 %659
        %661 = vadd.xlane.f32.xlu0 %v598
        %v662 = vpop.xlane.xlu0 %661
        %663 = vadd.xlane.f32.xlu0 %v599
        %v664 = vpop.xlane.xlu0 %663
        %665 = vadd.xlane.f32.xlu0 %v600
        %v666 = vpop.xlane.xlu0 %665
        %667 = vadd.xlane.f32.xlu0 %v601
        %v668 = vpop.xlane.xlu0 %667
        %669 = vadd.xlane.f32.xlu0 %v602
        %v670 = vpop.xlane.xlu0 %669
        %v671 = vrcp.pop 128.0
        %v672 = vmul.f32 %v608, %v671
        %v673 = vmul.f32 %v610, %v671
        %v674 = vmul.f32 %v612, %v671
        %v675 = vmul.f32 %v614, %v671
        %v676 = vmul.f32 %v616, %v671
        %v677 = vmul.f32 %v618, %v671
        %v678 = vmul.f32 %v620, %v671
        %v679 = vmul.f32 %v622, %v671
        %v680 = vmul.f32 %v624, %v671
        %v681 = vmul.f32 %v626, %v671
        %v682 = vmul.f32 %v628, %v671
        %v683 = vmul.f32 %v630, %v671
        %v684 = vmul.f32 %v632, %v671
        %v685 = vmul.f32 %v634, %v671
        %v686 = vmul.f32 %v636, %v671
        %v687 = vmul.f32 %v638, %v671
        %v688 = vmul.f32 %v640, %v671
        %v689 = vmul.f32 %v642, %v671
        %v690 = vmul.f32 %v644, %v671
        %v691 = vmul.f32 %v646, %v671
        %v692 = vmul.f32 %v648, %v671
        %v693 = vmul.f32 %v650, %v671
        %v694 = vmul.f32 %v652, %v671
        %v695 = vmul.f32 %v654, %v671
        %v696 = vmul.f32 %v656, %v671
        %v697 = vmul.f32 %v658, %v671
        %v698 = vmul.f32 %v660, %v671
        %v699 = vmul.f32 %v662, %v671
        %v700 = vmul.f32 %v664, %v671
        %v701 = vmul.f32 %v666, %v671
        %v702 = vmul.f32 %v668, %v671
        %v703 = vmul.f32 %v670, %v671
        %v704 = vsub.f32 %v571, %v672
        %v705 = vsub.f32 %v572, %v673
        %v706 = vsub.f32 %v573, %v674
        %v707 = vsub.f32 %v574, %v675
        %v708 = vsub.f32 %v575, %v676
        %v709 = vsub.f32 %v576, %v677
        %v710 = vsub.f32 %v577, %v678
        %v711 = vsub.f32 %v578, %v679
        %v712 = vsub.f32 %v579, %v680
        %v713 = vsub.f32 %v580, %v681
        %v714 = vsub.f32 %v581, %v682
        %v715 = vsub.f32 %v582, %v683
        %v716 = vsub.f32 %v583, %v684
        %v717 = vsub.f32 %v584, %v685
        %v718 = vsub.f32 %v585, %v686
        %v719 = vsub.f32 %v586, %v687
        %v720 = vsub.f32 %v587, %v688
        %v721 = vsub.f32 %v588, %v689
        %v722 = vsub.f32 %v589, %v690
        %v723 = vsub.f32 %v590, %v691
        %v724 = vsub.f32 %v591, %v692
        %v725 = vsub.f32 %v592, %v693
        %v726 = vsub.f32 %v593, %v694
        %v727 = vsub.f32 %v594, %v695
        %v728 = vsub.f32 %v595, %v696
        %v729 = vsub.f32 %v596, %v697
        %v730 = vsub.f32 %v597, %v698
        %v731 = vsub.f32 %v598, %v699
        %v732 = vsub.f32 %v599, %v700
        %v733 = vsub.f32 %v600, %v701
        %v734 = vsub.f32 %v601, %v702
        %v735 = vsub.f32 %v602, %v703
        %v736 = vmul.f32 %v704, %v704
        %v737 = vmul.f32 %v705, %v705
        %v738 = vmul.f32 %v706, %v706
        %v739 = vmul.f32 %v707, %v707
        %v740 = vmul.f32 %v708, %v708
        %v741 = vmul.f32 %v709, %v709
        %v742 = vmul.f32 %v710, %v710
        %v743 = vmul.f32 %v711, %v711
        %v744 = vmul.f32 %v712, %v712
        %v745 = vmul.f32 %v713, %v713
        %v746 = vmul.f32 %v714, %v714
        %v747 = vmul.f32 %v715, %v715
        %v748 = vmul.f32 %v716, %v716
        %v749 = vmul.f32 %v717, %v717
        %v750 = vmul.f32 %v718, %v718
        %v751 = vmul.f32 %v719, %v719
        %v752 = vmul.f32 %v720, %v720
        %v753 = vmul.f32 %v721, %v721
        %v754 = vmul.f32 %v722, %v722
        %v755 = vmul.f32 %v723, %v723
        %v756 = vmul.f32 %v724, %v724
        %v757 = vmul.f32 %v725, %v725
        %v758 = vmul.f32 %v726, %v726
        %v759 = vmul.f32 %v727, %v727
        %v760 = vmul.f32 %v728, %v728
        %v761 = vmul.f32 %v729, %v729
        %v762 = vmul.f32 %v730, %v730
        %v763 = vmul.f32 %v731, %v731
        %v764 = vmul.f32 %v732, %v732
        %v765 = vmul.f32 %v733, %v733
        %v766 = vmul.f32 %v734, %v734
        %v767 = vmul.f32 %v735, %v735
        %768 = vadd.xlane.f32.xlu0 %v736
        %v769 = vpop.xlane.xlu0 %768
        %770 = vadd.xlane.f32.xlu0 %v737
        %v771 = vpop.xlane.xlu0 %770
        %772 = vadd.xlane.f32.xlu0 %v738
        %v773 = vpop.xlane.xlu0 %772
        %774 = vadd.xlane.f32.xlu0 %v739
        %v775 = vpop.xlane.xlu0 %774
        %776 = vadd.xlane.f32.xlu0 %v740
        %v777 = vpop.xlane.xlu0 %776
        %778 = vadd.xlane.f32.xlu0 %v741
        %v779 = vpop.xlane.xlu0 %778
        %780 = vadd.xlane.f32.xlu0 %v742
        %v781 = vpop.xlane.xlu0 %780
        %782 = vadd.xlane.f32.xlu0 %v743
        %v783 = vpop.xlane.xlu0 %782
        %784 = vadd.xlane.f32.xlu0 %v744
        %v785 = vpop.xlane.xlu0 %784
        %786 = vadd.xlane.f32.xlu0 %v745
        %v787 = vpop.xlane.xlu0 %786
        %788 = vadd.xlane.f32.xlu0 %v746
        %v789 = vpop.xlane.xlu0 %788
        %790 = vadd.xlane.f32.xlu0 %v747
        %v791 = vpop.xlane.xlu0 %790
        %792 = vadd.xlane.f32.xlu0 %v748
        %v793 = vpop.xlane.xlu0 %792
        %794 = vadd.xlane.f32.xlu0 %v749
        %v795 = vpop.xlane.xlu0 %794
        %796 = vadd.xlane.f32.xlu0 %v750
        %v797 = vpop.xlane.xlu0 %796
        %798 = vadd.xlane.f32.xlu0 %v751
        %v799 = vpop.xlane.xlu0 %798
        %800 = vadd.xlane.f32.xlu0 %v752
        %v801 = vpop.xlane.xlu0 %800
        %802 = vadd.xlane.f32.xlu0 %v753
        %v803 = vpop.xlane.xlu0 %802
        %804 = vadd.xlane.f32.xlu0 %v754
        %v805 = vpop.xlane.xlu0 %804
        %806 = vadd.xlane.f32.xlu0 %v755
        %v807 = vpop.xlane.xlu0 %806
        %808 = vadd.xlane.f32.xlu0 %v756
        %v809 = vpop.xlane.xlu0 %808
        %810 = vadd.xlane.f32.xlu0 %v757
        %v811 = vpop.xlane.xlu0 %810
        %812 = vadd.xlane.f32.xlu0 %v758
        %v813 = vpop.xlane.xlu0 %812
        %814 = vadd.xlane.f32.xlu0 %v759
        %v815 = vpop.xlane.xlu0 %814
        %816 = vadd.xlane.f32.xlu0 %v760
        %v817 = vpop.xlane.xlu0 %816
        %818 = vadd.xlane.f32.xlu0 %v761
        %v819 = vpop.xlane.xlu0 %818
        %820 = vadd.xlane.f32.xlu0 %v762
        %v821 = vpop.xlane.xlu0 %820
        %822 = vadd.xlane.f32.xlu0 %v763
        %v823 = vpop.xlane.xlu0 %822
        %824 = vadd.xlane.f32.xlu0 %v764
        %v825 = vpop.xlane.xlu0 %824
        %826 = vadd.xlane.f32.xlu0 %v765
        %v827 = vpop.xlane.xlu0 %826
        %828 = vadd.xlane.f32.xlu0 %v766
        %v829 = vpop.xlane.xlu0 %828
        %830 = vadd.xlane.f32.xlu0 %v767
        %v831 = vpop.xlane.xlu0 %830
        %v832 = vmul.f32 %v769, %v671
        %v833 = vmul.f32 %v771, %v671
        %v834 = vmul.f32 %v773, %v671
        %v835 = vmul.f32 %v775, %v671
        %v836 = vmul.f32 %v777, %v671
        %v837 = vmul.f32 %v779, %v671
        %v838 = vmul.f32 %v781, %v671
        %v839 = vmul.f32 %v783, %v671
        %v840 = vmul.f32 %v785, %v671
        %v841 = vmul.f32 %v787, %v671
        %v842 = vmul.f32 %v789, %v671
        %v843 = vmul.f32 %v791, %v671
        %v844 = vmul.f32 %v793, %v671
        %v845 = vmul.f32 %v795, %v671
        %v846 = vmul.f32 %v797, %v671
        %v847 = vmul.f32 %v799, %v671
        %v848 = vmul.f32 %v801, %v671
        %v849 = vmul.f32 %v803, %v671
        %v850 = vmul.f32 %v805, %v671
        %v851 = vmul.f32 %v807, %v671
        %v852 = vmul.f32 %v809, %v671
        %v853 = vmul.f32 %v811, %v671
        %v854 = vmul.f32 %v813, %v671
        %v855 = vmul.f32 %v815, %v671
        %v856 = vmul.f32 %v817, %v671
        %v857 = vmul.f32 %v819, %v671
        %v858 = vmul.f32 %v821, %v671
        %v859 = vmul.f32 %v823, %v671
        %v860 = vmul.f32 %v825, %v671
        %v861 = vmul.f32 %v827, %v671
        %v862 = vmul.f32 %v829, %v671
        %v863 = vmul.f32 %v831, %v671
        %v864 = vadd.f32 %v832, 1e-05
        %v865 = vadd.f32 %v833, 1e-05
        %v866 = vadd.f32 %v834, 1e-05
        %v867 = vadd.f32 %v835, 1e-05
        %v868 = vadd.f32 %v836, 1e-05
        %v869 = vadd.f32 %v837, 1e-05
        %v870 = vadd.f32 %v838, 1e-05
        %v871 = vadd.f32 %v839, 1e-05
        %v872 = vadd.f32 %v840, 1e-05
        %v873 = vadd.f32 %v841, 1e-05
        %v874 = vadd.f32 %v842, 1e-05
        %v875 = vadd.f32 %v843, 1e-05
        %v876 = vadd.f32 %v844, 1e-05
        %v877 = vadd.f32 %v845, 1e-05
        %v878 = vadd.f32 %v846, 1e-05
        %v879 = vadd.f32 %v847, 1e-05
        %v880 = vadd.f32 %v848, 1e-05
        %v881 = vadd.f32 %v849, 1e-05
        %v882 = vadd.f32 %v850, 1e-05
        %v883 = vadd.f32 %v851, 1e-05
        %v884 = vadd.f32 %v852, 1e-05
        %v885 = vadd.f32 %v853, 1e-05
        %v886 = vadd.f32 %v854, 1e-05
        %v887 = vadd.f32 %v855, 1e-05
        %v888 = vadd.f32 %v856, 1e-05
        %v889 = vadd.f32 %v857, 1e-05
        %v890 = vadd.f32 %v858, 1e-05
        %v891 = vadd.f32 %v859, 1e-05
        %v892 = vadd.f32 %v860, 1e-05
        %v893 = vadd.f32 %v861, 1e-05
        %v894 = vadd.f32 %v862, 1e-05
        %v895 = vadd.f32 %v863, 1e-05
        %v896 = vrsqrt.pop %v864
        %v897 = vrsqrt.pop %v865
        %v898 = vrsqrt.pop %v866
        %v899 = vrsqrt.pop %v867
        %v900 = vrsqrt.pop %v868
        %v901 = vrsqrt.pop %v869
        %v902 = vrsqrt.pop %v870
        %v903 = vrsqrt.pop %v871
        %v904 = vrsqrt.pop %v872
        %v905 = vrsqrt.pop %v873
        %v906 = vrsqrt.pop %v874
        %v907 = vrsqrt.pop %v875
        %v908 = vrsqrt.pop %v876
        %v909 = vrsqrt.pop %v877
        %v910 = vrsqrt.pop %v878
        %v911 = vrsqrt.pop %v879
        %v912 = vrsqrt.pop %v880
        %v913 = vrsqrt.pop %v881
        %v914 = vrsqrt.pop %v882
        %v915 = vrsqrt.pop %v883
        %v916 = vrsqrt.pop %v884
        %v917 = vrsqrt.pop %v885
        %v918 = vrsqrt.pop %v886
        %v919 = vrsqrt.pop %v887
        %v920 = vrsqrt.pop %v888
        %v921 = vrsqrt.pop %v889
        %v922 = vrsqrt.pop %v890
        %v923 = vrsqrt.pop %v891
        %v924 = vrsqrt.pop %v892
        %v925 = vrsqrt.pop %v893
        %v926 = vrsqrt.pop %v894
        %v927 = vrsqrt.pop %v895
        %v928 = vmul.f32 %v704, %v896
        %v929 = vmul.f32 %v705, %v897
        %v930 = vmul.f32 %v706, %v898
        %v931 = vmul.f32 %v707, %v899
        %v932 = vmul.f32 %v708, %v900
        %v933 = vmul.f32 %v709, %v901
        %v934 = vmul.f32 %v710, %v902
        %v935 = vmul.f32 %v711, %v903
        %v936 = vmul.f32 %v712, %v904
        %v937 = vmul.f32 %v713, %v905
        %v938 = vmul.f32 %v714, %v906
        %v939 = vmul.f32 %v715, %v907
        %v940 = vmul.f32 %v716, %v908
        %v941 = vmul.f32 %v717, %v909
        %v942 = vmul.f32 %v718, %v910
        %v943 = vmul.f32 %v719, %v911
        %v944 = vmul.f32 %v720, %v912
        %v945 = vmul.f32 %v721, %v913
        %v946 = vmul.f32 %v722, %v914
        %v947 = vmul.f32 %v723, %v915
        %v948 = vmul.f32 %v724, %v916
        %v949 = vmul.f32 %v725, %v917
        %v950 = vmul.f32 %v726, %v918
        %v951 = vmul.f32 %v727, %v919
        %v952 = vmul.f32 %v728, %v920
        %v953 = vmul.f32 %v729, %v921
        %v954 = vmul.f32 %v730, %v922
        %v955 = vmul.f32 %v731, %v923
        %v956 = vmul.f32 %v732, %v924
        %v957 = vmul.f32 %v733, %v925
        %v958 = vmul.f32 %v734, %v926
        %v959 = vmul.f32 %v735, %v927
        %v961 = vlaneseq
        %v962 = vshrl.u32 %v961, 7
        %v963 = vsub.s32 0, %v962
        %v964 = vrot.slane %v604, %v963
        %v966 = vmul.f32 %v928, %v964
        %v967 = vmul.f32 %v929, %v964
        %v968 = vmul.f32 %v930, %v964
        %v969 = vmul.f32 %v931, %v964
        %v970 = vmul.f32 %v932, %v964
        %v971 = vmul.f32 %v933, %v964
        %v972 = vmul.f32 %v934, %v964
        %v973 = vmul.f32 %v935, %v964
        %v974 = vmul.f32 %v936, %v964
        %v975 = vmul.f32 %v937, %v964
        %v976 = vmul.f32 %v938, %v964
        %v977 = vmul.f32 %v939, %v964
        %v978 = vmul.f32 %v940, %v964
        %v979 = vmul.f32 %v941, %v964
        %v980 = vmul.f32 %v942, %v964
        %v981 = vmul.f32 %v943, %v964
        %v982 = vmul.f32 %v944, %v964
        %v983 = vmul.f32 %v945, %v964
        %v984 = vmul.f32 %v946, %v964
        %v985 = vmul.f32 %v947, %v964
        %v986 = vmul.f32 %v948, %v964
        %v987 = vmul.f32 %v949, %v964
        %v988 = vmul.f32 %v950, %v964
        %v989 = vmul.f32 %v951, %v964
        %v990 = vmul.f32 %v952, %v964
        %v991 = vmul.f32 %v953, %v964
        %v992 = vmul.f32 %v954, %v964
        %v993 = vmul.f32 %v955, %v964
        %v994 = vmul.f32 %v956, %v964
        %v995 = vmul.f32 %v957, %v964
        %v996 = vmul.f32 %v958, %v964
        %v997 = vmul.f32 %v959, %v964
        %v999 = vlaneseq
        %v1000 = vshrl.u32 %v999, 7
        %v1001 = vsub.s32 0, %v1000
        %v1002 = vrot.slane %v606, %v1001
        %v1004 = vadd.f32 %v966, %v1002
        %v1005 = vadd.f32 %v967, %v1002
        %v1006 = vadd.f32 %v968, %v1002
        %v1007 = vadd.f32 %v969, %v1002
        %v1008 = vadd.f32 %v970, %v1002
        %v1009 = vadd.f32 %v971, %v1002
        %v1010 = vadd.f32 %v972, %v1002
        %v1011 = vadd.f32 %v973, %v1002
        %v1012 = vadd.f32 %v974, %v1002
        %v1013 = vadd.f32 %v975, %v1002
        %v1014 = vadd.f32 %v976, %v1002
        %v1015 = vadd.f32 %v977, %v1002
        %v1016 = vadd.f32 %v978, %v1002
        %v1017 = vadd.f32 %v979, %v1002
        %v1018 = vadd.f32 %v980, %v1002
        %v1019 = vadd.f32 %v981, %v1002
        %v1020 = vadd.f32 %v982, %v1002
        %v1021 = vadd.f32 %v983, %v1002
        %v1022 = vadd.f32 %v984, %v1002
        %v1023 = vadd.f32 %v985, %v1002
        %v1024 = vadd.f32 %v986, %v1002
        %v1025 = vadd.f32 %v987, %v1002
        %v1026 = vadd.f32 %v988, %v1002
        %v1027 = vadd.f32 %v989, %v1002
        %v1028 = vadd.f32 %v990, %v1002
        %v1029 = vadd.f32 %v991, %v1002
        %v1030 = vadd.f32 %v992, %v1002
        %v1031 = vadd.f32 %v993, %v1002
        %v1032 = vadd.f32 %v994, %v1002
        %v1033 = vadd.f32 %v995, %v1002
        %v1034 = vadd.f32 %v996, %v1002
        %v1035 = vadd.f32 %v997, %v1002
        %s1036 = smul.u32 %s36, 8
        %s1037 = scalar_lea.vmem %s3, %s1036
        %v1038 = vld [vmem:[%s1037] sm:$0xff]
        %1040 = vset.pattern.permute.xlu0 0
        %1041 = vperm.xlu0 %1040, %v1038
        %v1042 = vpop.permute.xlu0 %1041
        %v1044 = vlaneseq
        %v1045 = vshrl.u32 %v1044, 7
        %v1046 = vsub.s32 0, %v1045
        %v1047 = vrot.slane %v1004, %v1046
        %v1048 = vlaneseq
        %v1049 = vshrl.u32 %v1048, 7
        %v1050 = vsub.s32 0, %v1049
        %v1051 = vrot.slane %v1005, %v1050
        %v1052 = vlaneseq
        %v1053 = vshrl.u32 %v1052, 7
        %v1054 = vsub.s32 0, %v1053
        %v1055 = vrot.slane %v1006, %v1054
        %v1056 = vlaneseq
        %v1057 = vshrl.u32 %v1056, 7
        %v1058 = vsub.s32 0, %v1057
        %v1059 = vrot.slane %v1007, %v1058
        %v1060 = vlaneseq
        %v1061 = vshrl.u32 %v1060, 7
        %v1062 = vsub.s32 0, %v1061
        %v1063 = vrot.slane %v1008, %v1062
        %v1064 = vlaneseq
        %v1065 = vshrl.u32 %v1064, 7
        %v1066 = vsub.s32 0, %v1065
        %v1067 = vrot.slane %v1009, %v1066
        %v1068 = vlaneseq
        %v1069 = vshrl.u32 %v1068, 7
        %v1070 = vsub.s32 0, %v1069
        %v1071 = vrot.slane %v1010, %v1070
        %v1072 = vlaneseq
        %v1073 = vshrl.u32 %v1072, 7
        %v1074 = vsub.s32 0, %v1073
        %v1075 = vrot.slane %v1011, %v1074
        %v1076 = vlaneseq
        %v1077 = vshrl.u32 %v1076, 7
        %v1078 = vsub.s32 0, %v1077
        %v1079 = vrot.slane %v1012, %v1078
        %v1080 = vlaneseq
        %v1081 = vshrl.u32 %v1080, 7
        %v1082 = vsub.s32 0, %v1081
        %v1083 = vrot.slane %v1013, %v1082
        %v1084 = vlaneseq
        %v1085 = vshrl.u32 %v1084, 7
        %v1086 = vsub.s32 0, %v1085
        %v1087 = vrot.slane %v1014, %v1086
        %v1088 = vlaneseq
        %v1089 = vshrl.u32 %v1088, 7
        %v1090 = vsub.s32 0, %v1089
        %v1091 = vrot.slane %v1015, %v1090
        %v1092 = vlaneseq
        %v1093 = vshrl.u32 %v1092, 7
        %v1094 = vsub.s32 0, %v1093
        %v1095 = vrot.slane %v1016, %v1094
        %v1096 = vlaneseq
        %v1097 = vshrl.u32 %v1096, 7
        %v1098 = vsub.s32 0, %v1097
        %v1099 = vrot.slane %v1017, %v1098
        %v1100 = vlaneseq
        %v1101 = vshrl.u32 %v1100, 7
        %v1102 = vsub.s32 0, %v1101
        %v1103 = vrot.slane %v1018, %v1102
        %v1104 = vlaneseq
        %v1105 = vshrl.u32 %v1104, 7
        %v1106 = vsub.s32 0, %v1105
        %v1107 = vrot.slane %v1019, %v1106
        %v1108 = vlaneseq
        %v1109 = vshrl.u32 %v1108, 7
        %v1110 = vsub.s32 0, %v1109
        %v1111 = vrot.slane %v1020, %v1110
        %v1112 = vlaneseq
        %v1113 = vshrl.u32 %v1112, 7
        %v1114 = vsub.s32 0, %v1113
        %v1115 = vrot.slane %v1021, %v1114
        %v1116 = vlaneseq
        %v1117 = vshrl.u32 %v1116, 7
        %v1118 = vsub.s32 0, %v1117
        %v1119 = vrot.slane %v1022, %v1118
        %v1120 = vlaneseq
        %v1121 = vshrl.u32 %v1120, 7
        %v1122 = vsub.s32 0, %v1121
        %v1123 = vrot.slane %v1023, %v1122
        %v1124 = vlaneseq
        %v1125 = vshrl.u32 %v1124, 7
        %v1126 = vsub.s32 0, %v1125
        %v1127 = vrot.slane %v1024, %v1126
        %v1128 = vlaneseq
        %v1129 = vshrl.u32 %v1128, 7
        %v1130 = vsub.s32 0, %v1129
        %v1131 = vrot.slane %v1025, %v1130
        %v1132 = vlaneseq
        %v1133 = vshrl.u32 %v1132, 7
        %v1134 = vsub.s32 0, %v1133
        %v1135 = vrot.slane %v1026, %v1134
        %v1136 = vlaneseq
        %v1137 = vshrl.u32 %v1136, 7
        %v1138 = vsub.s32 0, %v1137
        %v1139 = vrot.slane %v1027, %v1138
        %v1140 = vlaneseq
        %v1141 = vshrl.u32 %v1140, 7
        %v1142 = vsub.s32 0, %v1141
        %v1143 = vrot.slane %v1028, %v1142
        %v1144 = vlaneseq
        %v1145 = vshrl.u32 %v1144, 7
        %v1146 = vsub.s32 0, %v1145
        %v1147 = vrot.slane %v1029, %v1146
        %v1148 = vlaneseq
        %v1149 = vshrl.u32 %v1148, 7
        %v1150 = vsub.s32 0, %v1149
        %v1151 = vrot.slane %v1030, %v1150
        %v1152 = vlaneseq
        %v1153 = vshrl.u32 %v1152, 7
        %v1154 = vsub.s32 0, %v1153
        %v1155 = vrot.slane %v1031, %v1154
        %v1156 = vlaneseq
        %v1157 = vshrl.u32 %v1156, 7
        %v1158 = vsub.s32 0, %v1157
        %v1159 = vrot.slane %v1032, %v1158
        %v1160 = vlaneseq
        %v1161 = vshrl.u32 %v1160, 7
        %v1162 = vsub.s32 0, %v1161
        %v1163 = vrot.slane %v1033, %v1162
        %v1164 = vlaneseq
        %v1165 = vshrl.u32 %v1164, 7
        %v1166 = vsub.s32 0, %v1165
        %v1167 = vrot.slane %v1034, %v1166
        %v1168 = vlaneseq
        %v1169 = vshrl.u32 %v1168, 7
        %v1170 = vsub.s32 0, %v1169
        %v1171 = vrot.slane %v1035, %v1170
        %v1172 = vmul.f32 %v1042, %v1047
        %v1173 = vmul.f32 %v1042, %v1051
        %v1174 = vmul.f32 %v1042, %v1055
        %v1175 = vmul.f32 %v1042, %v1059
        %v1176 = vmul.f32 %v1042, %v1063
        %v1177 = vmul.f32 %v1042, %v1067
        %v1178 = vmul.f32 %v1042, %v1071
        %v1179 = vmul.f32 %v1042, %v1075
        %v1180 = vmul.f32 %v1042, %v1079
        %v1181 = vmul.f32 %v1042, %v1083
        %v1182 = vmul.f32 %v1042, %v1087
        %v1183 = vmul.f32 %v1042, %v1091
        %v1184 = vmul.f32 %v1042, %v1095
        %v1185 = vmul.f32 %v1042, %v1099
        %v1186 = vmul.f32 %v1042, %v1103
        %v1187 = vmul.f32 %v1042, %v1107
        %v1188 = vmul.f32 %v1042, %v1111
        %v1189 = vmul.f32 %v1042, %v1115
        %v1190 = vmul.f32 %v1042, %v1119
        %v1191 = vmul.f32 %v1042, %v1123
        %v1192 = vmul.f32 %v1042, %v1127
        %v1193 = vmul.f32 %v1042, %v1131
        %v1194 = vmul.f32 %v1042, %v1135
        %v1195 = vmul.f32 %v1042, %v1139
        %v1196 = vmul.f32 %v1042, %v1143
        %v1197 = vmul.f32 %v1042, %v1147
        %v1198 = vmul.f32 %v1042, %v1151
        %v1199 = vmul.f32 %v1042, %v1155
        %v1200 = vmul.f32 %v1042, %v1159
        %v1201 = vmul.f32 %v1042, %v1163
        %v1202 = vmul.f32 %v1042, %v1167
        %v1203 = vmul.f32 %v1042, %v1171
        %1204 = vset.pattern.permute.xlu0 1
        %1205 = vperm.xlu0 %1204, %v1038
        %v1206 = vpop.permute.xlu0 %1205
        %v1208 = vlaneseq
        %v1209 = vshrl.u32 %v1208, 7
        %v1210 = vsub.s32 1, %v1209
        %v1211 = vrot.slane %v1004, %v1210
        %v1212 = vlaneseq
        %v1213 = vshrl.u32 %v1212, 7
        %v1214 = vsub.s32 1, %v1213
        %v1215 = vrot.slane %v1005, %v1214
        %v1216 = vlaneseq
        %v1217 = vshrl.u32 %v1216, 7
        %v1218 = vsub.s32 1, %v1217
        %v1219 = vrot.slane %v1006, %v1218
        %v1220 = vlaneseq
        %v1221 = vshrl.u32 %v1220, 7
        %v1222 = vsub.s32 1, %v1221
        %v1223 = vrot.slane %v1007, %v1222
        %v1224 = vlaneseq
        %v1225 = vshrl.u32 %v1224, 7
        %v1226 = vsub.s32 1, %v1225
        %v1227 = vrot.slane %v1008, %v1226
        %v1228 = vlaneseq
        %v1229 = vshrl.u32 %v1228, 7
        %v1230 = vsub.s32 1, %v1229
        %v1231 = vrot.slane %v1009, %v1230
        %v1232 = vlaneseq
        %v1233 = vshrl.u32 %v1232, 7
        %v1234 = vsub.s32 1, %v1233
        %v1235 = vrot.slane %v1010, %v1234
        %v1236 = vlaneseq
        %v1237 = vshrl.u32 %v1236, 7
        %v1238 = vsub.s32 1, %v1237
        %v1239 = vrot.slane %v1011, %v1238
        %v1240 = vlaneseq
        %v1241 = vshrl.u32 %v1240, 7
        %v1242 = vsub.s32 1, %v1241
        %v1243 = vrot.slane %v1012, %v1242
        %v1244 = vlaneseq
        %v1245 = vshrl.u32 %v1244, 7
        %v1246 = vsub.s32 1, %v1245
        %v1247 = vrot.slane %v1013, %v1246
        %v1248 = vlaneseq
        %v1249 = vshrl.u32 %v1248, 7
        %v1250 = vsub.s32 1, %v1249
        %v1251 = vrot.slane %v1014, %v1250
        %v1252 = vlaneseq
        %v1253 = vshrl.u32 %v1252, 7
        %v1254 = vsub.s32 1, %v1253
        %v1255 = vrot.slane %v1015, %v1254
        %v1256 = vlaneseq
        %v1257 = vshrl.u32 %v1256, 7
        %v1258 = vsub.s32 1, %v1257
        %v1259 = vrot.slane %v1016, %v1258
        %v1260 = vlaneseq
        %v1261 = vshrl.u32 %v1260, 7
        %v1262 = vsub.s32 1, %v1261
        %v1263 = vrot.slane %v1017, %v1262
        %v1264 = vlaneseq
        %v1265 = vshrl.u32 %v1264, 7
        %v1266 = vsub.s32 1, %v1265
        %v1267 = vrot.slane %v1018, %v1266
        %v1268 = vlaneseq
        %v1269 = vshrl.u32 %v1268, 7
        %v1270 = vsub.s32 1, %v1269
        %v1271 = vrot.slane %v1019, %v1270
        %v1272 = vlaneseq
        %v1273 = vshrl.u32 %v1272, 7
        %v1274 = vsub.s32 1, %v1273
        %v1275 = vrot.slane %v1020, %v1274
        %v1276 = vlaneseq
        %v1277 = vshrl.u32 %v1276, 7
        %v1278 = vsub.s32 1, %v1277
        %v1279 = vrot.slane %v1021, %v1278
        %v1280 = vlaneseq
        %v1281 = vshrl.u32 %v1280, 7
        %v1282 = vsub.s32 1, %v1281
        %v1283 = vrot.slane %v1022, %v1282
        %v1284 = vlaneseq
        %v1285 = vshrl.u32 %v1284, 7
        %v1286 = vsub.s32 1, %v1285
        %v1287 = vrot.slane %v1023, %v1286
        %v1288 = vlaneseq
        %v1289 = vshrl.u32 %v1288, 7
        %v1290 = vsub.s32 1, %v1289
        %v1291 = vrot.slane %v1024, %v1290
        %v1292 = vlaneseq
        %v1293 = vshrl.u32 %v1292, 7
        %v1294 = vsub.s32 1, %v1293
        %v1295 = vrot.slane %v1025, %v1294
        %v1296 = vlaneseq
        %v1297 = vshrl.u32 %v1296, 7
        %v1298 = vsub.s32 1, %v1297
        %v1299 = vrot.slane %v1026, %v1298
        %v1300 = vlaneseq
        %v1301 = vshrl.u32 %v1300, 7
        %v1302 = vsub.s32 1, %v1301
        %v1303 = vrot.slane %v1027, %v1302
        %v1304 = vlaneseq
        %v1305 = vshrl.u32 %v1304, 7
        %v1306 = vsub.s32 1, %v1305
        %v1307 = vrot.slane %v1028, %v1306
        %v1308 = vlaneseq
        %v1309 = vshrl.u32 %v1308, 7
        %v1310 = vsub.s32 1, %v1309
        %v1311 = vrot.slane %v1029, %v1310
        %v1312 = vlaneseq
        %v1313 = vshrl.u32 %v1312, 7
        %v1314 = vsub.s32 1, %v1313
        %v1315 = vrot.slane %v1030, %v1314
        %v1316 = vlaneseq
        %v1317 = vshrl.u32 %v1316, 7
        %v1318 = vsub.s32 1, %v1317
        %v1319 = vrot.slane %v1031, %v1318
        %v1320 = vlaneseq
        %v1321 = vshrl.u32 %v1320, 7
        %v1322 = vsub.s32 1, %v1321
        %v1323 = vrot.slane %v1032, %v1322
        %v1324 = vlaneseq
        %v1325 = vshrl.u32 %v1324, 7
        %v1326 = vsub.s32 1, %v1325
        %v1327 = vrot.slane %v1033, %v1326
        %v1328 = vlaneseq
        %v1329 = vshrl.u32 %v1328, 7
        %v1330 = vsub.s32 1, %v1329
        %v1331 = vrot.slane %v1034, %v1330
        %v1332 = vlaneseq
        %v1333 = vshrl.u32 %v1332, 7
        %v1334 = vsub.s32 1, %v1333
        %v1335 = vrot.slane %v1035, %v1334
        %v1336 = vmul.f32 %v1206, %v1211
        %v1337 = vmul.f32 %v1206, %v1215
        %v1338 = vmul.f32 %v1206, %v1219
        %v1339 = vmul.f32 %v1206, %v1223
        %v1340 = vmul.f32 %v1206, %v1227
        %v1341 = vmul.f32 %v1206, %v1231
        %v1342 = vmul.f32 %v1206, %v1235
        %v1343 = vmul.f32 %v1206, %v1239
        %v1344 = vmul.f32 %v1206, %v1243
        %v1345 = vmul.f32 %v1206, %v1247
        %v1346 = vmul.f32 %v1206, %v1251
        %v1347 = vmul.f32 %v1206, %v1255
        %v1348 = vmul.f32 %v1206, %v1259
        %v1349 = vmul.f32 %v1206, %v1263
        %v1350 = vmul.f32 %v1206, %v1267
        %v1351 = vmul.f32 %v1206, %v1271
        %v1352 = vmul.f32 %v1206, %v1275
        %v1353 = vmul.f32 %v1206, %v1279
        %v1354 = vmul.f32 %v1206, %v1283
        %v1355 = vmul.f32 %v1206, %v1287
        %v1356 = vmul.f32 %v1206, %v1291
        %v1357 = vmul.f32 %v1206, %v1295
        %v1358 = vmul.f32 %v1206, %v1299
        %v1359 = vmul.f32 %v1206, %v1303
        %v1360 = vmul.f32 %v1206, %v1307
        %v1361 = vmul.f32 %v1206, %v1311
        %v1362 = vmul.f32 %v1206, %v1315
        %v1363 = vmul.f32 %v1206, %v1319
        %v1364 = vmul.f32 %v1206, %v1323
        %v1365 = vmul.f32 %v1206, %v1327
        %v1366 = vmul.f32 %v1206, %v1331
        %v1367 = vmul.f32 %v1206, %v1335
        %v1368 = vadd.f32 %v1172, %v1336
        %v1369 = vadd.f32 %v1173, %v1337
        %v1370 = vadd.f32 %v1174, %v1338
        %v1371 = vadd.f32 %v1175, %v1339
        %v1372 = vadd.f32 %v1176, %v1340
        %v1373 = vadd.f32 %v1177, %v1341
        %v1374 = vadd.f32 %v1178, %v1342
        %v1375 = vadd.f32 %v1179, %v1343
        %v1376 = vadd.f32 %v1180, %v1344
        %v1377 = vadd.f32 %v1181, %v1345
        %v1378 = vadd.f32 %v1182, %v1346
        %v1379 = vadd.f32 %v1183, %v1347
        %v1380 = vadd.f32 %v1184, %v1348
        %v1381 = vadd.f32 %v1185, %v1349
        %v1382 = vadd.f32 %v1186, %v1350
        %v1383 = vadd.f32 %v1187, %v1351
        %v1384 = vadd.f32 %v1188, %v1352
        %v1385 = vadd.f32 %v1189, %v1353
        %v1386 = vadd.f32 %v1190, %v1354
        %v1387 = vadd.f32 %v1191, %v1355
        %v1388 = vadd.f32 %v1192, %v1356
        %v1389 = vadd.f32 %v1193, %v1357
        %v1390 = vadd.f32 %v1194, %v1358
        %v1391 = vadd.f32 %v1195, %v1359
        %v1392 = vadd.f32 %v1196, %v1360
        %v1393 = vadd.f32 %v1197, %v1361
        %v1394 = vadd.f32 %v1198, %v1362
        %v1395 = vadd.f32 %v1199, %v1363
        %v1396 = vadd.f32 %v1200, %v1364
        %v1397 = vadd.f32 %v1201, %v1365
        %v1398 = vadd.f32 %v1202, %v1366
        %v1399 = vadd.f32 %v1203, %v1367
        %1400 = vset.pattern.permute.xlu0 2
        %1401 = vperm.xlu0 %1400, %v1038
        %v1402 = vpop.permute.xlu0 %1401
        %v1404 = vlaneseq
        %v1405 = vshrl.u32 %v1404, 7
        %v1406 = vsub.s32 2, %v1405
        %v1407 = vrot.slane %v1004, %v1406
        %v1408 = vlaneseq
        %v1409 = vshrl.u32 %v1408, 7
        %v1410 = vsub.s32 2, %v1409
        %v1411 = vrot.slane %v1005, %v1410
        %v1412 = vlaneseq
        %v1413 = vshrl.u32 %v1412, 7
        %v1414 = vsub.s32 2, %v1413
        %v1415 = vrot.slane %v1006, %v1414
        %v1416 = vlaneseq
        %v1417 = vshrl.u32 %v1416, 7
        %v1418 = vsub.s32 2, %v1417
        %v1419 = vrot.slane %v1007, %v1418
        %v1420 = vlaneseq
        %v1421 = vshrl.u32 %v1420, 7
        %v1422 = vsub.s32 2, %v1421
        %v1423 = vrot.slane %v1008, %v1422
        %v1424 = vlaneseq
        %v1425 = vshrl.u32 %v1424, 7
        %v1426 = vsub.s32 2, %v1425
        %v1427 = vrot.slane %v1009, %v1426
        %v1428 = vlaneseq
        %v1429 = vshrl.u32 %v1428, 7
        %v1430 = vsub.s32 2, %v1429
        %v1431 = vrot.slane %v1010, %v1430
        %v1432 = vlaneseq
        %v1433 = vshrl.u32 %v1432, 7
        %v1434 = vsub.s32 2, %v1433
        %v1435 = vrot.slane %v1011, %v1434
        %v1436 = vlaneseq
        %v1437 = vshrl.u32 %v1436, 7
        %v1438 = vsub.s32 2, %v1437
        %v1439 = vrot.slane %v1012, %v1438
        %v1440 = vlaneseq
        %v1441 = vshrl.u32 %v1440, 7
        %v1442 = vsub.s32 2, %v1441
        %v1443 = vrot.slane %v1013, %v1442
        %v1444 = vlaneseq
        %v1445 = vshrl.u32 %v1444, 7
        %v1446 = vsub.s32 2, %v1445
        %v1447 = vrot.slane %v1014, %v1446
        %v1448 = vlaneseq
        %v1449 = vshrl.u32 %v1448, 7
        %v1450 = vsub.s32 2, %v1449
        %v1451 = vrot.slane %v1015, %v1450
        %v1452 = vlaneseq
        %v1453 = vshrl.u32 %v1452, 7
        %v1454 = vsub.s32 2, %v1453
        %v1455 = vrot.slane %v1016, %v1454
        %v1456 = vlaneseq
        %v1457 = vshrl.u32 %v1456, 7
        %v1458 = vsub.s32 2, %v1457
        %v1459 = vrot.slane %v1017, %v1458
        %v1460 = vlaneseq
        %v1461 = vshrl.u32 %v1460, 7
        %v1462 = vsub.s32 2, %v1461
        %v1463 = vrot.slane %v1018, %v1462
        %v1464 = vlaneseq
        %v1465 = vshrl.u32 %v1464, 7
        %v1466 = vsub.s32 2, %v1465
        %v1467 = vrot.slane %v1019, %v1466
        %v1468 = vlaneseq
        %v1469 = vshrl.u32 %v1468, 7
        %v1470 = vsub.s32 2, %v1469
        %v1471 = vrot.slane %v1020, %v1470
        %v1472 = vlaneseq
        %v1473 = vshrl.u32 %v1472, 7
        %v1474 = vsub.s32 2, %v1473
        %v1475 = vrot.slane %v1021, %v1474
        %v1476 = vlaneseq
        %v1477 = vshrl.u32 %v1476, 7
        %v1478 = vsub.s32 2, %v1477
        %v1479 = vrot.slane %v1022, %v1478
        %v1480 = vlaneseq
        %v1481 = vshrl.u32 %v1480, 7
        %v1482 = vsub.s32 2, %v1481
        %v1483 = vrot.slane %v1023, %v1482
        %v1484 = vlaneseq
        %v1485 = vshrl.u32 %v1484, 7
        %v1486 = vsub.s32 2, %v1485
        %v1487 = vrot.slane %v1024, %v1486
        %v1488 = vlaneseq
        %v1489 = vshrl.u32 %v1488, 7
        %v1490 = vsub.s32 2, %v1489
        %v1491 = vrot.slane %v1025, %v1490
        %v1492 = vlaneseq
        %v1493 = vshrl.u32 %v1492, 7
        %v1494 = vsub.s32 2, %v1493
        %v1495 = vrot.slane %v1026, %v1494
        %v1496 = vlaneseq
        %v1497 = vshrl.u32 %v1496, 7
        %v1498 = vsub.s32 2, %v1497
        %v1499 = vrot.slane %v1027, %v1498
        %v1500 = vlaneseq
        %v1501 = vshrl.u32 %v1500, 7
        %v1502 = vsub.s32 2, %v1501
        %v1503 = vrot.slane %v1028, %v1502
        %v1504 = vlaneseq
        %v1505 = vshrl.u32 %v1504, 7
        %v1506 = vsub.s32 2, %v1505
        %v1507 = vrot.slane %v1029, %v1506
        %v1508 = vlaneseq
        %v1509 = vshrl.u32 %v1508, 7
        %v1510 = vsub.s32 2, %v1509
        %v1511 = vrot.slane %v1030, %v1510
        %v1512 = vlaneseq
        %v1513 = vshrl.u32 %v1512, 7
        %v1514 = vsub.s32 2, %v1513
        %v1515 = vrot.slane %v1031, %v1514
        %v1516 = vlaneseq
        %v1517 = vshrl.u32 %v1516, 7
        %v1518 = vsub.s32 2, %v1517
        %v1519 = vrot.slane %v1032, %v1518
        %v1520 = vlaneseq
        %v1521 = vshrl.u32 %v1520, 7
        %v1522 = vsub.s32 2, %v1521
        %v1523 = vrot.slane %v1033, %v1522
        %v1524 = vlaneseq
        %v1525 = vshrl.u32 %v1524, 7
        %v1526 = vsub.s32 2, %v1525
        %v1527 = vrot.slane %v1034, %v1526
        %v1528 = vlaneseq
        %v1529 = vshrl.u32 %v1528, 7
        %v1530 = vsub.s32 2, %v1529
        %v1531 = vrot.slane %v1035, %v1530
        %v1532 = vmul.f32 %v1402, %v1407
        %v1533 = vmul.f32 %v1402, %v1411
        %v1534 = vmul.f32 %v1402, %v1415
        %v1535 = vmul.f32 %v1402, %v1419
        %v1536 = vmul.f32 %v1402, %v1423
        %v1537 = vmul.f32 %v1402, %v1427
        %v1538 = vmul.f32 %v1402, %v1431
        %v1539 = vmul.f32 %v1402, %v1435
        %v1540 = vmul.f32 %v1402, %v1439
        %v1541 = vmul.f32 %v1402, %v1443
        %v1542 = vmul.f32 %v1402, %v1447
        %v1543 = vmul.f32 %v1402, %v1451
        %v1544 = vmul.f32 %v1402, %v1455
        %v1545 = vmul.f32 %v1402, %v1459
        %v1546 = vmul.f32 %v1402, %v1463
        %v1547 = vmul.f32 %v1402, %v1467
        %v1548 = vmul.f32 %v1402, %v1471
        %v1549 = vmul.f32 %v1402, %v1475
        %v1550 = vmul.f32 %v1402, %v1479
        %v1551 = vmul.f32 %v1402, %v1483
        %v1552 = vmul.f32 %v1402, %v1487
        %v1553 = vmul.f32 %v1402, %v1491
        %v1554 = vmul.f32 %v1402, %v1495
        %v1555 = vmul.f32 %v1402, %v1499
        %v1556 = vmul.f32 %v1402, %v1503
        %v1557 = vmul.f32 %v1402, %v1507
        %v1558 = vmul.f32 %v1402, %v1511
        %v1559 = vmul.f32 %v1402, %v1515
        %v1560 = vmul.f32 %v1402, %v1519
        %v1561 = vmul.f32 %v1402, %v1523
        %v1562 = vmul.f32 %v1402, %v1527
        %v1563 = vmul.f32 %v1402, %v1531
        %v1564 = vadd.f32 %v1368, %v1532
        %v1565 = vadd.f32 %v1369, %v1533
        %v1566 = vadd.f32 %v1370, %v1534
        %v1567 = vadd.f32 %v1371, %v1535
        %v1568 = vadd.f32 %v1372, %v1536
        %v1569 = vadd.f32 %v1373, %v1537
        %v1570 = vadd.f32 %v1374, %v1538
        %v1571 = vadd.f32 %v1375, %v1539
        %v1572 = vadd.f32 %v1376, %v1540
        %v1573 = vadd.f32 %v1377, %v1541
        %v1574 = vadd.f32 %v1378, %v1542
        %v1575 = vadd.f32 %v1379, %v1543
        %v1576 = vadd.f32 %v1380, %v1544
        %v1577 = vadd.f32 %v1381, %v1545
        %v1578 = vadd.f32 %v1382, %v1546
        %v1579 = vadd.f32 %v1383, %v1547
        %v1580 = vadd.f32 %v1384, %v1548
        %v1581 = vadd.f32 %v1385, %v1549
        %v1582 = vadd.f32 %v1386, %v1550
        %v1583 = vadd.f32 %v1387, %v1551
        %v1584 = vadd.f32 %v1388, %v1552
        %v1585 = vadd.f32 %v1389, %v1553
        %v1586 = vadd.f32 %v1390, %v1554
        %v1587 = vadd.f32 %v1391, %v1555
        %v1588 = vadd.f32 %v1392, %v1556
        %v1589 = vadd.f32 %v1393, %v1557
        %v1590 = vadd.f32 %v1394, %v1558
        %v1591 = vadd.f32 %v1395, %v1559
        %v1592 = vadd.f32 %v1396, %v1560
        %v1593 = vadd.f32 %v1397, %v1561
        %v1594 = vadd.f32 %v1398, %v1562
        %v1595 = vadd.f32 %v1399, %v1563
        %1596 = vset.pattern.permute.xlu0 3
        %1597 = vperm.xlu0 %1596, %v1038
        %v1598 = vpop.permute.xlu0 %1597
        %v1600 = vlaneseq
        %v1601 = vshrl.u32 %v1600, 7
        %v1602 = vsub.s32 3, %v1601
        %v1603 = vrot.slane %v1004, %v1602
        %v1604 = vlaneseq
        %v1605 = vshrl.u32 %v1604, 7
        %v1606 = vsub.s32 3, %v1605
        %v1607 = vrot.slane %v1005, %v1606
        %v1608 = vlaneseq
        %v1609 = vshrl.u32 %v1608, 7
        %v1610 = vsub.s32 3, %v1609
        %v1611 = vrot.slane %v1006, %v1610
        %v1612 = vlaneseq
        %v1613 = vshrl.u32 %v1612, 7
        %v1614 = vsub.s32 3, %v1613
        %v1615 = vrot.slane %v1007, %v1614
        %v1616 = vlaneseq
        %v1617 = vshrl.u32 %v1616, 7
        %v1618 = vsub.s32 3, %v1617
        %v1619 = vrot.slane %v1008, %v1618
        %v1620 = vlaneseq
        %v1621 = vshrl.u32 %v1620, 7
        %v1622 = vsub.s32 3, %v1621
        %v1623 = vrot.slane %v1009, %v1622
        %v1624 = vlaneseq
        %v1625 = vshrl.u32 %v1624, 7
        %v1626 = vsub.s32 3, %v1625
        %v1627 = vrot.slane %v1010, %v1626
        %v1628 = vlaneseq
        %v1629 = vshrl.u32 %v1628, 7
        %v1630 = vsub.s32 3, %v1629
        %v1631 = vrot.slane %v1011, %v1630
        %v1632 = vlaneseq
        %v1633 = vshrl.u32 %v1632, 7
        %v1634 = vsub.s32 3, %v1633
        %v1635 = vrot.slane %v1012, %v1634
        %v1636 = vlaneseq
        %v1637 = vshrl.u32 %v1636, 7
        %v1638 = vsub.s32 3, %v1637
        %v1639 = vrot.slane %v1013, %v1638
        %v1640 = vlaneseq
        %v1641 = vshrl.u32 %v1640, 7
        %v1642 = vsub.s32 3, %v1641
        %v1643 = vrot.slane %v1014, %v1642
        %v1644 = vlaneseq
        %v1645 = vshrl.u32 %v1644, 7
        %v1646 = vsub.s32 3, %v1645
        %v1647 = vrot.slane %v1015, %v1646
        %v1648 = vlaneseq
        %v1649 = vshrl.u32 %v1648, 7
        %v1650 = vsub.s32 3, %v1649
        %v1651 = vrot.slane %v1016, %v1650
        %v1652 = vlaneseq
        %v1653 = vshrl.u32 %v1652, 7
        %v1654 = vsub.s32 3, %v1653
        %v1655 = vrot.slane %v1017, %v1654
        %v1656 = vlaneseq
        %v1657 = vshrl.u32 %v1656, 7
        %v1658 = vsub.s32 3, %v1657
        %v1659 = vrot.slane %v1018, %v1658
        %v1660 = vlaneseq
        %v1661 = vshrl.u32 %v1660, 7
        %v1662 = vsub.s32 3, %v1661
        %v1663 = vrot.slane %v1019, %v1662
        %v1664 = vlaneseq
        %v1665 = vshrl.u32 %v1664, 7
        %v1666 = vsub.s32 3, %v1665
        %v1667 = vrot.slane %v1020, %v1666
        %v1668 = vlaneseq
        %v1669 = vshrl.u32 %v1668, 7
        %v1670 = vsub.s32 3, %v1669
        %v1671 = vrot.slane %v1021, %v1670
        %v1672 = vlaneseq
        %v1673 = vshrl.u32 %v1672, 7
        %v1674 = vsub.s32 3, %v1673
        %v1675 = vrot.slane %v1022, %v1674
        %v1676 = vlaneseq
        %v1677 = vshrl.u32 %v1676, 7
        %v1678 = vsub.s32 3, %v1677
        %v1679 = vrot.slane %v1023, %v1678
        %v1680 = vlaneseq
        %v1681 = vshrl.u32 %v1680, 7
        %v1682 = vsub.s32 3, %v1681
        %v1683 = vrot.slane %v1024, %v1682
        %v1684 = vlaneseq
        %v1685 = vshrl.u32 %v1684, 7
        %v1686 = vsub.s32 3, %v1685
        %v1687 = vrot.slane %v1025, %v1686
        %v1688 = vlaneseq
        %v1689 = vshrl.u32 %v1688, 7
        %v1690 = vsub.s32 3, %v1689
        %v1691 = vrot.slane %v1026, %v1690
        %v1692 = vlaneseq
        %v1693 = vshrl.u32 %v1692, 7
        %v1694 = vsub.s32 3, %v1693
        %v1695 = vrot.slane %v1027, %v1694
        %v1696 = vlaneseq
        %v1697 = vshrl.u32 %v1696, 7
        %v1698 = vsub.s32 3, %v1697
        %v1699 = vrot.slane %v1028, %v1698
        %v1700 = vlaneseq
        %v1701 = vshrl.u32 %v1700, 7
        %v1702 = vsub.s32 3, %v1701
        %v1703 = vrot.slane %v1029, %v1702
        %v1704 = vlaneseq
        %v1705 = vshrl.u32 %v1704, 7
        %v1706 = vsub.s32 3, %v1705
        %v1707 = vrot.slane %v1030, %v1706
        %v1708 = vlaneseq
        %v1709 = vshrl.u32 %v1708, 7
        %v1710 = vsub.s32 3, %v1709
        %v1711 = vrot.slane %v1031, %v1710
        %v1712 = vlaneseq
        %v1713 = vshrl.u32 %v1712, 7
        %v1714 = vsub.s32 3, %v1713
        %v1715 = vrot.slane %v1032, %v1714
        %v1716 = vlaneseq
        %v1717 = vshrl.u32 %v1716, 7
        %v1718 = vsub.s32 3, %v1717
        %v1719 = vrot.slane %v1033, %v1718
        %v1720 = vlaneseq
        %v1721 = vshrl.u32 %v1720, 7
        %v1722 = vsub.s32 3, %v1721
        %v1723 = vrot.slane %v1034, %v1722
        %v1724 = vlaneseq
        %v1725 = vshrl.u32 %v1724, 7
        %v1726 = vsub.s32 3, %v1725
        %v1727 = vrot.slane %v1035, %v1726
        %v1728 = vmul.f32 %v1598, %v1603
        %v1729 = vmul.f32 %v1598, %v1607
        %v1730 = vmul.f32 %v1598, %v1611
        %v1731 = vmul.f32 %v1598, %v1615
        %v1732 = vmul.f32 %v1598, %v1619
        %v1733 = vmul.f32 %v1598, %v1623
        %v1734 = vmul.f32 %v1598, %v1627
        %v1735 = vmul.f32 %v1598, %v1631
        %v1736 = vmul.f32 %v1598, %v1635
        %v1737 = vmul.f32 %v1598, %v1639
        %v1738 = vmul.f32 %v1598, %v1643
        %v1739 = vmul.f32 %v1598, %v1647
        %v1740 = vmul.f32 %v1598, %v1651
        %v1741 = vmul.f32 %v1598, %v1655
        %v1742 = vmul.f32 %v1598, %v1659
        %v1743 = vmul.f32 %v1598, %v1663
        %v1744 = vmul.f32 %v1598, %v1667
        %v1745 = vmul.f32 %v1598, %v1671
        %v1746 = vmul.f32 %v1598, %v1675
        %v1747 = vmul.f32 %v1598, %v1679
        %v1748 = vmul.f32 %v1598, %v1683
        %v1749 = vmul.f32 %v1598, %v1687
        %v1750 = vmul.f32 %v1598, %v1691
        %v1751 = vmul.f32 %v1598, %v1695
        %v1752 = vmul.f32 %v1598, %v1699
        %v1753 = vmul.f32 %v1598, %v1703
        %v1754 = vmul.f32 %v1598, %v1707
        %v1755 = vmul.f32 %v1598, %v1711
        %v1756 = vmul.f32 %v1598, %v1715
        %v1757 = vmul.f32 %v1598, %v1719
        %v1758 = vmul.f32 %v1598, %v1723
        %v1759 = vmul.f32 %v1598, %v1727
        %v1760 = vadd.f32 %v1564, %v1728
        %v1761 = vadd.f32 %v1565, %v1729
        %v1762 = vadd.f32 %v1566, %v1730
        %v1763 = vadd.f32 %v1567, %v1731
        %v1764 = vadd.f32 %v1568, %v1732
        %v1765 = vadd.f32 %v1569, %v1733
        %v1766 = vadd.f32 %v1570, %v1734
        %v1767 = vadd.f32 %v1571, %v1735
        %v1768 = vadd.f32 %v1572, %v1736
        %v1769 = vadd.f32 %v1573, %v1737
        %v1770 = vadd.f32 %v1574, %v1738
        %v1771 = vadd.f32 %v1575, %v1739
        %v1772 = vadd.f32 %v1576, %v1740
        %v1773 = vadd.f32 %v1577, %v1741
        %v1774 = vadd.f32 %v1578, %v1742
        %v1775 = vadd.f32 %v1579, %v1743
        %v1776 = vadd.f32 %v1580, %v1744
        %v1777 = vadd.f32 %v1581, %v1745
        %v1778 = vadd.f32 %v1582, %v1746
        %v1779 = vadd.f32 %v1583, %v1747
        %v1780 = vadd.f32 %v1584, %v1748
        %v1781 = vadd.f32 %v1585, %v1749
        %v1782 = vadd.f32 %v1586, %v1750
        %v1783 = vadd.f32 %v1587, %v1751
        %v1784 = vadd.f32 %v1588, %v1752
        %v1785 = vadd.f32 %v1589, %v1753
        %v1786 = vadd.f32 %v1590, %v1754
        %v1787 = vadd.f32 %v1591, %v1755
        %v1788 = vadd.f32 %v1592, %v1756
        %v1789 = vadd.f32 %v1593, %v1757
        %v1790 = vadd.f32 %v1594, %v1758
        %v1791 = vadd.f32 %v1595, %v1759
        %1792 = vset.pattern.permute.xlu0 4
        %1793 = vperm.xlu0 %1792, %v1038
        %v1794 = vpop.permute.xlu0 %1793
        %v1796 = vlaneseq
        %v1797 = vshrl.u32 %v1796, 7
        %v1798 = vsub.s32 4, %v1797
        %v1799 = vrot.slane %v1004, %v1798
        %v1800 = vlaneseq
        %v1801 = vshrl.u32 %v1800, 7
        %v1802 = vsub.s32 4, %v1801
        %v1803 = vrot.slane %v1005, %v1802
        %v1804 = vlaneseq
        %v1805 = vshrl.u32 %v1804, 7
        %v1806 = vsub.s32 4, %v1805
        %v1807 = vrot.slane %v1006, %v1806
        %v1808 = vlaneseq
        %v1809 = vshrl.u32 %v1808, 7
        %v1810 = vsub.s32 4, %v1809
        %v1811 = vrot.slane %v1007, %v1810
        %v1812 = vlaneseq
        %v1813 = vshrl.u32 %v1812, 7
        %v1814 = vsub.s32 4, %v1813
        %v1815 = vrot.slane %v1008, %v1814
        %v1816 = vlaneseq
        %v1817 = vshrl.u32 %v1816, 7
        %v1818 = vsub.s32 4, %v1817
        %v1819 = vrot.slane %v1009, %v1818
        %v1820 = vlaneseq
        %v1821 = vshrl.u32 %v1820, 7
        %v1822 = vsub.s32 4, %v1821
        %v1823 = vrot.slane %v1010, %v1822
        %v1824 = vlaneseq
        %v1825 = vshrl.u32 %v1824, 7
        %v1826 = vsub.s32 4, %v1825
        %v1827 = vrot.slane %v1011, %v1826
        %v1828 = vlaneseq
        %v1829 = vshrl.u32 %v1828, 7
        %v1830 = vsub.s32 4, %v1829
        %v1831 = vrot.slane %v1012, %v1830
        %v1832 = vlaneseq
        %v1833 = vshrl.u32 %v1832, 7
        %v1834 = vsub.s32 4, %v1833
        %v1835 = vrot.slane %v1013, %v1834
        %v1836 = vlaneseq
        %v1837 = vshrl.u32 %v1836, 7
        %v1838 = vsub.s32 4, %v1837
        %v1839 = vrot.slane %v1014, %v1838
        %v1840 = vlaneseq
        %v1841 = vshrl.u32 %v1840, 7
        %v1842 = vsub.s32 4, %v1841
        %v1843 = vrot.slane %v1015, %v1842
        %v1844 = vlaneseq
        %v1845 = vshrl.u32 %v1844, 7
        %v1846 = vsub.s32 4, %v1845
        %v1847 = vrot.slane %v1016, %v1846
        %v1848 = vlaneseq
        %v1849 = vshrl.u32 %v1848, 7
        %v1850 = vsub.s32 4, %v1849
        %v1851 = vrot.slane %v1017, %v1850
        %v1852 = vlaneseq
        %v1853 = vshrl.u32 %v1852, 7
        %v1854 = vsub.s32 4, %v1853
        %v1855 = vrot.slane %v1018, %v1854
        %v1856 = vlaneseq
        %v1857 = vshrl.u32 %v1856, 7
        %v1858 = vsub.s32 4, %v1857
        %v1859 = vrot.slane %v1019, %v1858
        %v1860 = vlaneseq
        %v1861 = vshrl.u32 %v1860, 7
        %v1862 = vsub.s32 4, %v1861
        %v1863 = vrot.slane %v1020, %v1862
        %v1864 = vlaneseq
        %v1865 = vshrl.u32 %v1864, 7
        %v1866 = vsub.s32 4, %v1865
        %v1867 = vrot.slane %v1021, %v1866
        %v1868 = vlaneseq
        %v1869 = vshrl.u32 %v1868, 7
        %v1870 = vsub.s32 4, %v1869
        %v1871 = vrot.slane %v1022, %v1870
        %v1872 = vlaneseq
        %v1873 = vshrl.u32 %v1872, 7
        %v1874 = vsub.s32 4, %v1873
        %v1875 = vrot.slane %v1023, %v1874
        %v1876 = vlaneseq
        %v1877 = vshrl.u32 %v1876, 7
        %v1878 = vsub.s32 4, %v1877
        %v1879 = vrot.slane %v1024, %v1878
        %v1880 = vlaneseq
        %v1881 = vshrl.u32 %v1880, 7
        %v1882 = vsub.s32 4, %v1881
        %v1883 = vrot.slane %v1025, %v1882
        %v1884 = vlaneseq
        %v1885 = vshrl.u32 %v1884, 7
        %v1886 = vsub.s32 4, %v1885
        %v1887 = vrot.slane %v1026, %v1886
        %v1888 = vlaneseq
        %v1889 = vshrl.u32 %v1888, 7
        %v1890 = vsub.s32 4, %v1889
        %v1891 = vrot.slane %v1027, %v1890
        %v1892 = vlaneseq
        %v1893 = vshrl.u32 %v1892, 7
        %v1894 = vsub.s32 4, %v1893
        %v1895 = vrot.slane %v1028, %v1894
        %v1896 = vlaneseq
        %v1897 = vshrl.u32 %v1896, 7
        %v1898 = vsub.s32 4, %v1897
        %v1899 = vrot.slane %v1029, %v1898
        %v1900 = vlaneseq
        %v1901 = vshrl.u32 %v1900, 7
        %v1902 = vsub.s32 4, %v1901
        %v1903 = vrot.slane %v1030, %v1902
        %v1904 = vlaneseq
        %v1905 = vshrl.u32 %v1904, 7
        %v1906 = vsub.s32 4, %v1905
        %v1907 = vrot.slane %v1031, %v1906
        %v1908 = vlaneseq
        %v1909 = vshrl.u32 %v1908, 7
        %v1910 = vsub.s32 4, %v1909
        %v1911 = vrot.slane %v1032, %v1910
        %v1912 = vlaneseq
        %v1913 = vshrl.u32 %v1912, 7
        %v1914 = vsub.s32 4, %v1913
        %v1915 = vrot.slane %v1033, %v1914
        %v1916 = vlaneseq
        %v1917 = vshrl.u32 %v1916, 7
        %v1918 = vsub.s32 4, %v1917
        %v1919 = vrot.slane %v1034, %v1918
        %v1920 = vlaneseq
        %v1921 = vshrl.u32 %v1920, 7
        %v1922 = vsub.s32 4, %v1921
        %v1923 = vrot.slane %v1035, %v1922
        %v1924 = vmul.f32 %v1794, %v1799
        %v1925 = vmul.f32 %v1794, %v1803
        %v1926 = vmul.f32 %v1794, %v1807
        %v1927 = vmul.f32 %v1794, %v1811
        %v1928 = vmul.f32 %v1794, %v1815
        %v1929 = vmul.f32 %v1794, %v1819
        %v1930 = vmul.f32 %v1794, %v1823
        %v1931 = vmul.f32 %v1794, %v1827
        %v1932 = vmul.f32 %v1794, %v1831
        %v1933 = vmul.f32 %v1794, %v1835
        %v1934 = vmul.f32 %v1794, %v1839
        %v1935 = vmul.f32 %v1794, %v1843
        %v1936 = vmul.f32 %v1794, %v1847
        %v1937 = vmul.f32 %v1794, %v1851
        %v1938 = vmul.f32 %v1794, %v1855
        %v1939 = vmul.f32 %v1794, %v1859
        %v1940 = vmul.f32 %v1794, %v1863
        %v1941 = vmul.f32 %v1794, %v1867
        %v1942 = vmul.f32 %v1794, %v1871
        %v1943 = vmul.f32 %v1794, %v1875
        %v1944 = vmul.f32 %v1794, %v1879
        %v1945 = vmul.f32 %v1794, %v1883
        %v1946 = vmul.f32 %v1794, %v1887
        %v1947 = vmul.f32 %v1794, %v1891
        %v1948 = vmul.f32 %v1794, %v1895
        %v1949 = vmul.f32 %v1794, %v1899
        %v1950 = vmul.f32 %v1794, %v1903
        %v1951 = vmul.f32 %v1794, %v1907
        %v1952 = vmul.f32 %v1794, %v1911
        %v1953 = vmul.f32 %v1794, %v1915
        %v1954 = vmul.f32 %v1794, %v1919
        %v1955 = vmul.f32 %v1794, %v1923
        %v1956 = vadd.f32 %v1760, %v1924
        %v1957 = vadd.f32 %v1761, %v1925
        %v1958 = vadd.f32 %v1762, %v1926
        %v1959 = vadd.f32 %v1763, %v1927
        %v1960 = vadd.f32 %v1764, %v1928
        %v1961 = vadd.f32 %v1765, %v1929
        %v1962 = vadd.f32 %v1766, %v1930
        %v1963 = vadd.f32 %v1767, %v1931
        %v1964 = vadd.f32 %v1768, %v1932
        %v1965 = vadd.f32 %v1769, %v1933
        %v1966 = vadd.f32 %v1770, %v1934
        %v1967 = vadd.f32 %v1771, %v1935
        %v1968 = vadd.f32 %v1772, %v1936
        %v1969 = vadd.f32 %v1773, %v1937
        %v1970 = vadd.f32 %v1774, %v1938
        %v1971 = vadd.f32 %v1775, %v1939
        %v1972 = vadd.f32 %v1776, %v1940
        %v1973 = vadd.f32 %v1777, %v1941
        %v1974 = vadd.f32 %v1778, %v1942
        %v1975 = vadd.f32 %v1779, %v1943
        %v1976 = vadd.f32 %v1780, %v1944
        %v1977 = vadd.f32 %v1781, %v1945
        %v1978 = vadd.f32 %v1782, %v1946
        %v1979 = vadd.f32 %v1783, %v1947
        %v1980 = vadd.f32 %v1784, %v1948
        %v1981 = vadd.f32 %v1785, %v1949
        %v1982 = vadd.f32 %v1786, %v1950
        %v1983 = vadd.f32 %v1787, %v1951
        %v1984 = vadd.f32 %v1788, %v1952
        %v1985 = vadd.f32 %v1789, %v1953
        %v1986 = vadd.f32 %v1790, %v1954
        %v1987 = vadd.f32 %v1791, %v1955
        %1988 = vset.pattern.permute.xlu0 5
        %1989 = vperm.xlu0 %1988, %v1038
        %v1990 = vpop.permute.xlu0 %1989
        %v1992 = vlaneseq
        %v1993 = vshrl.u32 %v1992, 7
        %v1994 = vsub.s32 5, %v1993
        %v1995 = vrot.slane %v1004, %v1994
        %v1996 = vlaneseq
        %v1997 = vshrl.u32 %v1996, 7
        %v1998 = vsub.s32 5, %v1997
        %v1999 = vrot.slane %v1005, %v1998
        %v2000 = vlaneseq
        %v2001 = vshrl.u32 %v2000, 7
        %v2002 = vsub.s32 5, %v2001
        %v2003 = vrot.slane %v1006, %v2002
        %v2004 = vlaneseq
        %v2005 = vshrl.u32 %v2004, 7
        %v2006 = vsub.s32 5, %v2005
        %v2007 = vrot.slane %v1007, %v2006
        %v2008 = vlaneseq
        %v2009 = vshrl.u32 %v2008, 7
        %v2010 = vsub.s32 5, %v2009
        %v2011 = vrot.slane %v1008, %v2010
        %v2012 = vlaneseq
        %v2013 = vshrl.u32 %v2012, 7
        %v2014 = vsub.s32 5, %v2013
        %v2015 = vrot.slane %v1009, %v2014
        %v2016 = vlaneseq
        %v2017 = vshrl.u32 %v2016, 7
        %v2018 = vsub.s32 5, %v2017
        %v2019 = vrot.slane %v1010, %v2018
        %v2020 = vlaneseq
        %v2021 = vshrl.u32 %v2020, 7
        %v2022 = vsub.s32 5, %v2021
        %v2023 = vrot.slane %v1011, %v2022
        %v2024 = vlaneseq
        %v2025 = vshrl.u32 %v2024, 7
        %v2026 = vsub.s32 5, %v2025
        %v2027 = vrot.slane %v1012, %v2026
        %v2028 = vlaneseq
        %v2029 = vshrl.u32 %v2028, 7
        %v2030 = vsub.s32 5, %v2029
        %v2031 = vrot.slane %v1013, %v2030
        %v2032 = vlaneseq
        %v2033 = vshrl.u32 %v2032, 7
        %v2034 = vsub.s32 5, %v2033
        %v2035 = vrot.slane %v1014, %v2034
        %v2036 = vlaneseq
        %v2037 = vshrl.u32 %v2036, 7
        %v2038 = vsub.s32 5, %v2037
        %v2039 = vrot.slane %v1015, %v2038
        %v2040 = vlaneseq
        %v2041 = vshrl.u32 %v2040, 7
        %v2042 = vsub.s32 5, %v2041
        %v2043 = vrot.slane %v1016, %v2042
        %v2044 = vlaneseq
        %v2045 = vshrl.u32 %v2044, 7
        %v2046 = vsub.s32 5, %v2045
        %v2047 = vrot.slane %v1017, %v2046
        %v2048 = vlaneseq
        %v2049 = vshrl.u32 %v2048, 7
        %v2050 = vsub.s32 5, %v2049
        %v2051 = vrot.slane %v1018, %v2050
        %v2052 = vlaneseq
        %v2053 = vshrl.u32 %v2052, 7
        %v2054 = vsub.s32 5, %v2053
        %v2055 = vrot.slane %v1019, %v2054
        %v2056 = vlaneseq
        %v2057 = vshrl.u32 %v2056, 7
        %v2058 = vsub.s32 5, %v2057
        %v2059 = vrot.slane %v1020, %v2058
        %v2060 = vlaneseq
        %v2061 = vshrl.u32 %v2060, 7
        %v2062 = vsub.s32 5, %v2061
        %v2063 = vrot.slane %v1021, %v2062
        %v2064 = vlaneseq
        %v2065 = vshrl.u32 %v2064, 7
        %v2066 = vsub.s32 5, %v2065
        %v2067 = vrot.slane %v1022, %v2066
        %v2068 = vlaneseq
        %v2069 = vshrl.u32 %v2068, 7
        %v2070 = vsub.s32 5, %v2069
        %v2071 = vrot.slane %v1023, %v2070
        %v2072 = vlaneseq
        %v2073 = vshrl.u32 %v2072, 7
        %v2074 = vsub.s32 5, %v2073
        %v2075 = vrot.slane %v1024, %v2074
        %v2076 = vlaneseq
        %v2077 = vshrl.u32 %v2076, 7
        %v2078 = vsub.s32 5, %v2077
        %v2079 = vrot.slane %v1025, %v2078
        %v2080 = vlaneseq
        %v2081 = vshrl.u32 %v2080, 7
        %v2082 = vsub.s32 5, %v2081
        %v2083 = vrot.slane %v1026, %v2082
        %v2084 = vlaneseq
        %v2085 = vshrl.u32 %v2084, 7
        %v2086 = vsub.s32 5, %v2085
        %v2087 = vrot.slane %v1027, %v2086
        %v2088 = vlaneseq
        %v2089 = vshrl.u32 %v2088, 7
        %v2090 = vsub.s32 5, %v2089
        %v2091 = vrot.slane %v1028, %v2090
        %v2092 = vlaneseq
        %v2093 = vshrl.u32 %v2092, 7
        %v2094 = vsub.s32 5, %v2093
        %v2095 = vrot.slane %v1029, %v2094
        %v2096 = vlaneseq
        %v2097 = vshrl.u32 %v2096, 7
        %v2098 = vsub.s32 5, %v2097
        %v2099 = vrot.slane %v1030, %v2098
        %v2100 = vlaneseq
        %v2101 = vshrl.u32 %v2100, 7
        %v2102 = vsub.s32 5, %v2101
        %v2103 = vrot.slane %v1031, %v2102
        %v2104 = vlaneseq
        %v2105 = vshrl.u32 %v2104, 7
        %v2106 = vsub.s32 5, %v2105
        %v2107 = vrot.slane %v1032, %v2106
        %v2108 = vlaneseq
        %v2109 = vshrl.u32 %v2108, 7
        %v2110 = vsub.s32 5, %v2109
        %v2111 = vrot.slane %v1033, %v2110
        %v2112 = vlaneseq
        %v2113 = vshrl.u32 %v2112, 7
        %v2114 = vsub.s32 5, %v2113
        %v2115 = vrot.slane %v1034, %v2114
        %v2116 = vlaneseq
        %v2117 = vshrl.u32 %v2116, 7
        %v2118 = vsub.s32 5, %v2117
        %v2119 = vrot.slane %v1035, %v2118
        %v2120 = vmul.f32 %v1990, %v1995
        %v2121 = vmul.f32 %v1990, %v1999
        %v2122 = vmul.f32 %v1990, %v2003
        %v2123 = vmul.f32 %v1990, %v2007
        %v2124 = vmul.f32 %v1990, %v2011
        %v2125 = vmul.f32 %v1990, %v2015
        %v2126 = vmul.f32 %v1990, %v2019
        %v2127 = vmul.f32 %v1990, %v2023
        %v2128 = vmul.f32 %v1990, %v2027
        %v2129 = vmul.f32 %v1990, %v2031
        %v2130 = vmul.f32 %v1990, %v2035
        %v2131 = vmul.f32 %v1990, %v2039
        %v2132 = vmul.f32 %v1990, %v2043
        %v2133 = vmul.f32 %v1990, %v2047
        %v2134 = vmul.f32 %v1990, %v2051
        %v2135 = vmul.f32 %v1990, %v2055
        %v2136 = vmul.f32 %v1990, %v2059
        %v2137 = vmul.f32 %v1990, %v2063
        %v2138 = vmul.f32 %v1990, %v2067
        %v2139 = vmul.f32 %v1990, %v2071
        %v2140 = vmul.f32 %v1990, %v2075
        %v2141 = vmul.f32 %v1990, %v2079
        %v2142 = vmul.f32 %v1990, %v2083
        %v2143 = vmul.f32 %v1990, %v2087
        %v2144 = vmul.f32 %v1990, %v2091
        %v2145 = vmul.f32 %v1990, %v2095
        %v2146 = vmul.f32 %v1990, %v2099
        %v2147 = vmul.f32 %v1990, %v2103
        %v2148 = vmul.f32 %v1990, %v2107
        %v2149 = vmul.f32 %v1990, %v2111
        %v2150 = vmul.f32 %v1990, %v2115
        %v2151 = vmul.f32 %v1990, %v2119
        %v2152 = vadd.f32 %v1956, %v2120
        %v2153 = vadd.f32 %v1957, %v2121
        %v2154 = vadd.f32 %v1958, %v2122
        %v2155 = vadd.f32 %v1959, %v2123
        %v2156 = vadd.f32 %v1960, %v2124
        %v2157 = vadd.f32 %v1961, %v2125
        %v2158 = vadd.f32 %v1962, %v2126
        %v2159 = vadd.f32 %v1963, %v2127
        %v2160 = vadd.f32 %v1964, %v2128
        %v2161 = vadd.f32 %v1965, %v2129
        %v2162 = vadd.f32 %v1966, %v2130
        %v2163 = vadd.f32 %v1967, %v2131
        %v2164 = vadd.f32 %v1968, %v2132
        %v2165 = vadd.f32 %v1969, %v2133
        %v2166 = vadd.f32 %v1970, %v2134
        %v2167 = vadd.f32 %v1971, %v2135
        %v2168 = vadd.f32 %v1972, %v2136
        %v2169 = vadd.f32 %v1973, %v2137
        %v2170 = vadd.f32 %v1974, %v2138
        %v2171 = vadd.f32 %v1975, %v2139
        %v2172 = vadd.f32 %v1976, %v2140
        %v2173 = vadd.f32 %v1977, %v2141
        %v2174 = vadd.f32 %v1978, %v2142
        %v2175 = vadd.f32 %v1979, %v2143
        %v2176 = vadd.f32 %v1980, %v2144
        %v2177 = vadd.f32 %v1981, %v2145
        %v2178 = vadd.f32 %v1982, %v2146
        %v2179 = vadd.f32 %v1983, %v2147
        %v2180 = vadd.f32 %v1984, %v2148
        %v2181 = vadd.f32 %v1985, %v2149
        %v2182 = vadd.f32 %v1986, %v2150
        %v2183 = vadd.f32 %v1987, %v2151
        %2184 = vset.pattern.permute.xlu0 6
        %2185 = vperm.xlu0 %2184, %v1038
        %v2186 = vpop.permute.xlu0 %2185
        %v2188 = vlaneseq
        %v2189 = vshrl.u32 %v2188, 7
        %v2190 = vsub.s32 6, %v2189
        %v2191 = vrot.slane %v1004, %v2190
        %v2192 = vlaneseq
        %v2193 = vshrl.u32 %v2192, 7
        %v2194 = vsub.s32 6, %v2193
        %v2195 = vrot.slane %v1005, %v2194
        %v2196 = vlaneseq
        %v2197 = vshrl.u32 %v2196, 7
        %v2198 = vsub.s32 6, %v2197
        %v2199 = vrot.slane %v1006, %v2198
        %v2200 = vlaneseq
        %v2201 = vshrl.u32 %v2200, 7
        %v2202 = vsub.s32 6, %v2201
        %v2203 = vrot.slane %v1007, %v2202
        %v2204 = vlaneseq
        %v2205 = vshrl.u32 %v2204, 7
        %v2206 = vsub.s32 6, %v2205
        %v2207 = vrot.slane %v1008, %v2206
        %v2208 = vlaneseq
        %v2209 = vshrl.u32 %v2208, 7
        %v2210 = vsub.s32 6, %v2209
        %v2211 = vrot.slane %v1009, %v2210
        %v2212 = vlaneseq
        %v2213 = vshrl.u32 %v2212, 7
        %v2214 = vsub.s32 6, %v2213
        %v2215 = vrot.slane %v1010, %v2214
        %v2216 = vlaneseq
        %v2217 = vshrl.u32 %v2216, 7
        %v2218 = vsub.s32 6, %v2217
        %v2219 = vrot.slane %v1011, %v2218
        %v2220 = vlaneseq
        %v2221 = vshrl.u32 %v2220, 7
        %v2222 = vsub.s32 6, %v2221
        %v2223 = vrot.slane %v1012, %v2222
        %v2224 = vlaneseq
        %v2225 = vshrl.u32 %v2224, 7
        %v2226 = vsub.s32 6, %v2225
        %v2227 = vrot.slane %v1013, %v2226
        %v2228 = vlaneseq
        %v2229 = vshrl.u32 %v2228, 7
        %v2230 = vsub.s32 6, %v2229
        %v2231 = vrot.slane %v1014, %v2230
        %v2232 = vlaneseq
        %v2233 = vshrl.u32 %v2232, 7
        %v2234 = vsub.s32 6, %v2233
        %v2235 = vrot.slane %v1015, %v2234
        %v2236 = vlaneseq
        %v2237 = vshrl.u32 %v2236, 7
        %v2238 = vsub.s32 6, %v2237
        %v2239 = vrot.slane %v1016, %v2238
        %v2240 = vlaneseq
        %v2241 = vshrl.u32 %v2240, 7
        %v2242 = vsub.s32 6, %v2241
        %v2243 = vrot.slane %v1017, %v2242
        %v2244 = vlaneseq
        %v2245 = vshrl.u32 %v2244, 7
        %v2246 = vsub.s32 6, %v2245
        %v2247 = vrot.slane %v1018, %v2246
        %v2248 = vlaneseq
        %v2249 = vshrl.u32 %v2248, 7
        %v2250 = vsub.s32 6, %v2249
        %v2251 = vrot.slane %v1019, %v2250
        %v2252 = vlaneseq
        %v2253 = vshrl.u32 %v2252, 7
        %v2254 = vsub.s32 6, %v2253
        %v2255 = vrot.slane %v1020, %v2254
        %v2256 = vlaneseq
        %v2257 = vshrl.u32 %v2256, 7
        %v2258 = vsub.s32 6, %v2257
        %v2259 = vrot.slane %v1021, %v2258
        %v2260 = vlaneseq
        %v2261 = vshrl.u32 %v2260, 7
        %v2262 = vsub.s32 6, %v2261
        %v2263 = vrot.slane %v1022, %v2262
        %v2264 = vlaneseq
        %v2265 = vshrl.u32 %v2264, 7
        %v2266 = vsub.s32 6, %v2265
        %v2267 = vrot.slane %v1023, %v2266
        %v2268 = vlaneseq
        %v2269 = vshrl.u32 %v2268, 7
        %v2270 = vsub.s32 6, %v2269
        %v2271 = vrot.slane %v1024, %v2270
        %v2272 = vlaneseq
        %v2273 = vshrl.u32 %v2272, 7
        %v2274 = vsub.s32 6, %v2273
        %v2275 = vrot.slane %v1025, %v2274
        %v2276 = vlaneseq
        %v2277 = vshrl.u32 %v2276, 7
        %v2278 = vsub.s32 6, %v2277
        %v2279 = vrot.slane %v1026, %v2278
        %v2280 = vlaneseq
        %v2281 = vshrl.u32 %v2280, 7
        %v2282 = vsub.s32 6, %v2281
        %v2283 = vrot.slane %v1027, %v2282
        %v2284 = vlaneseq
        %v2285 = vshrl.u32 %v2284, 7
        %v2286 = vsub.s32 6, %v2285
        %v2287 = vrot.slane %v1028, %v2286
        %v2288 = vlaneseq
        %v2289 = vshrl.u32 %v2288, 7
        %v2290 = vsub.s32 6, %v2289
        %v2291 = vrot.slane %v1029, %v2290
        %v2292 = vlaneseq
        %v2293 = vshrl.u32 %v2292, 7
        %v2294 = vsub.s32 6, %v2293
        %v2295 = vrot.slane %v1030, %v2294
        %v2296 = vlaneseq
        %v2297 = vshrl.u32 %v2296, 7
        %v2298 = vsub.s32 6, %v2297
        %v2299 = vrot.slane %v1031, %v2298
        %v2300 = vlaneseq
        %v2301 = vshrl.u32 %v2300, 7
        %v2302 = vsub.s32 6, %v2301
        %v2303 = vrot.slane %v1032, %v2302
        %v2304 = vlaneseq
        %v2305 = vshrl.u32 %v2304, 7
        %v2306 = vsub.s32 6, %v2305
        %v2307 = vrot.slane %v1033, %v2306
        %v2308 = vlaneseq
        %v2309 = vshrl.u32 %v2308, 7
        %v2310 = vsub.s32 6, %v2309
        %v2311 = vrot.slane %v1034, %v2310
        %v2312 = vlaneseq
        %v2313 = vshrl.u32 %v2312, 7
        %v2314 = vsub.s32 6, %v2313
        %v2315 = vrot.slane %v1035, %v2314
        %v2316 = vmul.f32 %v2186, %v2191
        %v2317 = vmul.f32 %v2186, %v2195
        %v2318 = vmul.f32 %v2186, %v2199
        %v2319 = vmul.f32 %v2186, %v2203
        %v2320 = vmul.f32 %v2186, %v2207
        %v2321 = vmul.f32 %v2186, %v2211
        %v2322 = vmul.f32 %v2186, %v2215
        %v2323 = vmul.f32 %v2186, %v2219
        %v2324 = vmul.f32 %v2186, %v2223
        %v2325 = vmul.f32 %v2186, %v2227
        %v2326 = vmul.f32 %v2186, %v2231
        %v2327 = vmul.f32 %v2186, %v2235
        %v2328 = vmul.f32 %v2186, %v2239
        %v2329 = vmul.f32 %v2186, %v2243
        %v2330 = vmul.f32 %v2186, %v2247
        %v2331 = vmul.f32 %v2186, %v2251
        %v2332 = vmul.f32 %v2186, %v2255
        %v2333 = vmul.f32 %v2186, %v2259
        %v2334 = vmul.f32 %v2186, %v2263
        %v2335 = vmul.f32 %v2186, %v2267
        %v2336 = vmul.f32 %v2186, %v2271
        %v2337 = vmul.f32 %v2186, %v2275
        %v2338 = vmul.f32 %v2186, %v2279
        %v2339 = vmul.f32 %v2186, %v2283
        %v2340 = vmul.f32 %v2186, %v2287
        %v2341 = vmul.f32 %v2186, %v2291
        %v2342 = vmul.f32 %v2186, %v2295
        %v2343 = vmul.f32 %v2186, %v2299
        %v2344 = vmul.f32 %v2186, %v2303
        %v2345 = vmul.f32 %v2186, %v2307
        %v2346 = vmul.f32 %v2186, %v2311
        %v2347 = vmul.f32 %v2186, %v2315
        %v2348 = vadd.f32 %v2152, %v2316
        %v2349 = vadd.f32 %v2153, %v2317
        %v2350 = vadd.f32 %v2154, %v2318
        %v2351 = vadd.f32 %v2155, %v2319
        %v2352 = vadd.f32 %v2156, %v2320
        %v2353 = vadd.f32 %v2157, %v2321
        %v2354 = vadd.f32 %v2158, %v2322
        %v2355 = vadd.f32 %v2159, %v2323
        %v2356 = vadd.f32 %v2160, %v2324
        %v2357 = vadd.f32 %v2161, %v2325
        %v2358 = vadd.f32 %v2162, %v2326
        %v2359 = vadd.f32 %v2163, %v2327
        %v2360 = vadd.f32 %v2164, %v2328
        %v2361 = vadd.f32 %v2165, %v2329
        %v2362 = vadd.f32 %v2166, %v2330
        %v2363 = vadd.f32 %v2167, %v2331
        %v2364 = vadd.f32 %v2168, %v2332
        %v2365 = vadd.f32 %v2169, %v2333
        %v2366 = vadd.f32 %v2170, %v2334
        %v2367 = vadd.f32 %v2171, %v2335
        %v2368 = vadd.f32 %v2172, %v2336
        %v2369 = vadd.f32 %v2173, %v2337
        %v2370 = vadd.f32 %v2174, %v2338
        %v2371 = vadd.f32 %v2175, %v2339
        %v2372 = vadd.f32 %v2176, %v2340
        %v2373 = vadd.f32 %v2177, %v2341
        %v2374 = vadd.f32 %v2178, %v2342
        %v2375 = vadd.f32 %v2179, %v2343
        %v2376 = vadd.f32 %v2180, %v2344
        %v2377 = vadd.f32 %v2181, %v2345
        %v2378 = vadd.f32 %v2182, %v2346
        %v2379 = vadd.f32 %v2183, %v2347
        %2380 = vset.pattern.permute.xlu0 7
        %2381 = vperm.xlu0 %2380, %v1038
        %v2382 = vpop.permute.xlu0 %2381
        %v2384 = vlaneseq
        %v2385 = vshrl.u32 %v2384, 7
        %v2386 = vsub.s32 7, %v2385
        %v2387 = vrot.slane %v1004, %v2386
        %v2388 = vlaneseq
        %v2389 = vshrl.u32 %v2388, 7
        %v2390 = vsub.s32 7, %v2389
        %v2391 = vrot.slane %v1005, %v2390
        %v2392 = vlaneseq
        %v2393 = vshrl.u32 %v2392, 7
        %v2394 = vsub.s32 7, %v2393
        %v2395 = vrot.slane %v1006, %v2394
        %v2396 = vlaneseq
        %v2397 = vshrl.u32 %v2396, 7
        %v2398 = vsub.s32 7, %v2397
        %v2399 = vrot.slane %v1007, %v2398
        %v2400 = vlaneseq
        %v2401 = vshrl.u32 %v2400, 7
        %v2402 = vsub.s32 7, %v2401
        %v2403 = vrot.slane %v1008, %v2402
        %v2404 = vlaneseq
        %v2405 = vshrl.u32 %v2404, 7
        %v2406 = vsub.s32 7, %v2405
        %v2407 = vrot.slane %v1009, %v2406
        %v2408 = vlaneseq
        %v2409 = vshrl.u32 %v2408, 7
        %v2410 = vsub.s32 7, %v2409
        %v2411 = vrot.slane %v1010, %v2410
        %v2412 = vlaneseq
        %v2413 = vshrl.u32 %v2412, 7
        %v2414 = vsub.s32 7, %v2413
        %v2415 = vrot.slane %v1011, %v2414
        %v2416 = vlaneseq
        %v2417 = vshrl.u32 %v2416, 7
        %v2418 = vsub.s32 7, %v2417
        %v2419 = vrot.slane %v1012, %v2418
        %v2420 = vlaneseq
        %v2421 = vshrl.u32 %v2420, 7
        %v2422 = vsub.s32 7, %v2421
        %v2423 = vrot.slane %v1013, %v2422
        %v2424 = vlaneseq
        %v2425 = vshrl.u32 %v2424, 7
        %v2426 = vsub.s32 7, %v2425
        %v2427 = vrot.slane %v1014, %v2426
        %v2428 = vlaneseq
        %v2429 = vshrl.u32 %v2428, 7
        %v2430 = vsub.s32 7, %v2429
        %v2431 = vrot.slane %v1015, %v2430
        %v2432 = vlaneseq
        %v2433 = vshrl.u32 %v2432, 7
        %v2434 = vsub.s32 7, %v2433
        %v2435 = vrot.slane %v1016, %v2434
        %v2436 = vlaneseq
        %v2437 = vshrl.u32 %v2436, 7
        %v2438 = vsub.s32 7, %v2437
        %v2439 = vrot.slane %v1017, %v2438
        %v2440 = vlaneseq
        %v2441 = vshrl.u32 %v2440, 7
        %v2442 = vsub.s32 7, %v2441
        %v2443 = vrot.slane %v1018, %v2442
        %v2444 = vlaneseq
        %v2445 = vshrl.u32 %v2444, 7
        %v2446 = vsub.s32 7, %v2445
        %v2447 = vrot.slane %v1019, %v2446
        %v2448 = vlaneseq
        %v2449 = vshrl.u32 %v2448, 7
        %v2450 = vsub.s32 7, %v2449
        %v2451 = vrot.slane %v1020, %v2450
        %v2452 = vlaneseq
        %v2453 = vshrl.u32 %v2452, 7
        %v2454 = vsub.s32 7, %v2453
        %v2455 = vrot.slane %v1021, %v2454
        %v2456 = vlaneseq
        %v2457 = vshrl.u32 %v2456, 7
        %v2458 = vsub.s32 7, %v2457
        %v2459 = vrot.slane %v1022, %v2458
        %v2460 = vlaneseq
        %v2461 = vshrl.u32 %v2460, 7
        %v2462 = vsub.s32 7, %v2461
        %v2463 = vrot.slane %v1023, %v2462
        %v2464 = vlaneseq
        %v2465 = vshrl.u32 %v2464, 7
        %v2466 = vsub.s32 7, %v2465
        %v2467 = vrot.slane %v1024, %v2466
        %v2468 = vlaneseq
        %v2469 = vshrl.u32 %v2468, 7
        %v2470 = vsub.s32 7, %v2469
        %v2471 = vrot.slane %v1025, %v2470
        %v2472 = vlaneseq
        %v2473 = vshrl.u32 %v2472, 7
        %v2474 = vsub.s32 7, %v2473
        %v2475 = vrot.slane %v1026, %v2474
        %v2476 = vlaneseq
        %v2477 = vshrl.u32 %v2476, 7
        %v2478 = vsub.s32 7, %v2477
        %v2479 = vrot.slane %v1027, %v2478
        %v2480 = vlaneseq
        %v2481 = vshrl.u32 %v2480, 7
        %v2482 = vsub.s32 7, %v2481
        %v2483 = vrot.slane %v1028, %v2482
        %v2484 = vlaneseq
        %v2485 = vshrl.u32 %v2484, 7
        %v2486 = vsub.s32 7, %v2485
        %v2487 = vrot.slane %v1029, %v2486
        %v2488 = vlaneseq
        %v2489 = vshrl.u32 %v2488, 7
        %v2490 = vsub.s32 7, %v2489
        %v2491 = vrot.slane %v1030, %v2490
        %v2492 = vlaneseq
        %v2493 = vshrl.u32 %v2492, 7
        %v2494 = vsub.s32 7, %v2493
        %v2495 = vrot.slane %v1031, %v2494
        %v2496 = vlaneseq
        %v2497 = vshrl.u32 %v2496, 7
        %v2498 = vsub.s32 7, %v2497
        %v2499 = vrot.slane %v1032, %v2498
        %v2500 = vlaneseq
        %v2501 = vshrl.u32 %v2500, 7
        %v2502 = vsub.s32 7, %v2501
        %v2503 = vrot.slane %v1033, %v2502
        %v2504 = vlaneseq
        %v2505 = vshrl.u32 %v2504, 7
        %v2506 = vsub.s32 7, %v2505
        %v2507 = vrot.slane %v1034, %v2506
        %v2508 = vlaneseq
        %v2509 = vshrl.u32 %v2508, 7
        %v2510 = vsub.s32 7, %v2509
        %v2511 = vrot.slane %v1035, %v2510
        %v2512 = vmul.f32 %v2382, %v2387
        %v2513 = vmul.f32 %v2382, %v2391
        %v2514 = vmul.f32 %v2382, %v2395
        %v2515 = vmul.f32 %v2382, %v2399
        %v2516 = vmul.f32 %v2382, %v2403
        %v2517 = vmul.f32 %v2382, %v2407
        %v2518 = vmul.f32 %v2382, %v2411
        %v2519 = vmul.f32 %v2382, %v2415
        %v2520 = vmul.f32 %v2382, %v2419
        %v2521 = vmul.f32 %v2382, %v2423
        %v2522 = vmul.f32 %v2382, %v2427
        %v2523 = vmul.f32 %v2382, %v2431
        %v2524 = vmul.f32 %v2382, %v2435
        %v2525 = vmul.f32 %v2382, %v2439
        %v2526 = vmul.f32 %v2382, %v2443
        %v2527 = vmul.f32 %v2382, %v2447
        %v2528 = vmul.f32 %v2382, %v2451
        %v2529 = vmul.f32 %v2382, %v2455
        %v2530 = vmul.f32 %v2382, %v2459
        %v2531 = vmul.f32 %v2382, %v2463
        %v2532 = vmul.f32 %v2382, %v2467
        %v2533 = vmul.f32 %v2382, %v2471
        %v2534 = vmul.f32 %v2382, %v2475
        %v2535 = vmul.f32 %v2382, %v2479
        %v2536 = vmul.f32 %v2382, %v2483
        %v2537 = vmul.f32 %v2382, %v2487
        %v2538 = vmul.f32 %v2382, %v2491
        %v2539 = vmul.f32 %v2382, %v2495
        %v2540 = vmul.f32 %v2382, %v2499
        %v2541 = vmul.f32 %v2382, %v2503
        %v2542 = vmul.f32 %v2382, %v2507
        %v2543 = vmul.f32 %v2382, %v2511
        %v2544 = vadd.f32 %v2348, %v2512
        %v2545 = vadd.f32 %v2349, %v2513
        %v2546 = vadd.f32 %v2350, %v2514
        %v2547 = vadd.f32 %v2351, %v2515
        %v2548 = vadd.f32 %v2352, %v2516
        %v2549 = vadd.f32 %v2353, %v2517
        %v2550 = vadd.f32 %v2354, %v2518
        %v2551 = vadd.f32 %v2355, %v2519
        %v2552 = vadd.f32 %v2356, %v2520
        %v2553 = vadd.f32 %v2357, %v2521
        %v2554 = vadd.f32 %v2358, %v2522
        %v2555 = vadd.f32 %v2359, %v2523
        %v2556 = vadd.f32 %v2360, %v2524
        %v2557 = vadd.f32 %v2361, %v2525
        %v2558 = vadd.f32 %v2362, %v2526
        %v2559 = vadd.f32 %v2363, %v2527
        %v2560 = vadd.f32 %v2364, %v2528
        %v2561 = vadd.f32 %v2365, %v2529
        %v2562 = vadd.f32 %v2366, %v2530
        %v2563 = vadd.f32 %v2367, %v2531
        %v2564 = vadd.f32 %v2368, %v2532
        %v2565 = vadd.f32 %v2369, %v2533
        %v2566 = vadd.f32 %v2370, %v2534
        %v2567 = vadd.f32 %v2371, %v2535
        %v2568 = vadd.f32 %v2372, %v2536
        %v2569 = vadd.f32 %v2373, %v2537
        %v2570 = vadd.f32 %v2374, %v2538
        %v2571 = vadd.f32 %v2375, %v2539
        %v2572 = vadd.f32 %v2376, %v2540
        %v2573 = vadd.f32 %v2377, %v2541
        %v2574 = vadd.f32 %v2378, %v2542
        %v2575 = vadd.f32 %v2379, %v2543
        %s2576 = scalar_lea.vmem %s4, %s1036
        %v2577 = vld [vmem:[%s2576] sm:$0xff]
        %2579 = vset.pattern.permute.xlu0 0
        %2580 = vperm.xlu0 %2579, %v2577
        %v2581 = vpop.permute.xlu0 %2580
        %v2583 = vadd.f32 %v2544, %v2581
        %v2584 = vadd.f32 %v2545, %v2581
        %v2585 = vadd.f32 %v2546, %v2581
        %v2586 = vadd.f32 %v2547, %v2581
        %v2587 = vadd.f32 %v2548, %v2581
        %v2588 = vadd.f32 %v2549, %v2581
        %v2589 = vadd.f32 %v2550, %v2581
        %v2590 = vadd.f32 %v2551, %v2581
        %v2591 = vadd.f32 %v2552, %v2581
        %v2592 = vadd.f32 %v2553, %v2581
        %v2593 = vadd.f32 %v2554, %v2581
        %v2594 = vadd.f32 %v2555, %v2581
        %v2595 = vadd.f32 %v2556, %v2581
        %v2596 = vadd.f32 %v2557, %v2581
        %v2597 = vadd.f32 %v2558, %v2581
        %v2598 = vadd.f32 %v2559, %v2581
        %v2599 = vadd.f32 %v2560, %v2581
        %v2600 = vadd.f32 %v2561, %v2581
        %v2601 = vadd.f32 %v2562, %v2581
        %v2602 = vadd.f32 %v2563, %v2581
        %v2603 = vadd.f32 %v2564, %v2581
        %v2604 = vadd.f32 %v2565, %v2581
        %v2605 = vadd.f32 %v2566, %v2581
        %v2606 = vadd.f32 %v2567, %v2581
        %v2607 = vadd.f32 %v2568, %v2581
        %v2608 = vadd.f32 %v2569, %v2581
        %v2609 = vadd.f32 %v2570, %v2581
        %v2610 = vadd.f32 %v2571, %v2581
        %v2611 = vadd.f32 %v2572, %v2581
        %v2612 = vadd.f32 %v2573, %v2581
        %v2613 = vadd.f32 %v2574, %v2581
        %v2614 = vadd.f32 %v2575, %v2581
        %v2615 = vmul.f32 %v2583, 0.5
        %v2616 = vmul.f32 %v2584, 0.5
        %v2617 = vmul.f32 %v2585, 0.5
        %v2618 = vmul.f32 %v2586, 0.5
        %v2619 = vmul.f32 %v2587, 0.5
        %v2620 = vmul.f32 %v2588, 0.5
        %v2621 = vmul.f32 %v2589, 0.5
        %v2622 = vmul.f32 %v2590, 0.5
        %v2623 = vmul.f32 %v2591, 0.5
        %v2624 = vmul.f32 %v2592, 0.5
        %v2625 = vmul.f32 %v2593, 0.5
        %v2626 = vmul.f32 %v2594, 0.5
        %v2627 = vmul.f32 %v2595, 0.5
        %v2628 = vmul.f32 %v2596, 0.5
        %v2629 = vmul.f32 %v2597, 0.5
        %v2630 = vmul.f32 %v2598, 0.5
        %v2631 = vmul.f32 %v2599, 0.5
        %v2632 = vmul.f32 %v2600, 0.5
        %v2633 = vmul.f32 %v2601, 0.5
        %v2634 = vmul.f32 %v2602, 0.5
        %v2635 = vmul.f32 %v2603, 0.5
        %v2636 = vmul.f32 %v2604, 0.5
        %v2637 = vmul.f32 %v2605, 0.5
        %v2638 = vmul.f32 %v2606, 0.5
        %v2639 = vmul.f32 %v2607, 0.5
        %v2640 = vmul.f32 %v2608, 0.5
        %v2641 = vmul.f32 %v2609, 0.5
        %v2642 = vmul.f32 %v2610, 0.5
        %v2643 = vmul.f32 %v2611, 0.5
        %v2644 = vmul.f32 %v2612, 0.5
        %v2645 = vmul.f32 %v2613, 0.5
        %v2646 = vmul.f32 %v2614, 0.5
        %v2647 = vmul.f32 %v2583, 0.044715
        %v2648 = vmul.f32 %v2584, 0.044715
        %v2649 = vmul.f32 %v2585, 0.044715
        %v2650 = vmul.f32 %v2586, 0.044715
        %v2651 = vmul.f32 %v2587, 0.044715
        %v2652 = vmul.f32 %v2588, 0.044715
        %v2653 = vmul.f32 %v2589, 0.044715
        %v2654 = vmul.f32 %v2590, 0.044715
        %v2655 = vmul.f32 %v2591, 0.044715
        %v2656 = vmul.f32 %v2592, 0.044715
        %v2657 = vmul.f32 %v2593, 0.044715
        %v2658 = vmul.f32 %v2594, 0.044715
        %v2659 = vmul.f32 %v2595, 0.044715
        %v2660 = vmul.f32 %v2596, 0.044715
        %v2661 = vmul.f32 %v2597, 0.044715
        %v2662 = vmul.f32 %v2598, 0.044715
        %v2663 = vmul.f32 %v2599, 0.044715
        %v2664 = vmul.f32 %v2600, 0.044715
        %v2665 = vmul.f32 %v2601, 0.044715
        %v2666 = vmul.f32 %v2602, 0.044715
        %v2667 = vmul.f32 %v2603, 0.044715
        %v2668 = vmul.f32 %v2604, 0.044715
        %v2669 = vmul.f32 %v2605, 0.044715
        %v2670 = vmul.f32 %v2606, 0.044715
        %v2671 = vmul.f32 %v2607, 0.044715
        %v2672 = vmul.f32 %v2608, 0.044715
        %v2673 = vmul.f32 %v2609, 0.044715
        %v2674 = vmul.f32 %v2610, 0.044715
        %v2675 = vmul.f32 %v2611, 0.044715
        %v2676 = vmul.f32 %v2612, 0.044715
        %v2677 = vmul.f32 %v2613, 0.044715
        %v2678 = vmul.f32 %v2614, 0.044715
        %v2679 = vmul.f32 %v2647, %v2583
        %v2680 = vmul.f32 %v2648, %v2584
        %v2681 = vmul.f32 %v2649, %v2585
        %v2682 = vmul.f32 %v2650, %v2586
        %v2683 = vmul.f32 %v2651, %v2587
        %v2684 = vmul.f32 %v2652, %v2588
        %v2685 = vmul.f32 %v2653, %v2589
        %v2686 = vmul.f32 %v2654, %v2590
        %v2687 = vmul.f32 %v2655, %v2591
        %v2688 = vmul.f32 %v2656, %v2592
        %v2689 = vmul.f32 %v2657, %v2593
        %v2690 = vmul.f32 %v2658, %v2594
        %v2691 = vmul.f32 %v2659, %v2595
        %v2692 = vmul.f32 %v2660, %v2596
        %v2693 = vmul.f32 %v2661, %v2597
        %v2694 = vmul.f32 %v2662, %v2598
        %v2695 = vmul.f32 %v2663, %v2599
        %v2696 = vmul.f32 %v2664, %v2600
        %v2697 = vmul.f32 %v2665, %v2601
        %v2698 = vmul.f32 %v2666, %v2602
        %v2699 = vmul.f32 %v2667, %v2603
        %v2700 = vmul.f32 %v2668, %v2604
        %v2701 = vmul.f32 %v2669, %v2605
        %v2702 = vmul.f32 %v2670, %v2606
        %v2703 = vmul.f32 %v2671, %v2607
        %v2704 = vmul.f32 %v2672, %v2608
        %v2705 = vmul.f32 %v2673, %v2609
        %v2706 = vmul.f32 %v2674, %v2610
        %v2707 = vmul.f32 %v2675, %v2611
        %v2708 = vmul.f32 %v2676, %v2612
        %v2709 = vmul.f32 %v2677, %v2613
        %v2710 = vmul.f32 %v2678, %v2614
        %v2711 = vmul.f32 %v2679, %v2583
        %v2712 = vmul.f32 %v2680, %v2584
        %v2713 = vmul.f32 %v2681, %v2585
        %v2714 = vmul.f32 %v2682, %v2586
        %v2715 = vmul.f32 %v2683, %v2587
        %v2716 = vmul.f32 %v2684, %v2588
        %v2717 = vmul.f32 %v2685, %v2589
        %v2718 = vmul.f32 %v2686, %v2590
        %v2719 = vmul.f32 %v2687, %v2591
        %v2720 = vmul.f32 %v2688, %v2592
        %v2721 = vmul.f32 %v2689, %v2593
        %v2722 = vmul.f32 %v2690, %v2594
        %v2723 = vmul.f32 %v2691, %v2595
        %v2724 = vmul.f32 %v2692, %v2596
        %v2725 = vmul.f32 %v2693, %v2597
        %v2726 = vmul.f32 %v2694, %v2598
        %v2727 = vmul.f32 %v2695, %v2599
        %v2728 = vmul.f32 %v2696, %v2600
        %v2729 = vmul.f32 %v2697, %v2601
        %v2730 = vmul.f32 %v2698, %v2602
        %v2731 = vmul.f32 %v2699, %v2603
        %v2732 = vmul.f32 %v2700, %v2604
        %v2733 = vmul.f32 %v2701, %v2605
        %v2734 = vmul.f32 %v2702, %v2606
        %v2735 = vmul.f32 %v2703, %v2607
        %v2736 = vmul.f32 %v2704, %v2608
        %v2737 = vmul.f32 %v2705, %v2609
        %v2738 = vmul.f32 %v2706, %v2610
        %v2739 = vmul.f32 %v2707, %v2611
        %v2740 = vmul.f32 %v2708, %v2612
        %v2741 = vmul.f32 %v2709, %v2613
        %v2742 = vmul.f32 %v2710, %v2614
        %v2743 = vadd.f32 %v2583, %v2711
        %v2744 = vadd.f32 %v2584, %v2712
        %v2745 = vadd.f32 %v2585, %v2713
        %v2746 = vadd.f32 %v2586, %v2714
        %v2747 = vadd.f32 %v2587, %v2715
        %v2748 = vadd.f32 %v2588, %v2716
        %v2749 = vadd.f32 %v2589, %v2717
        %v2750 = vadd.f32 %v2590, %v2718
        %v2751 = vadd.f32 %v2591, %v2719
        %v2752 = vadd.f32 %v2592, %v2720
        %v2753 = vadd.f32 %v2593, %v2721
        %v2754 = vadd.f32 %v2594, %v2722
        %v2755 = vadd.f32 %v2595, %v2723
        %v2756 = vadd.f32 %v2596, %v2724
        %v2757 = vadd.f32 %v2597, %v2725
        %v2758 = vadd.f32 %v2598, %v2726
        %v2759 = vadd.f32 %v2599, %v2727
        %v2760 = vadd.f32 %v2600, %v2728
        %v2761 = vadd.f32 %v2601, %v2729
        %v2762 = vadd.f32 %v2602, %v2730
        %v2763 = vadd.f32 %v2603, %v2731
        %v2764 = vadd.f32 %v2604, %v2732
        %v2765 = vadd.f32 %v2605, %v2733
        %v2766 = vadd.f32 %v2606, %v2734
        %v2767 = vadd.f32 %v2607, %v2735
        %v2768 = vadd.f32 %v2608, %v2736
        %v2769 = vadd.f32 %v2609, %v2737
        %v2770 = vadd.f32 %v2610, %v2738
        %v2771 = vadd.f32 %v2611, %v2739
        %v2772 = vadd.f32 %v2612, %v2740
        %v2773 = vadd.f32 %v2613, %v2741
        %v2774 = vadd.f32 %v2614, %v2742
        %v2775 = vmul.f32 %v2743, 0.7978846
        %v2776 = vmul.f32 %v2744, 0.7978846
        %v2777 = vmul.f32 %v2745, 0.7978846
        %v2778 = vmul.f32 %v2746, 0.7978846
        %v2779 = vmul.f32 %v2747, 0.7978846
        %v2780 = vmul.f32 %v2748, 0.7978846
        %v2781 = vmul.f32 %v2749, 0.7978846
        %v2782 = vmul.f32 %v2750, 0.7978846
        %v2783 = vmul.f32 %v2751, 0.7978846
        %v2784 = vmul.f32 %v2752, 0.7978846
        %v2785 = vmul.f32 %v2753, 0.7978846
        %v2786 = vmul.f32 %v2754, 0.7978846
        %v2787 = vmul.f32 %v2755, 0.7978846
        %v2788 = vmul.f32 %v2756, 0.7978846
        %v2789 = vmul.f32 %v2757, 0.7978846
        %v2790 = vmul.f32 %v2758, 0.7978846
        %v2791 = vmul.f32 %v2759, 0.7978846
        %v2792 = vmul.f32 %v2760, 0.7978846
        %v2793 = vmul.f32 %v2761, 0.7978846
        %v2794 = vmul.f32 %v2762, 0.7978846
        %v2795 = vmul.f32 %v2763, 0.7978846
        %v2796 = vmul.f32 %v2764, 0.7978846
        %v2797 = vmul.f32 %v2765, 0.7978846
        %v2798 = vmul.f32 %v2766, 0.7978846
        %v2799 = vmul.f32 %v2767, 0.7978846
        %v2800 = vmul.f32 %v2768, 0.7978846
        %v2801 = vmul.f32 %v2769, 0.7978846
        %v2802 = vmul.f32 %v2770, 0.7978846
        %v2803 = vmul.f32 %v2771, 0.7978846
        %v2804 = vmul.f32 %v2772, 0.7978846
        %v2805 = vmul.f32 %v2773, 0.7978846
        %v2806 = vmul.f32 %v2774, 0.7978846
        %v2807 = vtanh.pop %v2775
        %v2808 = vtanh.pop %v2776
        %v2809 = vtanh.pop %v2777
        %v2810 = vtanh.pop %v2778
        %v2811 = vtanh.pop %v2779
        %v2812 = vtanh.pop %v2780
        %v2813 = vtanh.pop %v2781
        %v2814 = vtanh.pop %v2782
        %v2815 = vtanh.pop %v2783
        %v2816 = vtanh.pop %v2784
        %v2817 = vtanh.pop %v2785
        %v2818 = vtanh.pop %v2786
        %v2819 = vtanh.pop %v2787
        %v2820 = vtanh.pop %v2788
        %v2821 = vtanh.pop %v2789
        %v2822 = vtanh.pop %v2790
        %v2823 = vtanh.pop %v2791
        %v2824 = vtanh.pop %v2792
        %v2825 = vtanh.pop %v2793
        %v2826 = vtanh.pop %v2794
        %v2827 = vtanh.pop %v2795
        %v2828 = vtanh.pop %v2796
        %v2829 = vtanh.pop %v2797
        %v2830 = vtanh.pop %v2798
        %v2831 = vtanh.pop %v2799
        %v2832 = vtanh.pop %v2800
        %v2833 = vtanh.pop %v2801
        %v2834 = vtanh.pop %v2802
        %v2835 = vtanh.pop %v2803
        %v2836 = vtanh.pop %v2804
        %v2837 = vtanh.pop %v2805
        %v2838 = vtanh.pop %v2806
        %v2839 = vadd.f32 %v2807, 1.0
        %v2840 = vadd.f32 %v2808, 1.0
        %v2841 = vadd.f32 %v2809, 1.0
        %v2842 = vadd.f32 %v2810, 1.0
        %v2843 = vadd.f32 %v2811, 1.0
        %v2844 = vadd.f32 %v2812, 1.0
        %v2845 = vadd.f32 %v2813, 1.0
        %v2846 = vadd.f32 %v2814, 1.0
        %v2847 = vadd.f32 %v2815, 1.0
        %v2848 = vadd.f32 %v2816, 1.0
        %v2849 = vadd.f32 %v2817, 1.0
        %v2850 = vadd.f32 %v2818, 1.0
        %v2851 = vadd.f32 %v2819, 1.0
        %v2852 = vadd.f32 %v2820, 1.0
        %v2853 = vadd.f32 %v2821, 1.0
        %v2854 = vadd.f32 %v2822, 1.0
        %v2855 = vadd.f32 %v2823, 1.0
        %v2856 = vadd.f32 %v2824, 1.0
        %v2857 = vadd.f32 %v2825, 1.0
        %v2858 = vadd.f32 %v2826, 1.0
        %v2859 = vadd.f32 %v2827, 1.0
        %v2860 = vadd.f32 %v2828, 1.0
        %v2861 = vadd.f32 %v2829, 1.0
        %v2862 = vadd.f32 %v2830, 1.0
        %v2863 = vadd.f32 %v2831, 1.0
        %v2864 = vadd.f32 %v2832, 1.0
        %v2865 = vadd.f32 %v2833, 1.0
        %v2866 = vadd.f32 %v2834, 1.0
        %v2867 = vadd.f32 %v2835, 1.0
        %v2868 = vadd.f32 %v2836, 1.0
        %v2869 = vadd.f32 %v2837, 1.0
        %v2870 = vadd.f32 %v2838, 1.0
        %v2871 = vmul.f32 %v2615, %v2839
        %v2872 = vmul.f32 %v2616, %v2840
        %v2873 = vmul.f32 %v2617, %v2841
        %v2874 = vmul.f32 %v2618, %v2842
        %v2875 = vmul.f32 %v2619, %v2843
        %v2876 = vmul.f32 %v2620, %v2844
        %v2877 = vmul.f32 %v2621, %v2845
        %v2878 = vmul.f32 %v2622, %v2846
        %v2879 = vmul.f32 %v2623, %v2847
        %v2880 = vmul.f32 %v2624, %v2848
        %v2881 = vmul.f32 %v2625, %v2849
        %v2882 = vmul.f32 %v2626, %v2850
        %v2883 = vmul.f32 %v2627, %v2851
        %v2884 = vmul.f32 %v2628, %v2852
        %v2885 = vmul.f32 %v2629, %v2853
        %v2886 = vmul.f32 %v2630, %v2854
        %v2887 = vmul.f32 %v2631, %v2855
        %v2888 = vmul.f32 %v2632, %v2856
        %v2889 = vmul.f32 %v2633, %v2857
        %v2890 = vmul.f32 %v2634, %v2858
        %v2891 = vmul.f32 %v2635, %v2859
        %v2892 = vmul.f32 %v2636, %v2860
        %v2893 = vmul.f32 %v2637, %v2861
        %v2894 = vmul.f32 %v2638, %v2862
        %v2895 = vmul.f32 %v2639, %v2863
        %v2896 = vmul.f32 %v2640, %v2864
        %v2897 = vmul.f32 %v2641, %v2865
        %v2898 = vmul.f32 %v2642, %v2866
        %v2899 = vmul.f32 %v2643, %v2867
        %v2900 = vmul.f32 %v2644, %v2868
        %v2901 = vmul.f32 %v2645, %v2869
        %v2902 = vmul.f32 %v2646, %v2870
        %s2903 = scalar_lea.vmem %s5, %s1036
        %v2904 = vld [vmem:[%s2903] sm:$0xff]
        %2906 = vset.pattern.permute.xlu0 0
        %2907 = vperm.xlu0 %2906, %v2904
        %v2908 = vpop.permute.xlu0 %2907
        %v2910 = vlaneseq
        %v2911 = vshrl.u32 %v2910, 7
        %v2912 = vsub.s32 0, %v2911
        %v2913 = vrot.slane %v2871, %v2912
        %v2914 = vlaneseq
        %v2915 = vshrl.u32 %v2914, 7
        %v2916 = vsub.s32 0, %v2915
        %v2917 = vrot.slane %v2872, %v2916
        %v2918 = vlaneseq
        %v2919 = vshrl.u32 %v2918, 7
        %v2920 = vsub.s32 0, %v2919
        %v2921 = vrot.slane %v2873, %v2920
        %v2922 = vlaneseq
        %v2923 = vshrl.u32 %v2922, 7
        %v2924 = vsub.s32 0, %v2923
        %v2925 = vrot.slane %v2874, %v2924
        %v2926 = vlaneseq
        %v2927 = vshrl.u32 %v2926, 7
        %v2928 = vsub.s32 0, %v2927
        %v2929 = vrot.slane %v2875, %v2928
        %v2930 = vlaneseq
        %v2931 = vshrl.u32 %v2930, 7
        %v2932 = vsub.s32 0, %v2931
        %v2933 = vrot.slane %v2876, %v2932
        %v2934 = vlaneseq
        %v2935 = vshrl.u32 %v2934, 7
        %v2936 = vsub.s32 0, %v2935
        %v2937 = vrot.slane %v2877, %v2936
        %v2938 = vlaneseq
        %v2939 = vshrl.u32 %v2938, 7
        %v2940 = vsub.s32 0, %v2939
        %v2941 = vrot.slane %v2878, %v2940
        %v2942 = vlaneseq
        %v2943 = vshrl.u32 %v2942, 7
        %v2944 = vsub.s32 0, %v2943
        %v2945 = vrot.slane %v2879, %v2944
        %v2946 = vlaneseq
        %v2947 = vshrl.u32 %v2946, 7
        %v2948 = vsub.s32 0, %v2947
        %v2949 = vrot.slane %v2880, %v2948
        %v2950 = vlaneseq
        %v2951 = vshrl.u32 %v2950, 7
        %v2952 = vsub.s32 0, %v2951
        %v2953 = vrot.slane %v2881, %v2952
        %v2954 = vlaneseq
        %v2955 = vshrl.u32 %v2954, 7
        %v2956 = vsub.s32 0, %v2955
        %v2957 = vrot.slane %v2882, %v2956
        %v2958 = vlaneseq
        %v2959 = vshrl.u32 %v2958, 7
        %v2960 = vsub.s32 0, %v2959
        %v2961 = vrot.slane %v2883, %v2960
        %v2962 = vlaneseq
        %v2963 = vshrl.u32 %v2962, 7
        %v2964 = vsub.s32 0, %v2963
        %v2965 = vrot.slane %v2884, %v2964
        %v2966 = vlaneseq
        %v2967 = vshrl.u32 %v2966, 7
        %v2968 = vsub.s32 0, %v2967
        %v2969 = vrot.slane %v2885, %v2968
        %v2970 = vlaneseq
        %v2971 = vshrl.u32 %v2970, 7
        %v2972 = vsub.s32 0, %v2971
        %v2973 = vrot.slane %v2886, %v2972
        %v2974 = vlaneseq
        %v2975 = vshrl.u32 %v2974, 7
        %v2976 = vsub.s32 0, %v2975
        %v2977 = vrot.slane %v2887, %v2976
        %v2978 = vlaneseq
        %v2979 = vshrl.u32 %v2978, 7
        %v2980 = vsub.s32 0, %v2979
        %v2981 = vrot.slane %v2888, %v2980
        %v2982 = vlaneseq
        %v2983 = vshrl.u32 %v2982, 7
        %v2984 = vsub.s32 0, %v2983
        %v2985 = vrot.slane %v2889, %v2984
        %v2986 = vlaneseq
        %v2987 = vshrl.u32 %v2986, 7
        %v2988 = vsub.s32 0, %v2987
        %v2989 = vrot.slane %v2890, %v2988
        %v2990 = vlaneseq
        %v2991 = vshrl.u32 %v2990, 7
        %v2992 = vsub.s32 0, %v2991
        %v2993 = vrot.slane %v2891, %v2992
        %v2994 = vlaneseq
        %v2995 = vshrl.u32 %v2994, 7
        %v2996 = vsub.s32 0, %v2995
        %v2997 = vrot.slane %v2892, %v2996
        %v2998 = vlaneseq
        %v2999 = vshrl.u32 %v2998, 7
        %v3000 = vsub.s32 0, %v2999
        %v3001 = vrot.slane %v2893, %v3000
        %v3002 = vlaneseq
        %v3003 = vshrl.u32 %v3002, 7
        %v3004 = vsub.s32 0, %v3003
        %v3005 = vrot.slane %v2894, %v3004
        %v3006 = vlaneseq
        %v3007 = vshrl.u32 %v3006, 7
        %v3008 = vsub.s32 0, %v3007
        %v3009 = vrot.slane %v2895, %v3008
        %v3010 = vlaneseq
        %v3011 = vshrl.u32 %v3010, 7
        %v3012 = vsub.s32 0, %v3011
        %v3013 = vrot.slane %v2896, %v3012
        %v3014 = vlaneseq
        %v3015 = vshrl.u32 %v3014, 7
        %v3016 = vsub.s32 0, %v3015
        %v3017 = vrot.slane %v2897, %v3016
        %v3018 = vlaneseq
        %v3019 = vshrl.u32 %v3018, 7
        %v3020 = vsub.s32 0, %v3019
        %v3021 = vrot.slane %v2898, %v3020
        %v3022 = vlaneseq
        %v3023 = vshrl.u32 %v3022, 7
        %v3024 = vsub.s32 0, %v3023
        %v3025 = vrot.slane %v2899, %v3024
        %v3026 = vlaneseq
        %v3027 = vshrl.u32 %v3026, 7
        %v3028 = vsub.s32 0, %v3027
        %v3029 = vrot.slane %v2900, %v3028
        %v3030 = vlaneseq
        %v3031 = vshrl.u32 %v3030, 7
        %v3032 = vsub.s32 0, %v3031
        %v3033 = vrot.slane %v2901, %v3032
        %v3034 = vlaneseq
        %v3035 = vshrl.u32 %v3034, 7
        %v3036 = vsub.s32 0, %v3035
        %v3037 = vrot.slane %v2902, %v3036
        %v3038 = vmul.f32 %v2908, %v2913
        %v3039 = vmul.f32 %v2908, %v2917
        %v3040 = vmul.f32 %v2908, %v2921
        %v3041 = vmul.f32 %v2908, %v2925
        %v3042 = vmul.f32 %v2908, %v2929
        %v3043 = vmul.f32 %v2908, %v2933
        %v3044 = vmul.f32 %v2908, %v2937
        %v3045 = vmul.f32 %v2908, %v2941
        %v3046 = vmul.f32 %v2908, %v2945
        %v3047 = vmul.f32 %v2908, %v2949
        %v3048 = vmul.f32 %v2908, %v2953
        %v3049 = vmul.f32 %v2908, %v2957
        %v3050 = vmul.f32 %v2908, %v2961
        %v3051 = vmul.f32 %v2908, %v2965
        %v3052 = vmul.f32 %v2908, %v2969
        %v3053 = vmul.f32 %v2908, %v2973
        %v3054 = vmul.f32 %v2908, %v2977
        %v3055 = vmul.f32 %v2908, %v2981
        %v3056 = vmul.f32 %v2908, %v2985
        %v3057 = vmul.f32 %v2908, %v2989
        %v3058 = vmul.f32 %v2908, %v2993
        %v3059 = vmul.f32 %v2908, %v2997
        %v3060 = vmul.f32 %v2908, %v3001
        %v3061 = vmul.f32 %v2908, %v3005
        %v3062 = vmul.f32 %v2908, %v3009
        %v3063 = vmul.f32 %v2908, %v3013
        %v3064 = vmul.f32 %v2908, %v3017
        %v3065 = vmul.f32 %v2908, %v3021
        %v3066 = vmul.f32 %v2908, %v3025
        %v3067 = vmul.f32 %v2908, %v3029
        %v3068 = vmul.f32 %v2908, %v3033
        %v3069 = vmul.f32 %v2908, %v3037
        %3070 = vset.pattern.permute.xlu0 1
        %3071 = vperm.xlu0 %3070, %v2904
        %v3072 = vpop.permute.xlu0 %3071
        %v3074 = vlaneseq
        %v3075 = vshrl.u32 %v3074, 7
        %v3076 = vsub.s32 1, %v3075
        %v3077 = vrot.slane %v2871, %v3076
        %v3078 = vlaneseq
        %v3079 = vshrl.u32 %v3078, 7
        %v3080 = vsub.s32 1, %v3079
        %v3081 = vrot.slane %v2872, %v3080
        %v3082 = vlaneseq
        %v3083 = vshrl.u32 %v3082, 7
        %v3084 = vsub.s32 1, %v3083
        %v3085 = vrot.slane %v2873, %v3084
        %v3086 = vlaneseq
        %v3087 = vshrl.u32 %v3086, 7
        %v3088 = vsub.s32 1, %v3087
        %v3089 = vrot.slane %v2874, %v3088
        %v3090 = vlaneseq
        %v3091 = vshrl.u32 %v3090, 7
        %v3092 = vsub.s32 1, %v3091
        %v3093 = vrot.slane %v2875, %v3092
        %v3094 = vlaneseq
        %v3095 = vshrl.u32 %v3094, 7
        %v3096 = vsub.s32 1, %v3095
        %v3097 = vrot.slane %v2876, %v3096
        %v3098 = vlaneseq
        %v3099 = vshrl.u32 %v3098, 7
        %v3100 = vsub.s32 1, %v3099
        %v3101 = vrot.slane %v2877, %v3100
        %v3102 = vlaneseq
        %v3103 = vshrl.u32 %v3102, 7
        %v3104 = vsub.s32 1, %v3103
        %v3105 = vrot.slane %v2878, %v3104
        %v3106 = vlaneseq
        %v3107 = vshrl.u32 %v3106, 7
        %v3108 = vsub.s32 1, %v3107
        %v3109 = vrot.slane %v2879, %v3108
        %v3110 = vlaneseq
        %v3111 = vshrl.u32 %v3110, 7
        %v3112 = vsub.s32 1, %v3111
        %v3113 = vrot.slane %v2880, %v3112
        %v3114 = vlaneseq
        %v3115 = vshrl.u32 %v3114, 7
        %v3116 = vsub.s32 1, %v3115
        %v3117 = vrot.slane %v2881, %v3116
        %v3118 = vlaneseq
        %v3119 = vshrl.u32 %v3118, 7
        %v3120 = vsub.s32 1, %v3119
        %v3121 = vrot.slane %v2882, %v3120
        %v3122 = vlaneseq
        %v3123 = vshrl.u32 %v3122, 7
        %v3124 = vsub.s32 1, %v3123
        %v3125 = vrot.slane %v2883, %v3124
        %v3126 = vlaneseq
        %v3127 = vshrl.u32 %v3126, 7
        %v3128 = vsub.s32 1, %v3127
        %v3129 = vrot.slane %v2884, %v3128
        %v3130 = vlaneseq
        %v3131 = vshrl.u32 %v3130, 7
        %v3132 = vsub.s32 1, %v3131
        %v3133 = vrot.slane %v2885, %v3132
        %v3134 = vlaneseq
        %v3135 = vshrl.u32 %v3134, 7
        %v3136 = vsub.s32 1, %v3135
        %v3137 = vrot.slane %v2886, %v3136
        %v3138 = vlaneseq
        %v3139 = vshrl.u32 %v3138, 7
        %v3140 = vsub.s32 1, %v3139
        %v3141 = vrot.slane %v2887, %v3140
        %v3142 = vlaneseq
        %v3143 = vshrl.u32 %v3142, 7
        %v3144 = vsub.s32 1, %v3143
        %v3145 = vrot.slane %v2888, %v3144
        %v3146 = vlaneseq
        %v3147 = vshrl.u32 %v3146, 7
        %v3148 = vsub.s32 1, %v3147
        %v3149 = vrot.slane %v2889, %v3148
        %v3150 = vlaneseq
        %v3151 = vshrl.u32 %v3150, 7
        %v3152 = vsub.s32 1, %v3151
        %v3153 = vrot.slane %v2890, %v3152
        %v3154 = vlaneseq
        %v3155 = vshrl.u32 %v3154, 7
        %v3156 = vsub.s32 1, %v3155
        %v3157 = vrot.slane %v2891, %v3156
        %v3158 = vlaneseq
        %v3159 = vshrl.u32 %v3158, 7
        %v3160 = vsub.s32 1, %v3159
        %v3161 = vrot.slane %v2892, %v3160
        %v3162 = vlaneseq
        %v3163 = vshrl.u32 %v3162, 7
        %v3164 = vsub.s32 1, %v3163
        %v3165 = vrot.slane %v2893, %v3164
        %v3166 = vlaneseq
        %v3167 = vshrl.u32 %v3166, 7
        %v3168 = vsub.s32 1, %v3167
        %v3169 = vrot.slane %v2894, %v3168
        %v3170 = vlaneseq
        %v3171 = vshrl.u32 %v3170, 7
        %v3172 = vsub.s32 1, %v3171
        %v3173 = vrot.slane %v2895, %v3172
        %v3174 = vlaneseq
        %v3175 = vshrl.u32 %v3174, 7
        %v3176 = vsub.s32 1, %v3175
        %v3177 = vrot.slane %v2896, %v3176
        %v3178 = vlaneseq
        %v3179 = vshrl.u32 %v3178, 7
        %v3180 = vsub.s32 1, %v3179
        %v3181 = vrot.slane %v2897, %v3180
        %v3182 = vlaneseq
        %v3183 = vshrl.u32 %v3182, 7
        %v3184 = vsub.s32 1, %v3183
        %v3185 = vrot.slane %v2898, %v3184
        %v3186 = vlaneseq
        %v3187 = vshrl.u32 %v3186, 7
        %v3188 = vsub.s32 1, %v3187
        %v3189 = vrot.slane %v2899, %v3188
        %v3190 = vlaneseq
        %v3191 = vshrl.u32 %v3190, 7
        %v3192 = vsub.s32 1, %v3191
        %v3193 = vrot.slane %v2900, %v3192
        %v3194 = vlaneseq
        %v3195 = vshrl.u32 %v3194, 7
        %v3196 = vsub.s32 1, %v3195
        %v3197 = vrot.slane %v2901, %v3196
        %v3198 = vlaneseq
        %v3199 = vshrl.u32 %v3198, 7
        %v3200 = vsub.s32 1, %v3199
        %v3201 = vrot.slane %v2902, %v3200
        %v3202 = vmul.f32 %v3072, %v3077
        %v3203 = vmul.f32 %v3072, %v3081
        %v3204 = vmul.f32 %v3072, %v3085
        %v3205 = vmul.f32 %v3072, %v3089
        %v3206 = vmul.f32 %v3072, %v3093
        %v3207 = vmul.f32 %v3072, %v3097
        %v3208 = vmul.f32 %v3072, %v3101
        %v3209 = vmul.f32 %v3072, %v3105
        %v3210 = vmul.f32 %v3072, %v3109
        %v3211 = vmul.f32 %v3072, %v3113
        %v3212 = vmul.f32 %v3072, %v3117
        %v3213 = vmul.f32 %v3072, %v3121
        %v3214 = vmul.f32 %v3072, %v3125
        %v3215 = vmul.f32 %v3072, %v3129
        %v3216 = vmul.f32 %v3072, %v3133
        %v3217 = vmul.f32 %v3072, %v3137
        %v3218 = vmul.f32 %v3072, %v3141
        %v3219 = vmul.f32 %v3072, %v3145
        %v3220 = vmul.f32 %v3072, %v3149
        %v3221 = vmul.f32 %v3072, %v3153
        %v3222 = vmul.f32 %v3072, %v3157
        %v3223 = vmul.f32 %v3072, %v3161
        %v3224 = vmul.f32 %v3072, %v3165
        %v3225 = vmul.f32 %v3072, %v3169
        %v3226 = vmul.f32 %v3072, %v3173
        %v3227 = vmul.f32 %v3072, %v3177
        %v3228 = vmul.f32 %v3072, %v3181
        %v3229 = vmul.f32 %v3072, %v3185
        %v3230 = vmul.f32 %v3072, %v3189
        %v3231 = vmul.f32 %v3072, %v3193
        %v3232 = vmul.f32 %v3072, %v3197
        %v3233 = vmul.f32 %v3072, %v3201
        %v3234 = vadd.f32 %v3038, %v3202
        %v3235 = vadd.f32 %v3039, %v3203
        %v3236 = vadd.f32 %v3040, %v3204
        %v3237 = vadd.f32 %v3041, %v3205
        %v3238 = vadd.f32 %v3042, %v3206
        %v3239 = vadd.f32 %v3043, %v3207
        %v3240 = vadd.f32 %v3044, %v3208
        %v3241 = vadd.f32 %v3045, %v3209
        %v3242 = vadd.f32 %v3046, %v3210
        %v3243 = vadd.f32 %v3047, %v3211
        %v3244 = vadd.f32 %v3048, %v3212
        %v3245 = vadd.f32 %v3049, %v3213
        %v3246 = vadd.f32 %v3050, %v3214
        %v3247 = vadd.f32 %v3051, %v3215
        %v3248 = vadd.f32 %v3052, %v3216
        %v3249 = vadd.f32 %v3053, %v3217
        %v3250 = vadd.f32 %v3054, %v3218
        %v3251 = vadd.f32 %v3055, %v3219
        %v3252 = vadd.f32 %v3056, %v3220
        %v3253 = vadd.f32 %v3057, %v3221
        %v3254 = vadd.f32 %v3058, %v3222
        %v3255 = vadd.f32 %v3059, %v3223
        %v3256 = vadd.f32 %v3060, %v3224
        %v3257 = vadd.f32 %v3061, %v3225
        %v3258 = vadd.f32 %v3062, %v3226
        %v3259 = vadd.f32 %v3063, %v3227
        %v3260 = vadd.f32 %v3064, %v3228
        %v3261 = vadd.f32 %v3065, %v3229
        %v3262 = vadd.f32 %v3066, %v3230
        %v3263 = vadd.f32 %v3067, %v3231
        %v3264 = vadd.f32 %v3068, %v3232
        %v3265 = vadd.f32 %v3069, %v3233
        %3266 = vset.pattern.permute.xlu0 2
        %3267 = vperm.xlu0 %3266, %v2904
        %v3268 = vpop.permute.xlu0 %3267
        %v3270 = vlaneseq
        %v3271 = vshrl.u32 %v3270, 7
        %v3272 = vsub.s32 2, %v3271
        %v3273 = vrot.slane %v2871, %v3272
        %v3274 = vlaneseq
        %v3275 = vshrl.u32 %v3274, 7
        %v3276 = vsub.s32 2, %v3275
        %v3277 = vrot.slane %v2872, %v3276
        %v3278 = vlaneseq
        %v3279 = vshrl.u32 %v3278, 7
        %v3280 = vsub.s32 2, %v3279
        %v3281 = vrot.slane %v2873, %v3280
        %v3282 = vlaneseq
        %v3283 = vshrl.u32 %v3282, 7
        %v3284 = vsub.s32 2, %v3283
        %v3285 = vrot.slane %v2874, %v3284
        %v3286 = vlaneseq
        %v3287 = vshrl.u32 %v3286, 7
        %v3288 = vsub.s32 2, %v3287
        %v3289 = vrot.slane %v2875, %v3288
        %v3290 = vlaneseq
        %v3291 = vshrl.u32 %v3290, 7
        %v3292 = vsub.s32 2, %v3291
        %v3293 = vrot.slane %v2876, %v3292
        %v3294 = vlaneseq
        %v3295 = vshrl.u32 %v3294, 7
        %v3296 = vsub.s32 2, %v3295
        %v3297 = vrot.slane %v2877, %v3296
        %v3298 = vlaneseq
        %v3299 = vshrl.u32 %v3298, 7
        %v3300 = vsub.s32 2, %v3299
        %v3301 = vrot.slane %v2878, %v3300
        %v3302 = vlaneseq
        %v3303 = vshrl.u32 %v3302, 7
        %v3304 = vsub.s32 2, %v3303
        %v3305 = vrot.slane %v2879, %v3304
        %v3306 = vlaneseq
        %v3307 = vshrl.u32 %v3306, 7
        %v3308 = vsub.s32 2, %v3307
        %v3309 = vrot.slane %v2880, %v3308
        %v3310 = vlaneseq
        %v3311 = vshrl.u32 %v3310, 7
        %v3312 = vsub.s32 2, %v3311
        %v3313 = vrot.slane %v2881, %v3312
        %v3314 = vlaneseq
        %v3315 = vshrl.u32 %v3314, 7
        %v3316 = vsub.s32 2, %v3315
        %v3317 = vrot.slane %v2882, %v3316
        %v3318 = vlaneseq
        %v3319 = vshrl.u32 %v3318, 7
        %v3320 = vsub.s32 2, %v3319
        %v3321 = vrot.slane %v2883, %v3320
        %v3322 = vlaneseq
        %v3323 = vshrl.u32 %v3322, 7
        %v3324 = vsub.s32 2, %v3323
        %v3325 = vrot.slane %v2884, %v3324
        %v3326 = vlaneseq
        %v3327 = vshrl.u32 %v3326, 7
        %v3328 = vsub.s32 2, %v3327
        %v3329 = vrot.slane %v2885, %v3328
        %v3330 = vlaneseq
        %v3331 = vshrl.u32 %v3330, 7
        %v3332 = vsub.s32 2, %v3331
        %v3333 = vrot.slane %v2886, %v3332
        %v3334 = vlaneseq
        %v3335 = vshrl.u32 %v3334, 7
        %v3336 = vsub.s32 2, %v3335
        %v3337 = vrot.slane %v2887, %v3336
        %v3338 = vlaneseq
        %v3339 = vshrl.u32 %v3338, 7
        %v3340 = vsub.s32 2, %v3339
        %v3341 = vrot.slane %v2888, %v3340
        %v3342 = vlaneseq
        %v3343 = vshrl.u32 %v3342, 7
        %v3344 = vsub.s32 2, %v3343
        %v3345 = vrot.slane %v2889, %v3344
        %v3346 = vlaneseq
        %v3347 = vshrl.u32 %v3346, 7
        %v3348 = vsub.s32 2, %v3347
        %v3349 = vrot.slane %v2890, %v3348
        %v3350 = vlaneseq
        %v3351 = vshrl.u32 %v3350, 7
        %v3352 = vsub.s32 2, %v3351
        %v3353 = vrot.slane %v2891, %v3352
        %v3354 = vlaneseq
        %v3355 = vshrl.u32 %v3354, 7
        %v3356 = vsub.s32 2, %v3355
        %v3357 = vrot.slane %v2892, %v3356
        %v3358 = vlaneseq
        %v3359 = vshrl.u32 %v3358, 7
        %v3360 = vsub.s32 2, %v3359
        %v3361 = vrot.slane %v2893, %v3360
        %v3362 = vlaneseq
        %v3363 = vshrl.u32 %v3362, 7
        %v3364 = vsub.s32 2, %v3363
        %v3365 = vrot.slane %v2894, %v3364
        %v3366 = vlaneseq
        %v3367 = vshrl.u32 %v3366, 7
        %v3368 = vsub.s32 2, %v3367
        %v3369 = vrot.slane %v2895, %v3368
        %v3370 = vlaneseq
        %v3371 = vshrl.u32 %v3370, 7
        %v3372 = vsub.s32 2, %v3371
        %v3373 = vrot.slane %v2896, %v3372
        %v3374 = vlaneseq
        %v3375 = vshrl.u32 %v3374, 7
        %v3376 = vsub.s32 2, %v3375
        %v3377 = vrot.slane %v2897, %v3376
        %v3378 = vlaneseq
        %v3379 = vshrl.u32 %v3378, 7
        %v3380 = vsub.s32 2, %v3379
        %v3381 = vrot.slane %v2898, %v3380
        %v3382 = vlaneseq
        %v3383 = vshrl.u32 %v3382, 7
        %v3384 = vsub.s32 2, %v3383
        %v3385 = vrot.slane %v2899, %v3384
        %v3386 = vlaneseq
        %v3387 = vshrl.u32 %v3386, 7
        %v3388 = vsub.s32 2, %v3387
        %v3389 = vrot.slane %v2900, %v3388
        %v3390 = vlaneseq
        %v3391 = vshrl.u32 %v3390, 7
        %v3392 = vsub.s32 2, %v3391
        %v3393 = vrot.slane %v2901, %v3392
        %v3394 = vlaneseq
        %v3395 = vshrl.u32 %v3394, 7
        %v3396 = vsub.s32 2, %v3395
        %v3397 = vrot.slane %v2902, %v3396
        %v3398 = vmul.f32 %v3268, %v3273
        %v3399 = vmul.f32 %v3268, %v3277
        %v3400 = vmul.f32 %v3268, %v3281
        %v3401 = vmul.f32 %v3268, %v3285
        %v3402 = vmul.f32 %v3268, %v3289
        %v3403 = vmul.f32 %v3268, %v3293
        %v3404 = vmul.f32 %v3268, %v3297
        %v3405 = vmul.f32 %v3268, %v3301
        %v3406 = vmul.f32 %v3268, %v3305
        %v3407 = vmul.f32 %v3268, %v3309
        %v3408 = vmul.f32 %v3268, %v3313
        %v3409 = vmul.f32 %v3268, %v3317
        %v3410 = vmul.f32 %v3268, %v3321
        %v3411 = vmul.f32 %v3268, %v3325
        %v3412 = vmul.f32 %v3268, %v3329
        %v3413 = vmul.f32 %v3268, %v3333
        %v3414 = vmul.f32 %v3268, %v3337
        %v3415 = vmul.f32 %v3268, %v3341
        %v3416 = vmul.f32 %v3268, %v3345
        %v3417 = vmul.f32 %v3268, %v3349
        %v3418 = vmul.f32 %v3268, %v3353
        %v3419 = vmul.f32 %v3268, %v3357
        %v3420 = vmul.f32 %v3268, %v3361
        %v3421 = vmul.f32 %v3268, %v3365
        %v3422 = vmul.f32 %v3268, %v3369
        %v3423 = vmul.f32 %v3268, %v3373
        %v3424 = vmul.f32 %v3268, %v3377
        %v3425 = vmul.f32 %v3268, %v3381
        %v3426 = vmul.f32 %v3268, %v3385
        %v3427 = vmul.f32 %v3268, %v3389
        %v3428 = vmul.f32 %v3268, %v3393
        %v3429 = vmul.f32 %v3268, %v3397
        %v3430 = vadd.f32 %v3234, %v3398
        %v3431 = vadd.f32 %v3235, %v3399
        %v3432 = vadd.f32 %v3236, %v3400
        %v3433 = vadd.f32 %v3237, %v3401
        %v3434 = vadd.f32 %v3238, %v3402
        %v3435 = vadd.f32 %v3239, %v3403
        %v3436 = vadd.f32 %v3240, %v3404
        %v3437 = vadd.f32 %v3241, %v3405
        %v3438 = vadd.f32 %v3242, %v3406
        %v3439 = vadd.f32 %v3243, %v3407
        %v3440 = vadd.f32 %v3244, %v3408
        %v3441 = vadd.f32 %v3245, %v3409
        %v3442 = vadd.f32 %v3246, %v3410
        %v3443 = vadd.f32 %v3247, %v3411
        %v3444 = vadd.f32 %v3248, %v3412
        %v3445 = vadd.f32 %v3249, %v3413
        %v3446 = vadd.f32 %v3250, %v3414
        %v3447 = vadd.f32 %v3251, %v3415
        %v3448 = vadd.f32 %v3252, %v3416
        %v3449 = vadd.f32 %v3253, %v3417
        %v3450 = vadd.f32 %v3254, %v3418
        %v3451 = vadd.f32 %v3255, %v3419
        %v3452 = vadd.f32 %v3256, %v3420
        %v3453 = vadd.f32 %v3257, %v3421
        %v3454 = vadd.f32 %v3258, %v3422
        %v3455 = vadd.f32 %v3259, %v3423
        %v3456 = vadd.f32 %v3260, %v3424
        %v3457 = vadd.f32 %v3261, %v3425
        %v3458 = vadd.f32 %v3262, %v3426
        %v3459 = vadd.f32 %v3263, %v3427
        %v3460 = vadd.f32 %v3264, %v3428
        %v3461 = vadd.f32 %v3265, %v3429
        %3462 = vset.pattern.permute.xlu0 3
        %3463 = vperm.xlu0 %3462, %v2904
        %v3464 = vpop.permute.xlu0 %3463
        %v3466 = vlaneseq
        %v3467 = vshrl.u32 %v3466, 7
        %v3468 = vsub.s32 3, %v3467
        %v3469 = vrot.slane %v2871, %v3468
        %v3470 = vlaneseq
        %v3471 = vshrl.u32 %v3470, 7
        %v3472 = vsub.s32 3, %v3471
        %v3473 = vrot.slane %v2872, %v3472
        %v3474 = vlaneseq
        %v3475 = vshrl.u32 %v3474, 7
        %v3476 = vsub.s32 3, %v3475
        %v3477 = vrot.slane %v2873, %v3476
        %v3478 = vlaneseq
        %v3479 = vshrl.u32 %v3478, 7
        %v3480 = vsub.s32 3, %v3479
        %v3481 = vrot.slane %v2874, %v3480
        %v3482 = vlaneseq
        %v3483 = vshrl.u32 %v3482, 7
        %v3484 = vsub.s32 3, %v3483
        %v3485 = vrot.slane %v2875, %v3484
        %v3486 = vlaneseq
        %v3487 = vshrl.u32 %v3486, 7
        %v3488 = vsub.s32 3, %v3487
        %v3489 = vrot.slane %v2876, %v3488
        %v3490 = vlaneseq
        %v3491 = vshrl.u32 %v3490, 7
        %v3492 = vsub.s32 3, %v3491
        %v3493 = vrot.slane %v2877, %v3492
        %v3494 = vlaneseq
        %v3495 = vshrl.u32 %v3494, 7
        %v3496 = vsub.s32 3, %v3495
        %v3497 = vrot.slane %v2878, %v3496
        %v3498 = vlaneseq
        %v3499 = vshrl.u32 %v3498, 7
        %v3500 = vsub.s32 3, %v3499
        %v3501 = vrot.slane %v2879, %v3500
        %v3502 = vlaneseq
        %v3503 = vshrl.u32 %v3502, 7
        %v3504 = vsub.s32 3, %v3503
        %v3505 = vrot.slane %v2880, %v3504
        %v3506 = vlaneseq
        %v3507 = vshrl.u32 %v3506, 7
        %v3508 = vsub.s32 3, %v3507
        %v3509 = vrot.slane %v2881, %v3508
        %v3510 = vlaneseq
        %v3511 = vshrl.u32 %v3510, 7
        %v3512 = vsub.s32 3, %v3511
        %v3513 = vrot.slane %v2882, %v3512
        %v3514 = vlaneseq
        %v3515 = vshrl.u32 %v3514, 7
        %v3516 = vsub.s32 3, %v3515
        %v3517 = vrot.slane %v2883, %v3516
        %v3518 = vlaneseq
        %v3519 = vshrl.u32 %v3518, 7
        %v3520 = vsub.s32 3, %v3519
        %v3521 = vrot.slane %v2884, %v3520
        %v3522 = vlaneseq
        %v3523 = vshrl.u32 %v3522, 7
        %v3524 = vsub.s32 3, %v3523
        %v3525 = vrot.slane %v2885, %v3524
        %v3526 = vlaneseq
        %v3527 = vshrl.u32 %v3526, 7
        %v3528 = vsub.s32 3, %v3527
        %v3529 = vrot.slane %v2886, %v3528
        %v3530 = vlaneseq
        %v3531 = vshrl.u32 %v3530, 7
        %v3532 = vsub.s32 3, %v3531
        %v3533 = vrot.slane %v2887, %v3532
        %v3534 = vlaneseq
        %v3535 = vshrl.u32 %v3534, 7
        %v3536 = vsub.s32 3, %v3535
        %v3537 = vrot.slane %v2888, %v3536
        %v3538 = vlaneseq
        %v3539 = vshrl.u32 %v3538, 7
        %v3540 = vsub.s32 3, %v3539
        %v3541 = vrot.slane %v2889, %v3540
        %v3542 = vlaneseq
        %v3543 = vshrl.u32 %v3542, 7
        %v3544 = vsub.s32 3, %v3543
        %v3545 = vrot.slane %v2890, %v3544
        %v3546 = vlaneseq
        %v3547 = vshrl.u32 %v3546, 7
        %v3548 = vsub.s32 3, %v3547
        %v3549 = vrot.slane %v2891, %v3548
        %v3550 = vlaneseq
        %v3551 = vshrl.u32 %v3550, 7
        %v3552 = vsub.s32 3, %v3551
        %v3553 = vrot.slane %v2892, %v3552
        %v3554 = vlaneseq
        %v3555 = vshrl.u32 %v3554, 7
        %v3556 = vsub.s32 3, %v3555
        %v3557 = vrot.slane %v2893, %v3556
        %v3558 = vlaneseq
        %v3559 = vshrl.u32 %v3558, 7
        %v3560 = vsub.s32 3, %v3559
        %v3561 = vrot.slane %v2894, %v3560
        %v3562 = vlaneseq
        %v3563 = vshrl.u32 %v3562, 7
        %v3564 = vsub.s32 3, %v3563
        %v3565 = vrot.slane %v2895, %v3564
        %v3566 = vlaneseq
        %v3567 = vshrl.u32 %v3566, 7
        %v3568 = vsub.s32 3, %v3567
        %v3569 = vrot.slane %v2896, %v3568
        %v3570 = vlaneseq
        %v3571 = vshrl.u32 %v3570, 7
        %v3572 = vsub.s32 3, %v3571
        %v3573 = vrot.slane %v2897, %v3572
        %v3574 = vlaneseq
        %v3575 = vshrl.u32 %v3574, 7
        %v3576 = vsub.s32 3, %v3575
        %v3577 = vrot.slane %v2898, %v3576
        %v3578 = vlaneseq
        %v3579 = vshrl.u32 %v3578, 7
        %v3580 = vsub.s32 3, %v3579
        %v3581 = vrot.slane %v2899, %v3580
        %v3582 = vlaneseq
        %v3583 = vshrl.u32 %v3582, 7
        %v3584 = vsub.s32 3, %v3583
        %v3585 = vrot.slane %v2900, %v3584
        %v3586 = vlaneseq
        %v3587 = vshrl.u32 %v3586, 7
        %v3588 = vsub.s32 3, %v3587
        %v3589 = vrot.slane %v2901, %v3588
        %v3590 = vlaneseq
        %v3591 = vshrl.u32 %v3590, 7
        %v3592 = vsub.s32 3, %v3591
        %v3593 = vrot.slane %v2902, %v3592
        %v3594 = vmul.f32 %v3464, %v3469
        %v3595 = vmul.f32 %v3464, %v3473
        %v3596 = vmul.f32 %v3464, %v3477
        %v3597 = vmul.f32 %v3464, %v3481
        %v3598 = vmul.f32 %v3464, %v3485
        %v3599 = vmul.f32 %v3464, %v3489
        %v3600 = vmul.f32 %v3464, %v3493
        %v3601 = vmul.f32 %v3464, %v3497
        %v3602 = vmul.f32 %v3464, %v3501
        %v3603 = vmul.f32 %v3464, %v3505
        %v3604 = vmul.f32 %v3464, %v3509
        %v3605 = vmul.f32 %v3464, %v3513
        %v3606 = vmul.f32 %v3464, %v3517
        %v3607 = vmul.f32 %v3464, %v3521
        %v3608 = vmul.f32 %v3464, %v3525
        %v3609 = vmul.f32 %v3464, %v3529
        %v3610 = vmul.f32 %v3464, %v3533
        %v3611 = vmul.f32 %v3464, %v3537
        %v3612 = vmul.f32 %v3464, %v3541
        %v3613 = vmul.f32 %v3464, %v3545
        %v3614 = vmul.f32 %v3464, %v3549
        %v3615 = vmul.f32 %v3464, %v3553
        %v3616 = vmul.f32 %v3464, %v3557
        %v3617 = vmul.f32 %v3464, %v3561
        %v3618 = vmul.f32 %v3464, %v3565
        %v3619 = vmul.f32 %v3464, %v3569
        %v3620 = vmul.f32 %v3464, %v3573
        %v3621 = vmul.f32 %v3464, %v3577
        %v3622 = vmul.f32 %v3464, %v3581
        %v3623 = vmul.f32 %v3464, %v3585
        %v3624 = vmul.f32 %v3464, %v3589
        %v3625 = vmul.f32 %v3464, %v3593
        %v3626 = vadd.f32 %v3430, %v3594
        %v3627 = vadd.f32 %v3431, %v3595
        %v3628 = vadd.f32 %v3432, %v3596
        %v3629 = vadd.f32 %v3433, %v3597
        %v3630 = vadd.f32 %v3434, %v3598
        %v3631 = vadd.f32 %v3435, %v3599
        %v3632 = vadd.f32 %v3436, %v3600
        %v3633 = vadd.f32 %v3437, %v3601
        %v3634 = vadd.f32 %v3438, %v3602
        %v3635 = vadd.f32 %v3439, %v3603
        %v3636 = vadd.f32 %v3440, %v3604
        %v3637 = vadd.f32 %v3441, %v3605
        %v3638 = vadd.f32 %v3442, %v3606
        %v3639 = vadd.f32 %v3443, %v3607
        %v3640 = vadd.f32 %v3444, %v3608
        %v3641 = vadd.f32 %v3445, %v3609
        %v3642 = vadd.f32 %v3446, %v3610
        %v3643 = vadd.f32 %v3447, %v3611
        %v3644 = vadd.f32 %v3448, %v3612
        %v3645 = vadd.f32 %v3449, %v3613
        %v3646 = vadd.f32 %v3450, %v3614
        %v3647 = vadd.f32 %v3451, %v3615
        %v3648 = vadd.f32 %v3452, %v3616
        %v3649 = vadd.f32 %v3453, %v3617
        %v3650 = vadd.f32 %v3454, %v3618
        %v3651 = vadd.f32 %v3455, %v3619
        %v3652 = vadd.f32 %v3456, %v3620
        %v3653 = vadd.f32 %v3457, %v3621
        %v3654 = vadd.f32 %v3458, %v3622
        %v3655 = vadd.f32 %v3459, %v3623
        %v3656 = vadd.f32 %v3460, %v3624
        %v3657 = vadd.f32 %v3461, %v3625
        %3658 = vset.pattern.permute.xlu0 4
        %3659 = vperm.xlu0 %3658, %v2904
        %v3660 = vpop.permute.xlu0 %3659
        %v3662 = vlaneseq
        %v3663 = vshrl.u32 %v3662, 7
        %v3664 = vsub.s32 4, %v3663
        %v3665 = vrot.slane %v2871, %v3664
        %v3666 = vlaneseq
        %v3667 = vshrl.u32 %v3666, 7
        %v3668 = vsub.s32 4, %v3667
        %v3669 = vrot.slane %v2872, %v3668
        %v3670 = vlaneseq
        %v3671 = vshrl.u32 %v3670, 7
        %v3672 = vsub.s32 4, %v3671
        %v3673 = vrot.slane %v2873, %v3672
        %v3674 = vlaneseq
        %v3675 = vshrl.u32 %v3674, 7
        %v3676 = vsub.s32 4, %v3675
        %v3677 = vrot.slane %v2874, %v3676
        %v3678 = vlaneseq
        %v3679 = vshrl.u32 %v3678, 7
        %v3680 = vsub.s32 4, %v3679
        %v3681 = vrot.slane %v2875, %v3680
        %v3682 = vlaneseq
        %v3683 = vshrl.u32 %v3682, 7
        %v3684 = vsub.s32 4, %v3683
        %v3685 = vrot.slane %v2876, %v3684
        %v3686 = vlaneseq
        %v3687 = vshrl.u32 %v3686, 7
        %v3688 = vsub.s32 4, %v3687
        %v3689 = vrot.slane %v2877, %v3688
        %v3690 = vlaneseq
        %v3691 = vshrl.u32 %v3690, 7
        %v3692 = vsub.s32 4, %v3691
        %v3693 = vrot.slane %v2878, %v3692
        %v3694 = vlaneseq
        %v3695 = vshrl.u32 %v3694, 7
        %v3696 = vsub.s32 4, %v3695
        %v3697 = vrot.slane %v2879, %v3696
        %v3698 = vlaneseq
        %v3699 = vshrl.u32 %v3698, 7
        %v3700 = vsub.s32 4, %v3699
        %v3701 = vrot.slane %v2880, %v3700
        %v3702 = vlaneseq
        %v3703 = vshrl.u32 %v3702, 7
        %v3704 = vsub.s32 4, %v3703
        %v3705 = vrot.slane %v2881, %v3704
        %v3706 = vlaneseq
        %v3707 = vshrl.u32 %v3706, 7
        %v3708 = vsub.s32 4, %v3707
        %v3709 = vrot.slane %v2882, %v3708
        %v3710 = vlaneseq
        %v3711 = vshrl.u32 %v3710, 7
        %v3712 = vsub.s32 4, %v3711
        %v3713 = vrot.slane %v2883, %v3712
        %v3714 = vlaneseq
        %v3715 = vshrl.u32 %v3714, 7
        %v3716 = vsub.s32 4, %v3715
        %v3717 = vrot.slane %v2884, %v3716
        %v3718 = vlaneseq
        %v3719 = vshrl.u32 %v3718, 7
        %v3720 = vsub.s32 4, %v3719
        %v3721 = vrot.slane %v2885, %v3720
        %v3722 = vlaneseq
        %v3723 = vshrl.u32 %v3722, 7
        %v3724 = vsub.s32 4, %v3723
        %v3725 = vrot.slane %v2886, %v3724
        %v3726 = vlaneseq
        %v3727 = vshrl.u32 %v3726, 7
        %v3728 = vsub.s32 4, %v3727
        %v3729 = vrot.slane %v2887, %v3728
        %v3730 = vlaneseq
        %v3731 = vshrl.u32 %v3730, 7
        %v3732 = vsub.s32 4, %v3731
        %v3733 = vrot.slane %v2888, %v3732
        %v3734 = vlaneseq
        %v3735 = vshrl.u32 %v3734, 7
        %v3736 = vsub.s32 4, %v3735
        %v3737 = vrot.slane %v2889, %v3736
        %v3738 = vlaneseq
        %v3739 = vshrl.u32 %v3738, 7
        %v3740 = vsub.s32 4, %v3739
        %v3741 = vrot.slane %v2890, %v3740
        %v3742 = vlaneseq
        %v3743 = vshrl.u32 %v3742, 7
        %v3744 = vsub.s32 4, %v3743
        %v3745 = vrot.slane %v2891, %v3744
        %v3746 = vlaneseq
        %v3747 = vshrl.u32 %v3746, 7
        %v3748 = vsub.s32 4, %v3747
        %v3749 = vrot.slane %v2892, %v3748
        %v3750 = vlaneseq
        %v3751 = vshrl.u32 %v3750, 7
        %v3752 = vsub.s32 4, %v3751
        %v3753 = vrot.slane %v2893, %v3752
        %v3754 = vlaneseq
        %v3755 = vshrl.u32 %v3754, 7
        %v3756 = vsub.s32 4, %v3755
        %v3757 = vrot.slane %v2894, %v3756
        %v3758 = vlaneseq
        %v3759 = vshrl.u32 %v3758, 7
        %v3760 = vsub.s32 4, %v3759
        %v3761 = vrot.slane %v2895, %v3760
        %v3762 = vlaneseq
        %v3763 = vshrl.u32 %v3762, 7
        %v3764 = vsub.s32 4, %v3763
        %v3765 = vrot.slane %v2896, %v3764
        %v3766 = vlaneseq
        %v3767 = vshrl.u32 %v3766, 7
        %v3768 = vsub.s32 4, %v3767
        %v3769 = vrot.slane %v2897, %v3768
        %v3770 = vlaneseq
        %v3771 = vshrl.u32 %v3770, 7
        %v3772 = vsub.s32 4, %v3771
        %v3773 = vrot.slane %v2898, %v3772
        %v3774 = vlaneseq
        %v3775 = vshrl.u32 %v3774, 7
        %v3776 = vsub.s32 4, %v3775
        %v3777 = vrot.slane %v2899, %v3776
        %v3778 = vlaneseq
        %v3779 = vshrl.u32 %v3778, 7
        %v3780 = vsub.s32 4, %v3779
        %v3781 = vrot.slane %v2900, %v3780
        %v3782 = vlaneseq
        %v3783 = vshrl.u32 %v3782, 7
        %v3784 = vsub.s32 4, %v3783
        %v3785 = vrot.slane %v2901, %v3784
        %v3786 = vlaneseq
        %v3787 = vshrl.u32 %v3786, 7
        %v3788 = vsub.s32 4, %v3787
        %v3789 = vrot.slane %v2902, %v3788
        %v3790 = vmul.f32 %v3660, %v3665
        %v3791 = vmul.f32 %v3660, %v3669
        %v3792 = vmul.f32 %v3660, %v3673
        %v3793 = vmul.f32 %v3660, %v3677
        %v3794 = vmul.f32 %v3660, %v3681
        %v3795 = vmul.f32 %v3660, %v3685
        %v3796 = vmul.f32 %v3660, %v3689
        %v3797 = vmul.f32 %v3660, %v3693
        %v3798 = vmul.f32 %v3660, %v3697
        %v3799 = vmul.f32 %v3660, %v3701
        %v3800 = vmul.f32 %v3660, %v3705
        %v3801 = vmul.f32 %v3660, %v3709
        %v3802 = vmul.f32 %v3660, %v3713
        %v3803 = vmul.f32 %v3660, %v3717
        %v3804 = vmul.f32 %v3660, %v3721
        %v3805 = vmul.f32 %v3660, %v3725
        %v3806 = vmul.f32 %v3660, %v3729
        %v3807 = vmul.f32 %v3660, %v3733
        %v3808 = vmul.f32 %v3660, %v3737
        %v3809 = vmul.f32 %v3660, %v3741
        %v3810 = vmul.f32 %v3660, %v3745
        %v3811 = vmul.f32 %v3660, %v3749
        %v3812 = vmul.f32 %v3660, %v3753
        %v3813 = vmul.f32 %v3660, %v3757
        %v3814 = vmul.f32 %v3660, %v3761
        %v3815 = vmul.f32 %v3660, %v3765
        %v3816 = vmul.f32 %v3660, %v3769
        %v3817 = vmul.f32 %v3660, %v3773
        %v3818 = vmul.f32 %v3660, %v3777
        %v3819 = vmul.f32 %v3660, %v3781
        %v3820 = vmul.f32 %v3660, %v3785
        %v3821 = vmul.f32 %v3660, %v3789
        %v3822 = vadd.f32 %v3626, %v3790
        %v3823 = vadd.f32 %v3627, %v3791
        %v3824 = vadd.f32 %v3628, %v3792
        %v3825 = vadd.f32 %v3629, %v3793
        %v3826 = vadd.f32 %v3630, %v3794
        %v3827 = vadd.f32 %v3631, %v3795
        %v3828 = vadd.f32 %v3632, %v3796
        %v3829 = vadd.f32 %v3633, %v3797
        %v3830 = vadd.f32 %v3634, %v3798
        %v3831 = vadd.f32 %v3635, %v3799
        %v3832 = vadd.f32 %v3636, %v3800
        %v3833 = vadd.f32 %v3637, %v3801
        %v3834 = vadd.f32 %v3638, %v3802
        %v3835 = vadd.f32 %v3639, %v3803
        %v3836 = vadd.f32 %v3640, %v3804
        %v3837 = vadd.f32 %v3641, %v3805
        %v3838 = vadd.f32 %v3642, %v3806
        %v3839 = vadd.f32 %v3643, %v3807
        %v3840 = vadd.f32 %v3644, %v3808
        %v3841 = vadd.f32 %v3645, %v3809
        %v3842 = vadd.f32 %v3646, %v3810
        %v3843 = vadd.f32 %v3647, %v3811
        %v3844 = vadd.f32 %v3648, %v3812
        %v3845 = vadd.f32 %v3649, %v3813
        %v3846 = vadd.f32 %v3650, %v3814
        %v3847 = vadd.f32 %v3651, %v3815
        %v3848 = vadd.f32 %v3652, %v3816
        %v3849 = vadd.f32 %v3653, %v3817
        %v3850 = vadd.f32 %v3654, %v3818
        %v3851 = vadd.f32 %v3655, %v3819
        %v3852 = vadd.f32 %v3656, %v3820
        %v3853 = vadd.f32 %v3657, %v3821
        %3854 = vset.pattern.permute.xlu0 5
        %3855 = vperm.xlu0 %3854, %v2904
        %v3856 = vpop.permute.xlu0 %3855
        %v3858 = vlaneseq
        %v3859 = vshrl.u32 %v3858, 7
        %v3860 = vsub.s32 5, %v3859
        %v3861 = vrot.slane %v2871, %v3860
        %v3862 = vlaneseq
        %v3863 = vshrl.u32 %v3862, 7
        %v3864 = vsub.s32 5, %v3863
        %v3865 = vrot.slane %v2872, %v3864
        %v3866 = vlaneseq
        %v3867 = vshrl.u32 %v3866, 7
        %v3868 = vsub.s32 5, %v3867
        %v3869 = vrot.slane %v2873, %v3868
        %v3870 = vlaneseq
        %v3871 = vshrl.u32 %v3870, 7
        %v3872 = vsub.s32 5, %v3871
        %v3873 = vrot.slane %v2874, %v3872
        %v3874 = vlaneseq
        %v3875 = vshrl.u32 %v3874, 7
        %v3876 = vsub.s32 5, %v3875
        %v3877 = vrot.slane %v2875, %v3876
        %v3878 = vlaneseq
        %v3879 = vshrl.u32 %v3878, 7
        %v3880 = vsub.s32 5, %v3879
        %v3881 = vrot.slane %v2876, %v3880
        %v3882 = vlaneseq
        %v3883 = vshrl.u32 %v3882, 7
        %v3884 = vsub.s32 5, %v3883
        %v3885 = vrot.slane %v2877, %v3884
        %v3886 = vlaneseq
        %v3887 = vshrl.u32 %v3886, 7
        %v3888 = vsub.s32 5, %v3887
        %v3889 = vrot.slane %v2878, %v3888
        %v3890 = vlaneseq
        %v3891 = vshrl.u32 %v3890, 7
        %v3892 = vsub.s32 5, %v3891
        %v3893 = vrot.slane %v2879, %v3892
        %v3894 = vlaneseq
        %v3895 = vshrl.u32 %v3894, 7
        %v3896 = vsub.s32 5, %v3895
        %v3897 = vrot.slane %v2880, %v3896
        %v3898 = vlaneseq
        %v3899 = vshrl.u32 %v3898, 7
        %v3900 = vsub.s32 5, %v3899
        %v3901 = vrot.slane %v2881, %v3900
        %v3902 = vlaneseq
        %v3903 = vshrl.u32 %v3902, 7
        %v3904 = vsub.s32 5, %v3903
        %v3905 = vrot.slane %v2882, %v3904
        %v3906 = vlaneseq
        %v3907 = vshrl.u32 %v3906, 7
        %v3908 = vsub.s32 5, %v3907
        %v3909 = vrot.slane %v2883, %v3908
        %v3910 = vlaneseq
        %v3911 = vshrl.u32 %v3910, 7
        %v3912 = vsub.s32 5, %v3911
        %v3913 = vrot.slane %v2884, %v3912
        %v3914 = vlaneseq
        %v3915 = vshrl.u32 %v3914, 7
        %v3916 = vsub.s32 5, %v3915
        %v3917 = vrot.slane %v2885, %v3916
        %v3918 = vlaneseq
        %v3919 = vshrl.u32 %v3918, 7
        %v3920 = vsub.s32 5, %v3919
        %v3921 = vrot.slane %v2886, %v3920
        %v3922 = vlaneseq
        %v3923 = vshrl.u32 %v3922, 7
        %v3924 = vsub.s32 5, %v3923
        %v3925 = vrot.slane %v2887, %v3924
        %v3926 = vlaneseq
        %v3927 = vshrl.u32 %v3926, 7
        %v3928 = vsub.s32 5, %v3927
        %v3929 = vrot.slane %v2888, %v3928
        %v3930 = vlaneseq
        %v3931 = vshrl.u32 %v3930, 7
        %v3932 = vsub.s32 5, %v3931
        %v3933 = vrot.slane %v2889, %v3932
        %v3934 = vlaneseq
        %v3935 = vshrl.u32 %v3934, 7
        %v3936 = vsub.s32 5, %v3935
        %v3937 = vrot.slane %v2890, %v3936
        %v3938 = vlaneseq
        %v3939 = vshrl.u32 %v3938, 7
        %v3940 = vsub.s32 5, %v3939
        %v3941 = vrot.slane %v2891, %v3940
        %v3942 = vlaneseq
        %v3943 = vshrl.u32 %v3942, 7
        %v3944 = vsub.s32 5, %v3943
        %v3945 = vrot.slane %v2892, %v3944
        %v3946 = vlaneseq
        %v3947 = vshrl.u32 %v3946, 7
        %v3948 = vsub.s32 5, %v3947
        %v3949 = vrot.slane %v2893, %v3948
        %v3950 = vlaneseq
        %v3951 = vshrl.u32 %v3950, 7
        %v3952 = vsub.s32 5, %v3951
        %v3953 = vrot.slane %v2894, %v3952
        %v3954 = vlaneseq
        %v3955 = vshrl.u32 %v3954, 7
        %v3956 = vsub.s32 5, %v3955
        %v3957 = vrot.slane %v2895, %v3956
        %v3958 = vlaneseq
        %v3959 = vshrl.u32 %v3958, 7
        %v3960 = vsub.s32 5, %v3959
        %v3961 = vrot.slane %v2896, %v3960
        %v3962 = vlaneseq
        %v3963 = vshrl.u32 %v3962, 7
        %v3964 = vsub.s32 5, %v3963
        %v3965 = vrot.slane %v2897, %v3964
        %v3966 = vlaneseq
        %v3967 = vshrl.u32 %v3966, 7
        %v3968 = vsub.s32 5, %v3967
        %v3969 = vrot.slane %v2898, %v3968
        %v3970 = vlaneseq
        %v3971 = vshrl.u32 %v3970, 7
        %v3972 = vsub.s32 5, %v3971
        %v3973 = vrot.slane %v2899, %v3972
        %v3974 = vlaneseq
        %v3975 = vshrl.u32 %v3974, 7
        %v3976 = vsub.s32 5, %v3975
        %v3977 = vrot.slane %v2900, %v3976
        %v3978 = vlaneseq
        %v3979 = vshrl.u32 %v3978, 7
        %v3980 = vsub.s32 5, %v3979
        %v3981 = vrot.slane %v2901, %v3980
        %v3982 = vlaneseq
        %v3983 = vshrl.u32 %v3982, 7
        %v3984 = vsub.s32 5, %v3983
        %v3985 = vrot.slane %v2902, %v3984
        %v3986 = vmul.f32 %v3856, %v3861
        %v3987 = vmul.f32 %v3856, %v3865
        %v3988 = vmul.f32 %v3856, %v3869
        %v3989 = vmul.f32 %v3856, %v3873
        %v3990 = vmul.f32 %v3856, %v3877
        %v3991 = vmul.f32 %v3856, %v3881
        %v3992 = vmul.f32 %v3856, %v3885
        %v3993 = vmul.f32 %v3856, %v3889
        %v3994 = vmul.f32 %v3856, %v3893
        %v3995 = vmul.f32 %v3856, %v3897
        %v3996 = vmul.f32 %v3856, %v3901
        %v3997 = vmul.f32 %v3856, %v3905
        %v3998 = vmul.f32 %v3856, %v3909
        %v3999 = vmul.f32 %v3856, %v3913
        %v4000 = vmul.f32 %v3856, %v3917
        %v4001 = vmul.f32 %v3856, %v3921
        %v4002 = vmul.f32 %v3856, %v3925
        %v4003 = vmul.f32 %v3856, %v3929
        %v4004 = vmul.f32 %v3856, %v3933
        %v4005 = vmul.f32 %v3856, %v3937
        %v4006 = vmul.f32 %v3856, %v3941
        %v4007 = vmul.f32 %v3856, %v3945
        %v4008 = vmul.f32 %v3856, %v3949
        %v4009 = vmul.f32 %v3856, %v3953
        %v4010 = vmul.f32 %v3856, %v3957
        %v4011 = vmul.f32 %v3856, %v3961
        %v4012 = vmul.f32 %v3856, %v3965
        %v4013 = vmul.f32 %v3856, %v3969
        %v4014 = vmul.f32 %v3856, %v3973
        %v4015 = vmul.f32 %v3856, %v3977
        %v4016 = vmul.f32 %v3856, %v3981
        %v4017 = vmul.f32 %v3856, %v3985
        %v4018 = vadd.f32 %v3822, %v3986
        %v4019 = vadd.f32 %v3823, %v3987
        %v4020 = vadd.f32 %v3824, %v3988
        %v4021 = vadd.f32 %v3825, %v3989
        %v4022 = vadd.f32 %v3826, %v3990
        %v4023 = vadd.f32 %v3827, %v3991
        %v4024 = vadd.f32 %v3828, %v3992
        %v4025 = vadd.f32 %v3829, %v3993
        %v4026 = vadd.f32 %v3830, %v3994
        %v4027 = vadd.f32 %v3831, %v3995
        %v4028 = vadd.f32 %v3832, %v3996
        %v4029 = vadd.f32 %v3833, %v3997
        %v4030 = vadd.f32 %v3834, %v3998
        %v4031 = vadd.f32 %v3835, %v3999
        %v4032 = vadd.f32 %v3836, %v4000
        %v4033 = vadd.f32 %v3837, %v4001
        %v4034 = vadd.f32 %v3838, %v4002
        %v4035 = vadd.f32 %v3839, %v4003
        %v4036 = vadd.f32 %v3840, %v4004
        %v4037 = vadd.f32 %v3841, %v4005
        %v4038 = vadd.f32 %v3842, %v4006
        %v4039 = vadd.f32 %v3843, %v4007
        %v4040 = vadd.f32 %v3844, %v4008
        %v4041 = vadd.f32 %v3845, %v4009
        %v4042 = vadd.f32 %v3846, %v4010
        %v4043 = vadd.f32 %v3847, %v4011
        %v4044 = vadd.f32 %v3848, %v4012
        %v4045 = vadd.f32 %v3849, %v4013
        %v4046 = vadd.f32 %v3850, %v4014
        %v4047 = vadd.f32 %v3851, %v4015
        %v4048 = vadd.f32 %v3852, %v4016
        %v4049 = vadd.f32 %v3853, %v4017
        %4050 = vset.pattern.permute.xlu0 6
        %4051 = vperm.xlu0 %4050, %v2904
        %v4052 = vpop.permute.xlu0 %4051
        %v4054 = vlaneseq
        %v4055 = vshrl.u32 %v4054, 7
        %v4056 = vsub.s32 6, %v4055
        %v4057 = vrot.slane %v2871, %v4056
        %v4058 = vlaneseq
        %v4059 = vshrl.u32 %v4058, 7
        %v4060 = vsub.s32 6, %v4059
        %v4061 = vrot.slane %v2872, %v4060
        %v4062 = vlaneseq
        %v4063 = vshrl.u32 %v4062, 7
        %v4064 = vsub.s32 6, %v4063
        %v4065 = vrot.slane %v2873, %v4064
        %v4066 = vlaneseq
        %v4067 = vshrl.u32 %v4066, 7
        %v4068 = vsub.s32 6, %v4067
        %v4069 = vrot.slane %v2874, %v4068
        %v4070 = vlaneseq
        %v4071 = vshrl.u32 %v4070, 7
        %v4072 = vsub.s32 6, %v4071
        %v4073 = vrot.slane %v2875, %v4072
        %v4074 = vlaneseq
        %v4075 = vshrl.u32 %v4074, 7
        %v4076 = vsub.s32 6, %v4075
        %v4077 = vrot.slane %v2876, %v4076
        %v4078 = vlaneseq
        %v4079 = vshrl.u32 %v4078, 7
        %v4080 = vsub.s32 6, %v4079
        %v4081 = vrot.slane %v2877, %v4080
        %v4082 = vlaneseq
        %v4083 = vshrl.u32 %v4082, 7
        %v4084 = vsub.s32 6, %v4083
        %v4085 = vrot.slane %v2878, %v4084
        %v4086 = vlaneseq
        %v4087 = vshrl.u32 %v4086, 7
        %v4088 = vsub.s32 6, %v4087
        %v4089 = vrot.slane %v2879, %v4088
        %v4090 = vlaneseq
        %v4091 = vshrl.u32 %v4090, 7
        %v4092 = vsub.s32 6, %v4091
        %v4093 = vrot.slane %v2880, %v4092
        %v4094 = vlaneseq
        %v4095 = vshrl.u32 %v4094, 7
        %v4096 = vsub.s32 6, %v4095
        %v4097 = vrot.slane %v2881, %v4096
        %v4098 = vlaneseq
        %v4099 = vshrl.u32 %v4098, 7
        %v4100 = vsub.s32 6, %v4099
        %v4101 = vrot.slane %v2882, %v4100
        %v4102 = vlaneseq
        %v4103 = vshrl.u32 %v4102, 7
        %v4104 = vsub.s32 6, %v4103
        %v4105 = vrot.slane %v2883, %v4104
        %v4106 = vlaneseq
        %v4107 = vshrl.u32 %v4106, 7
        %v4108 = vsub.s32 6, %v4107
        %v4109 = vrot.slane %v2884, %v4108
        %v4110 = vlaneseq
        %v4111 = vshrl.u32 %v4110, 7
        %v4112 = vsub.s32 6, %v4111
        %v4113 = vrot.slane %v2885, %v4112
        %v4114 = vlaneseq
        %v4115 = vshrl.u32 %v4114, 7
        %v4116 = vsub.s32 6, %v4115
        %v4117 = vrot.slane %v2886, %v4116
        %v4118 = vlaneseq
        %v4119 = vshrl.u32 %v4118, 7
        %v4120 = vsub.s32 6, %v4119
        %v4121 = vrot.slane %v2887, %v4120
        %v4122 = vlaneseq
        %v4123 = vshrl.u32 %v4122, 7
        %v4124 = vsub.s32 6, %v4123
        %v4125 = vrot.slane %v2888, %v4124
        %v4126 = vlaneseq
        %v4127 = vshrl.u32 %v4126, 7
        %v4128 = vsub.s32 6, %v4127
        %v4129 = vrot.slane %v2889, %v4128
        %v4130 = vlaneseq
        %v4131 = vshrl.u32 %v4130, 7
        %v4132 = vsub.s32 6, %v4131
        %v4133 = vrot.slane %v2890, %v4132
        %v4134 = vlaneseq
        %v4135 = vshrl.u32 %v4134, 7
        %v4136 = vsub.s32 6, %v4135
        %v4137 = vrot.slane %v2891, %v4136
        %v4138 = vlaneseq
        %v4139 = vshrl.u32 %v4138, 7
        %v4140 = vsub.s32 6, %v4139
        %v4141 = vrot.slane %v2892, %v4140
        %v4142 = vlaneseq
        %v4143 = vshrl.u32 %v4142, 7
        %v4144 = vsub.s32 6, %v4143
        %v4145 = vrot.slane %v2893, %v4144
        %v4146 = vlaneseq
        %v4147 = vshrl.u32 %v4146, 7
        %v4148 = vsub.s32 6, %v4147
        %v4149 = vrot.slane %v2894, %v4148
        %v4150 = vlaneseq
        %v4151 = vshrl.u32 %v4150, 7
        %v4152 = vsub.s32 6, %v4151
        %v4153 = vrot.slane %v2895, %v4152
        %v4154 = vlaneseq
        %v4155 = vshrl.u32 %v4154, 7
        %v4156 = vsub.s32 6, %v4155
        %v4157 = vrot.slane %v2896, %v4156
        %v4158 = vlaneseq
        %v4159 = vshrl.u32 %v4158, 7
        %v4160 = vsub.s32 6, %v4159
        %v4161 = vrot.slane %v2897, %v4160
        %v4162 = vlaneseq
        %v4163 = vshrl.u32 %v4162, 7
        %v4164 = vsub.s32 6, %v4163
        %v4165 = vrot.slane %v2898, %v4164
        %v4166 = vlaneseq
        %v4167 = vshrl.u32 %v4166, 7
        %v4168 = vsub.s32 6, %v4167
        %v4169 = vrot.slane %v2899, %v4168
        %v4170 = vlaneseq
        %v4171 = vshrl.u32 %v4170, 7
        %v4172 = vsub.s32 6, %v4171
        %v4173 = vrot.slane %v2900, %v4172
        %v4174 = vlaneseq
        %v4175 = vshrl.u32 %v4174, 7
        %v4176 = vsub.s32 6, %v4175
        %v4177 = vrot.slane %v2901, %v4176
        %v4178 = vlaneseq
        %v4179 = vshrl.u32 %v4178, 7
        %v4180 = vsub.s32 6, %v4179
        %v4181 = vrot.slane %v2902, %v4180
        %v4182 = vmul.f32 %v4052, %v4057
        %v4183 = vmul.f32 %v4052, %v4061
        %v4184 = vmul.f32 %v4052, %v4065
        %v4185 = vmul.f32 %v4052, %v4069
        %v4186 = vmul.f32 %v4052, %v4073
        %v4187 = vmul.f32 %v4052, %v4077
        %v4188 = vmul.f32 %v4052, %v4081
        %v4189 = vmul.f32 %v4052, %v4085
        %v4190 = vmul.f32 %v4052, %v4089
        %v4191 = vmul.f32 %v4052, %v4093
        %v4192 = vmul.f32 %v4052, %v4097
        %v4193 = vmul.f32 %v4052, %v4101
        %v4194 = vmul.f32 %v4052, %v4105
        %v4195 = vmul.f32 %v4052, %v4109
        %v4196 = vmul.f32 %v4052, %v4113
        %v4197 = vmul.f32 %v4052, %v4117
        %v4198 = vmul.f32 %v4052, %v4121
        %v4199 = vmul.f32 %v4052, %v4125
        %v4200 = vmul.f32 %v4052, %v4129
        %v4201 = vmul.f32 %v4052, %v4133
        %v4202 = vmul.f32 %v4052, %v4137
        %v4203 = vmul.f32 %v4052, %v4141
        %v4204 = vmul.f32 %v4052, %v4145
        %v4205 = vmul.f32 %v4052, %v4149
        %v4206 = vmul.f32 %v4052, %v4153
        %v4207 = vmul.f32 %v4052, %v4157
        %v4208 = vmul.f32 %v4052, %v4161
        %v4209 = vmul.f32 %v4052, %v4165
        %v4210 = vmul.f32 %v4052, %v4169
        %v4211 = vmul.f32 %v4052, %v4173
        %v4212 = vmul.f32 %v4052, %v4177
        %v4213 = vmul.f32 %v4052, %v4181
        %v4214 = vadd.f32 %v4018, %v4182
        %v4215 = vadd.f32 %v4019, %v4183
        %v4216 = vadd.f32 %v4020, %v4184
        %v4217 = vadd.f32 %v4021, %v4185
        %v4218 = vadd.f32 %v4022, %v4186
        %v4219 = vadd.f32 %v4023, %v4187
        %v4220 = vadd.f32 %v4024, %v4188
        %v4221 = vadd.f32 %v4025, %v4189
        %v4222 = vadd.f32 %v4026, %v4190
        %v4223 = vadd.f32 %v4027, %v4191
        %v4224 = vadd.f32 %v4028, %v4192
        %v4225 = vadd.f32 %v4029, %v4193
        %v4226 = vadd.f32 %v4030, %v4194
        %v4227 = vadd.f32 %v4031, %v4195
        %v4228 = vadd.f32 %v4032, %v4196
        %v4229 = vadd.f32 %v4033, %v4197
        %v4230 = vadd.f32 %v4034, %v4198
        %v4231 = vadd.f32 %v4035, %v4199
        %v4232 = vadd.f32 %v4036, %v4200
        %v4233 = vadd.f32 %v4037, %v4201
        %v4234 = vadd.f32 %v4038, %v4202
        %v4235 = vadd.f32 %v4039, %v4203
        %v4236 = vadd.f32 %v4040, %v4204
        %v4237 = vadd.f32 %v4041, %v4205
        %v4238 = vadd.f32 %v4042, %v4206
        %v4239 = vadd.f32 %v4043, %v4207
        %v4240 = vadd.f32 %v4044, %v4208
        %v4241 = vadd.f32 %v4045, %v4209
        %v4242 = vadd.f32 %v4046, %v4210
        %v4243 = vadd.f32 %v4047, %v4211
        %v4244 = vadd.f32 %v4048, %v4212
        %v4245 = vadd.f32 %v4049, %v4213
        %4246 = vset.pattern.permute.xlu0 7
        %4247 = vperm.xlu0 %4246, %v2904
        %v4248 = vpop.permute.xlu0 %4247
        %v4250 = vlaneseq
        %v4251 = vshrl.u32 %v4250, 7
        %v4252 = vsub.s32 7, %v4251
        %v4253 = vrot.slane %v2871, %v4252
        %v4254 = vlaneseq
        %v4255 = vshrl.u32 %v4254, 7
        %v4256 = vsub.s32 7, %v4255
        %v4257 = vrot.slane %v2872, %v4256
        %v4258 = vlaneseq
        %v4259 = vshrl.u32 %v4258, 7
        %v4260 = vsub.s32 7, %v4259
        %v4261 = vrot.slane %v2873, %v4260
        %v4262 = vlaneseq
        %v4263 = vshrl.u32 %v4262, 7
        %v4264 = vsub.s32 7, %v4263
        %v4265 = vrot.slane %v2874, %v4264
        %v4266 = vlaneseq
        %v4267 = vshrl.u32 %v4266, 7
        %v4268 = vsub.s32 7, %v4267
        %v4269 = vrot.slane %v2875, %v4268
        %v4270 = vlaneseq
        %v4271 = vshrl.u32 %v4270, 7
        %v4272 = vsub.s32 7, %v4271
        %v4273 = vrot.slane %v2876, %v4272
        %v4274 = vlaneseq
        %v4275 = vshrl.u32 %v4274, 7
        %v4276 = vsub.s32 7, %v4275
        %v4277 = vrot.slane %v2877, %v4276
        %v4278 = vlaneseq
        %v4279 = vshrl.u32 %v4278, 7
        %v4280 = vsub.s32 7, %v4279
        %v4281 = vrot.slane %v2878, %v4280
        %v4282 = vlaneseq
        %v4283 = vshrl.u32 %v4282, 7
        %v4284 = vsub.s32 7, %v4283
        %v4285 = vrot.slane %v2879, %v4284
        %v4286 = vlaneseq
        %v4287 = vshrl.u32 %v4286, 7
        %v4288 = vsub.s32 7, %v4287
        %v4289 = vrot.slane %v2880, %v4288
        %v4290 = vlaneseq
        %v4291 = vshrl.u32 %v4290, 7
        %v4292 = vsub.s32 7, %v4291
        %v4293 = vrot.slane %v2881, %v4292
        %v4294 = vlaneseq
        %v4295 = vshrl.u32 %v4294, 7
        %v4296 = vsub.s32 7, %v4295
        %v4297 = vrot.slane %v2882, %v4296
        %v4298 = vlaneseq
        %v4299 = vshrl.u32 %v4298, 7
        %v4300 = vsub.s32 7, %v4299
        %v4301 = vrot.slane %v2883, %v4300
        %v4302 = vlaneseq
        %v4303 = vshrl.u32 %v4302, 7
        %v4304 = vsub.s32 7, %v4303
        %v4305 = vrot.slane %v2884, %v4304
        %v4306 = vlaneseq
        %v4307 = vshrl.u32 %v4306, 7
        %v4308 = vsub.s32 7, %v4307
        %v4309 = vrot.slane %v2885, %v4308
        %v4310 = vlaneseq
        %v4311 = vshrl.u32 %v4310, 7
        %v4312 = vsub.s32 7, %v4311
        %v4313 = vrot.slane %v2886, %v4312
        %v4314 = vlaneseq
        %v4315 = vshrl.u32 %v4314, 7
        %v4316 = vsub.s32 7, %v4315
        %v4317 = vrot.slane %v2887, %v4316
        %v4318 = vlaneseq
        %v4319 = vshrl.u32 %v4318, 7
        %v4320 = vsub.s32 7, %v4319
        %v4321 = vrot.slane %v2888, %v4320
        %v4322 = vlaneseq
        %v4323 = vshrl.u32 %v4322, 7
        %v4324 = vsub.s32 7, %v4323
        %v4325 = vrot.slane %v2889, %v4324
        %v4326 = vlaneseq
        %v4327 = vshrl.u32 %v4326, 7
        %v4328 = vsub.s32 7, %v4327
        %v4329 = vrot.slane %v2890, %v4328
        %v4330 = vlaneseq
        %v4331 = vshrl.u32 %v4330, 7
        %v4332 = vsub.s32 7, %v4331
        %v4333 = vrot.slane %v2891, %v4332
        %v4334 = vlaneseq
        %v4335 = vshrl.u32 %v4334, 7
        %v4336 = vsub.s32 7, %v4335
        %v4337 = vrot.slane %v2892, %v4336
        %v4338 = vlaneseq
        %v4339 = vshrl.u32 %v4338, 7
        %v4340 = vsub.s32 7, %v4339
        %v4341 = vrot.slane %v2893, %v4340
        %v4342 = vlaneseq
        %v4343 = vshrl.u32 %v4342, 7
        %v4344 = vsub.s32 7, %v4343
        %v4345 = vrot.slane %v2894, %v4344
        %v4346 = vlaneseq
        %v4347 = vshrl.u32 %v4346, 7
        %v4348 = vsub.s32 7, %v4347
        %v4349 = vrot.slane %v2895, %v4348
        %v4350 = vlaneseq
        %v4351 = vshrl.u32 %v4350, 7
        %v4352 = vsub.s32 7, %v4351
        %v4353 = vrot.slane %v2896, %v4352
        %v4354 = vlaneseq
        %v4355 = vshrl.u32 %v4354, 7
        %v4356 = vsub.s32 7, %v4355
        %v4357 = vrot.slane %v2897, %v4356
        %v4358 = vlaneseq
        %v4359 = vshrl.u32 %v4358, 7
        %v4360 = vsub.s32 7, %v4359
        %v4361 = vrot.slane %v2898, %v4360
        %v4362 = vlaneseq
        %v4363 = vshrl.u32 %v4362, 7
        %v4364 = vsub.s32 7, %v4363
        %v4365 = vrot.slane %v2899, %v4364
        %v4366 = vlaneseq
        %v4367 = vshrl.u32 %v4366, 7
        %v4368 = vsub.s32 7, %v4367
        %v4369 = vrot.slane %v2900, %v4368
        %v4370 = vlaneseq
        %v4371 = vshrl.u32 %v4370, 7
        %v4372 = vsub.s32 7, %v4371
        %v4373 = vrot.slane %v2901, %v4372
        %v4374 = vlaneseq
        %v4375 = vshrl.u32 %v4374, 7
        %v4376 = vsub.s32 7, %v4375
        %v4377 = vrot.slane %v2902, %v4376
        %v4378 = vmul.f32 %v4248, %v4253
        %v4379 = vmul.f32 %v4248, %v4257
        %v4380 = vmul.f32 %v4248, %v4261
        %v4381 = vmul.f32 %v4248, %v4265
        %v4382 = vmul.f32 %v4248, %v4269
        %v4383 = vmul.f32 %v4248, %v4273
        %v4384 = vmul.f32 %v4248, %v4277
        %v4385 = vmul.f32 %v4248, %v4281
        %v4386 = vmul.f32 %v4248, %v4285
        %v4387 = vmul.f32 %v4248, %v4289
        %v4388 = vmul.f32 %v4248, %v4293
        %v4389 = vmul.f32 %v4248, %v4297
        %v4390 = vmul.f32 %v4248, %v4301
        %v4391 = vmul.f32 %v4248, %v4305
        %v4392 = vmul.f32 %v4248, %v4309
        %v4393 = vmul.f32 %v4248, %v4313
        %v4394 = vmul.f32 %v4248, %v4317
        %v4395 = vmul.f32 %v4248, %v4321
        %v4396 = vmul.f32 %v4248, %v4325
        %v4397 = vmul.f32 %v4248, %v4329
        %v4398 = vmul.f32 %v4248, %v4333
        %v4399 = vmul.f32 %v4248, %v4337
        %v4400 = vmul.f32 %v4248, %v4341
        %v4401 = vmul.f32 %v4248, %v4345
        %v4402 = vmul.f32 %v4248, %v4349
        %v4403 = vmul.f32 %v4248, %v4353
        %v4404 = vmul.f32 %v4248, %v4357
        %v4405 = vmul.f32 %v4248, %v4361
        %v4406 = vmul.f32 %v4248, %v4365
        %v4407 = vmul.f32 %v4248, %v4369
        %v4408 = vmul.f32 %v4248, %v4373
        %v4409 = vmul.f32 %v4248, %v4377
        %v4410 = vadd.f32 %v4214, %v4378
        %v4411 = vadd.f32 %v4215, %v4379
        %v4412 = vadd.f32 %v4216, %v4380
        %v4413 = vadd.f32 %v4217, %v4381
        %v4414 = vadd.f32 %v4218, %v4382
        %v4415 = vadd.f32 %v4219, %v4383
        %v4416 = vadd.f32 %v4220, %v4384
        %v4417 = vadd.f32 %v4221, %v4385
        %v4418 = vadd.f32 %v4222, %v4386
        %v4419 = vadd.f32 %v4223, %v4387
        %v4420 = vadd.f32 %v4224, %v4388
        %v4421 = vadd.f32 %v4225, %v4389
        %v4422 = vadd.f32 %v4226, %v4390
        %v4423 = vadd.f32 %v4227, %v4391
        %v4424 = vadd.f32 %v4228, %v4392
        %v4425 = vadd.f32 %v4229, %v4393
        %v4426 = vadd.f32 %v4230, %v4394
        %v4427 = vadd.f32 %v4231, %v4395
        %v4428 = vadd.f32 %v4232, %v4396
        %v4429 = vadd.f32 %v4233, %v4397
        %v4430 = vadd.f32 %v4234, %v4398
        %v4431 = vadd.f32 %v4235, %v4399
        %v4432 = vadd.f32 %v4236, %v4400
        %v4433 = vadd.f32 %v4237, %v4401
        %v4434 = vadd.f32 %v4238, %v4402
        %v4435 = vadd.f32 %v4239, %v4403
        %v4436 = vadd.f32 %v4240, %v4404
        %v4437 = vadd.f32 %v4241, %v4405
        %v4438 = vadd.f32 %v4242, %v4406
        %v4439 = vadd.f32 %v4243, %v4407
        %v4440 = vadd.f32 %v4244, %v4408
        %v4441 = vadd.f32 %v4245, %v4409
        %s4442 = scalar_lea.vmem %s6, %s1036
        %v4443 = vld [vmem:[%s4442] sm:$0xff]
        %4445 = vset.pattern.permute.xlu0 0
        %4446 = vperm.xlu0 %4445, %v4443
        %v4447 = vpop.permute.xlu0 %4446
        %v4449 = vadd.f32 %v4410, %v4447
        %v4450 = vadd.f32 %v4411, %v4447
        %v4451 = vadd.f32 %v4412, %v4447
        %v4452 = vadd.f32 %v4413, %v4447
        %v4453 = vadd.f32 %v4414, %v4447
        %v4454 = vadd.f32 %v4415, %v4447
        %v4455 = vadd.f32 %v4416, %v4447
        %v4456 = vadd.f32 %v4417, %v4447
        %v4457 = vadd.f32 %v4418, %v4447
        %v4458 = vadd.f32 %v4419, %v4447
        %v4459 = vadd.f32 %v4420, %v4447
        %v4460 = vadd.f32 %v4421, %v4447
        %v4461 = vadd.f32 %v4422, %v4447
        %v4462 = vadd.f32 %v4423, %v4447
        %v4463 = vadd.f32 %v4424, %v4447
        %v4464 = vadd.f32 %v4425, %v4447
        %v4465 = vadd.f32 %v4426, %v4447
        %v4466 = vadd.f32 %v4427, %v4447
        %v4467 = vadd.f32 %v4428, %v4447
        %v4468 = vadd.f32 %v4429, %v4447
        %v4469 = vadd.f32 %v4430, %v4447
        %v4470 = vadd.f32 %v4431, %v4447
        %v4471 = vadd.f32 %v4432, %v4447
        %v4472 = vadd.f32 %v4433, %v4447
        %v4473 = vadd.f32 %v4434, %v4447
        %v4474 = vadd.f32 %v4435, %v4447
        %v4475 = vadd.f32 %v4436, %v4447
        %v4476 = vadd.f32 %v4437, %v4447
        %v4477 = vadd.f32 %v4438, %v4447
        %v4478 = vadd.f32 %v4439, %v4447
        %v4479 = vadd.f32 %v4440, %v4447
        %v4480 = vadd.f32 %v4441, %v4447
        %v4481 = vadd.f32 %v4449, %v571
        %v4482 = vadd.f32 %v4450, %v572
        %v4483 = vadd.f32 %v4451, %v573
        %v4484 = vadd.f32 %v4452, %v574
        %v4485 = vadd.f32 %v4453, %v575
        %v4486 = vadd.f32 %v4454, %v576
        %v4487 = vadd.f32 %v4455, %v577
        %v4488 = vadd.f32 %v4456, %v578
        %v4489 = vadd.f32 %v4457, %v579
        %v4490 = vadd.f32 %v4458, %v580
        %v4491 = vadd.f32 %v4459, %v581
        %v4492 = vadd.f32 %v4460, %v582
        %v4493 = vadd.f32 %v4461, %v583
        %v4494 = vadd.f32 %v4462, %v584
        %v4495 = vadd.f32 %v4463, %v585
        %v4496 = vadd.f32 %v4464, %v586
        %v4497 = vadd.f32 %v4465, %v587
        %v4498 = vadd.f32 %v4466, %v588
        %v4499 = vadd.f32 %v4467, %v589
        %v4500 = vadd.f32 %v4468, %v590
        %v4501 = vadd.f32 %v4469, %v591
        %v4502 = vadd.f32 %v4470, %v592
        %v4503 = vadd.f32 %v4471, %v593
        %v4504 = vadd.f32 %v4472, %v594
        %v4505 = vadd.f32 %v4473, %v595
        %v4506 = vadd.f32 %v4474, %v596
        %v4507 = vadd.f32 %v4475, %v597
        %v4508 = vadd.f32 %v4476, %v598
        %v4509 = vadd.f32 %v4477, %v599
        %v4510 = vadd.f32 %v4478, %v600
        %v4511 = vadd.f32 %v4479, %v601
        %v4512 = vadd.f32 %v4480, %v602
        %4513 = vst [vmem:[%s499] sm:$0xff] %v4481
        %4514 = vst [vmem:[%s499 + $0x8] sm:$0xff] %v4482
        %4515 = vst [vmem:[%s499 + $0x10] sm:$0xff] %v4483
        %4516 = vst [vmem:[%s499 + $0x18] sm:$0xff] %v4484
        %4517 = vst [vmem:[%s499 + $0x20] sm:$0xff] %v4485
        %4518 = vst [vmem:[%s499 + $0x28] sm:$0xff] %v4486
        %4519 = vst [vmem:[%s499 + $0x30] sm:$0xff] %v4487
        %4520 = vst [vmem:[%s499 + $0x38] sm:$0xff] %v4488
        %4521 = vst [vmem:[%s499 + $0x40] sm:$0xff] %v4489
        %4522 = vst [vmem:[%s499 + $0x48] sm:$0xff] %v4490
        %4523 = vst [vmem:[%s499 + $0x50] sm:$0xff] %v4491
        %4524 = vst [vmem:[%s499 + $0x58] sm:$0xff] %v4492
        %4525 = vst [vmem:[%s499 + $0x60] sm:$0xff] %v4493
        %4526 = vst [vmem:[%s499 + $0x68] sm:$0xff] %v4494
        %4527 = vst [vmem:[%s499 + $0x70] sm:$0xff] %v4495
        %4528 = vst [vmem:[%s499 + $0x78] sm:$0xff] %v4496
        %4529 = vst [vmem:[%s499 + $0x80] sm:$0xff] %v4497
        %4530 = vst [vmem:[%s499 + $0x88] sm:$0xff] %v4498
        %4531 = vst [vmem:[%s499 + $0x90] sm:$0xff] %v4499
        %4532 = vst [vmem:[%s499 + $0x98] sm:$0xff] %v4500
        %4533 = vst [vmem:[%s499 + $0xa0] sm:$0xff] %v4501
        %4534 = vst [vmem:[%s499 + $0xa8] sm:$0xff] %v4502
        %4535 = vst [vmem:[%s499 + $0xb0] sm:$0xff] %v4503
        %4536 = vst [vmem:[%s499 + $0xb8] sm:$0xff] %v4504
        %4537 = vst [vmem:[%s499 + $0xc0] sm:$0xff] %v4505
        %4538 = vst [vmem:[%s499 + $0xc8] sm:$0xff] %v4506
        %4539 = vst [vmem:[%s499 + $0xd0] sm:$0xff] %v4507
        %4540 = vst [vmem:[%s499 + $0xd8] sm:$0xff] %v4508
        %4541 = vst [vmem:[%s499 + $0xe0] sm:$0xff] %v4509
        %4542 = vst [vmem:[%s499 + $0xe8] sm:$0xff] %v4510
        %4543 = vst [vmem:[%s499 + $0xf0] sm:$0xff] %v4511
        %4544 = vst [vmem:[%s499 + $0xf8] sm:$0xff] %v4512
        %v4545 = vld [vmem:[%s499] sm:$0xff]
        %v4546 = vld [vmem:[%s499 + $0x8] sm:$0xff]
        %v4547 = vld [vmem:[%s499 + $0x10] sm:$0xff]
        %v4548 = vld [vmem:[%s499 + $0x18] sm:$0xff]
        %v4549 = vld [vmem:[%s499 + $0x20] sm:$0xff]
        %v4550 = vld [vmem:[%s499 + $0x28] sm:$0xff]
        %v4551 = vld [vmem:[%s499 + $0x30] sm:$0xff]
        %v4552 = vld [vmem:[%s499 + $0x38] sm:$0xff]
        %v4553 = vld [vmem:[%s499 + $0x40] sm:$0xff]
        %v4554 = vld [vmem:[%s499 + $0x48] sm:$0xff]
        %v4555 = vld [vmem:[%s499 + $0x50] sm:$0xff]
        %v4556 = vld [vmem:[%s499 + $0x58] sm:$0xff]
        %v4557 = vld [vmem:[%s499 + $0x60] sm:$0xff]
        %v4558 = vld [vmem:[%s499 + $0x68] sm:$0xff]
        %v4559 = vld [vmem:[%s499 + $0x70] sm:$0xff]
        %v4560 = vld [vmem:[%s499 + $0x78] sm:$0xff]
        %v4561 = vld [vmem:[%s499 + $0x80] sm:$0xff]
        %v4562 = vld [vmem:[%s499 + $0x88] sm:$0xff]
        %v4563 = vld [vmem:[%s499 + $0x90] sm:$0xff]
        %v4564 = vld [vmem:[%s499 + $0x98] sm:$0xff]
        %v4565 = vld [vmem:[%s499 + $0xa0] sm:$0xff]
        %v4566 = vld [vmem:[%s499 + $0xa8] sm:$0xff]
        %v4567 = vld [vmem:[%s499 + $0xb0] sm:$0xff]
        %v4568 = vld [vmem:[%s499 + $0xb8] sm:$0xff]
        %v4569 = vld [vmem:[%s499 + $0xc0] sm:$0xff]
        %v4570 = vld [vmem:[%s499 + $0xc8] sm:$0xff]
        %v4571 = vld [vmem:[%s499 + $0xd0] sm:$0xff]
        %v4572 = vld [vmem:[%s499 + $0xd8] sm:$0xff]
        %v4573 = vld [vmem:[%s499 + $0xe0] sm:$0xff]
        %v4574 = vld [vmem:[%s499 + $0xe8] sm:$0xff]
        %v4575 = vld [vmem:[%s499 + $0xf0] sm:$0xff]
        %v4576 = vld [vmem:[%s499 + $0xf8] sm:$0xff]
        %s4577 = scalar_lea.vmem %s7, %s36
        %v4578 = vld [vmem:[%s4577] sm:$0x1]
        %s4579 = scalar_lea.vmem %s8, %s36
        %v4580 = vld [vmem:[%s4579] sm:$0x1]
        %4581 = vadd.xlane.f32.xlu0 %v4545
        %v4582 = vpop.xlane.xlu0 %4581
        %4583 = vadd.xlane.f32.xlu0 %v4546
        %v4584 = vpop.xlane.xlu0 %4583
        %4585 = vadd.xlane.f32.xlu0 %v4547
        %v4586 = vpop.xlane.xlu0 %4585
        %4587 = vadd.xlane.f32.xlu0 %v4548
        %v4588 = vpop.xlane.xlu0 %4587
        %4589 = vadd.xlane.f32.xlu0 %v4549
        %v4590 = vpop.xlane.xlu0 %4589
        %4591 = vadd.xlane.f32.xlu0 %v4550
        %v4592 = vpop.xlane.xlu0 %4591
        %4593 = vadd.xlane.f32.xlu0 %v4551
        %v4594 = vpop.xlane.xlu0 %4593
        %4595 = vadd.xlane.f32.xlu0 %v4552
        %v4596 = vpop.xlane.xlu0 %4595
        %4597 = vadd.xlane.f32.xlu0 %v4553
        %v4598 = vpop.xlane.xlu0 %4597
        %4599 = vadd.xlane.f32.xlu0 %v4554
        %v4600 = vpop.xlane.xlu0 %4599
        %4601 = vadd.xlane.f32.xlu0 %v4555
        %v4602 = vpop.xlane.xlu0 %4601
        %4603 = vadd.xlane.f32.xlu0 %v4556
        %v4604 = vpop.xlane.xlu0 %4603
        %4605 = vadd.xlane.f32.xlu0 %v4557
        %v4606 = vpop.xlane.xlu0 %4605
        %4607 = vadd.xlane.f32.xlu0 %v4558
        %v4608 = vpop.xlane.xlu0 %4607
        %4609 = vadd.xlane.f32.xlu0 %v4559
        %v4610 = vpop.xlane.xlu0 %4609
        %4611 = vadd.xlane.f32.xlu0 %v4560
        %v4612 = vpop.xlane.xlu0 %4611
        %4613 = vadd.xlane.f32.xlu0 %v4561
        %v4614 = vpop.xlane.xlu0 %4613
        %4615 = vadd.xlane.f32.xlu0 %v4562
        %v4616 = vpop.xlane.xlu0 %4615
        %4617 = vadd.xlane.f32.xlu0 %v4563
        %v4618 = vpop.xlane.xlu0 %4617
        %4619 = vadd.xlane.f32.xlu0 %v4564
        %v4620 = vpop.xlane.xlu0 %4619
        %4621 = vadd.xlane.f32.xlu0 %v4565
        %v4622 = vpop.xlane.xlu0 %4621
        %4623 = vadd.xlane.f32.xlu0 %v4566
        %v4624 = vpop.xlane.xlu0 %4623
        %4625 = vadd.xlane.f32.xlu0 %v4567
        %v4626 = vpop.xlane.xlu0 %4625
        %4627 = vadd.xlane.f32.xlu0 %v4568
        %v4628 = vpop.xlane.xlu0 %4627
        %4629 = vadd.xlane.f32.xlu0 %v4569
        %v4630 = vpop.xlane.xlu0 %4629
        %4631 = vadd.xlane.f32.xlu0 %v4570
        %v4632 = vpop.xlane.xlu0 %4631
        %4633 = vadd.xlane.f32.xlu0 %v4571
        %v4634 = vpop.xlane.xlu0 %4633
        %4635 = vadd.xlane.f32.xlu0 %v4572
        %v4636 = vpop.xlane.xlu0 %4635
        %4637 = vadd.xlane.f32.xlu0 %v4573
        %v4638 = vpop.xlane.xlu0 %4637
        %4639 = vadd.xlane.f32.xlu0 %v4574
        %v4640 = vpop.xlane.xlu0 %4639
        %4641 = vadd.xlane.f32.xlu0 %v4575
        %v4642 = vpop.xlane.xlu0 %4641
        %4643 = vadd.xlane.f32.xlu0 %v4576
        %v4644 = vpop.xlane.xlu0 %4643
        %v4645 = vmul.f32 %v4582, %v671
        %v4646 = vmul.f32 %v4584, %v671
        %v4647 = vmul.f32 %v4586, %v671
        %v4648 = vmul.f32 %v4588, %v671
        %v4649 = vmul.f32 %v4590, %v671
        %v4650 = vmul.f32 %v4592, %v671
        %v4651 = vmul.f32 %v4594, %v671
        %v4652 = vmul.f32 %v4596, %v671
        %v4653 = vmul.f32 %v4598, %v671
        %v4654 = vmul.f32 %v4600, %v671
        %v4655 = vmul.f32 %v4602, %v671
        %v4656 = vmul.f32 %v4604, %v671
        %v4657 = vmul.f32 %v4606, %v671
        %v4658 = vmul.f32 %v4608, %v671
        %v4659 = vmul.f32 %v4610, %v671
        %v4660 = vmul.f32 %v4612, %v671
        %v4661 = vmul.f32 %v4614, %v671
        %v4662 = vmul.f32 %v4616, %v671
        %v4663 = vmul.f32 %v4618, %v671
        %v4664 = vmul.f32 %v4620, %v671
        %v4665 = vmul.f32 %v4622, %v671
        %v4666 = vmul.f32 %v4624, %v671
        %v4667 = vmul.f32 %v4626, %v671
        %v4668 = vmul.f32 %v4628, %v671
        %v4669 = vmul.f32 %v4630, %v671
        %v4670 = vmul.f32 %v4632, %v671
        %v4671 = vmul.f32 %v4634, %v671
        %v4672 = vmul.f32 %v4636, %v671
        %v4673 = vmul.f32 %v4638, %v671
        %v4674 = vmul.f32 %v4640, %v671
        %v4675 = vmul.f32 %v4642, %v671
        %v4676 = vmul.f32 %v4644, %v671
        %v4677 = vsub.f32 %v4545, %v4645
        %v4678 = vsub.f32 %v4546, %v4646
        %v4679 = vsub.f32 %v4547, %v4647
        %v4680 = vsub.f32 %v4548, %v4648
        %v4681 = vsub.f32 %v4549, %v4649
        %v4682 = vsub.f32 %v4550, %v4650
        %v4683 = vsub.f32 %v4551, %v4651
        %v4684 = vsub.f32 %v4552, %v4652
        %v4685 = vsub.f32 %v4553, %v4653
        %v4686 = vsub.f32 %v4554, %v4654
        %v4687 = vsub.f32 %v4555, %v4655
        %v4688 = vsub.f32 %v4556, %v4656
        %v4689 = vsub.f32 %v4557, %v4657
        %v4690 = vsub.f32 %v4558, %v4658
        %v4691 = vsub.f32 %v4559, %v4659
        %v4692 = vsub.f32 %v4560, %v4660
        %v4693 = vsub.f32 %v4561, %v4661
        %v4694 = vsub.f32 %v4562, %v4662
        %v4695 = vsub.f32 %v4563, %v4663
        %v4696 = vsub.f32 %v4564, %v4664
        %v4697 = vsub.f32 %v4565, %v4665
        %v4698 = vsub.f32 %v4566, %v4666
        %v4699 = vsub.f32 %v4567, %v4667
        %v4700 = vsub.f32 %v4568, %v4668
        %v4701 = vsub.f32 %v4569, %v4669
        %v4702 = vsub.f32 %v4570, %v4670
        %v4703 = vsub.f32 %v4571, %v4671
        %v4704 = vsub.f32 %v4572, %v4672
        %v4705 = vsub.f32 %v4573, %v4673
        %v4706 = vsub.f32 %v4574, %v4674
        %v4707 = vsub.f32 %v4575, %v4675
        %v4708 = vsub.f32 %v4576, %v4676
        %v4709 = vmul.f32 %v4677, %v4677
        %v4710 = vmul.f32 %v4678, %v4678
        %v4711 = vmul.f32 %v4679, %v4679
        %v4712 = vmul.f32 %v4680, %v4680
        %v4713 = vmul.f32 %v4681, %v4681
        %v4714 = vmul.f32 %v4682, %v4682
        %v4715 = vmul.f32 %v4683, %v4683
        %v4716 = vmul.f32 %v4684, %v4684
        %v4717 = vmul.f32 %v4685, %v4685
        %v4718 = vmul.f32 %v4686, %v4686
        %v4719 = vmul.f32 %v4687, %v4687
        %v4720 = vmul.f32 %v4688, %v4688
        %v4721 = vmul.f32 %v4689, %v4689
        %v4722 = vmul.f32 %v4690, %v4690
        %v4723 = vmul.f32 %v4691, %v4691
        %v4724 = vmul.f32 %v4692, %v4692
        %v4725 = vmul.f32 %v4693, %v4693
        %v4726 = vmul.f32 %v4694, %v4694
        %v4727 = vmul.f32 %v4695, %v4695
        %v4728 = vmul.f32 %v4696, %v4696
        %v4729 = vmul.f32 %v4697, %v4697
        %v4730 = vmul.f32 %v4698, %v4698
        %v4731 = vmul.f32 %v4699, %v4699
        %v4732 = vmul.f32 %v4700, %v4700
        %v4733 = vmul.f32 %v4701, %v4701
        %v4734 = vmul.f32 %v4702, %v4702
        %v4735 = vmul.f32 %v4703, %v4703
        %v4736 = vmul.f32 %v4704, %v4704
        %v4737 = vmul.f32 %v4705, %v4705
        %v4738 = vmul.f32 %v4706, %v4706
        %v4739 = vmul.f32 %v4707, %v4707
        %v4740 = vmul.f32 %v4708, %v4708
        %4741 = vadd.xlane.f32.xlu0 %v4709
        %v4742 = vpop.xlane.xlu0 %4741
        %4743 = vadd.xlane.f32.xlu0 %v4710
        %v4744 = vpop.xlane.xlu0 %4743
        %4745 = vadd.xlane.f32.xlu0 %v4711
        %v4746 = vpop.xlane.xlu0 %4745
        %4747 = vadd.xlane.f32.xlu0 %v4712
        %v4748 = vpop.xlane.xlu0 %4747
        %4749 = vadd.xlane.f32.xlu0 %v4713
        %v4750 = vpop.xlane.xlu0 %4749
        %4751 = vadd.xlane.f32.xlu0 %v4714
        %v4752 = vpop.xlane.xlu0 %4751
        %4753 = vadd.xlane.f32.xlu0 %v4715
        %v4754 = vpop.xlane.xlu0 %4753
        %4755 = vadd.xlane.f32.xlu0 %v4716
        %v4756 = vpop.xlane.xlu0 %4755
        %4757 = vadd.xlane.f32.xlu0 %v4717
        %v4758 = vpop.xlane.xlu0 %4757
        %4759 = vadd.xlane.f32.xlu0 %v4718
        %v4760 = vpop.xlane.xlu0 %4759
        %4761 = vadd.xlane.f32.xlu0 %v4719
        %v4762 = vpop.xlane.xlu0 %4761
        %4763 = vadd.xlane.f32.xlu0 %v4720
        %v4764 = vpop.xlane.xlu0 %4763
        %4765 = vadd.xlane.f32.xlu0 %v4721
        %v4766 = vpop.xlane.xlu0 %4765
        %4767 = vadd.xlane.f32.xlu0 %v4722
        %v4768 = vpop.xlane.xlu0 %4767
        %4769 = vadd.xlane.f32.xlu0 %v4723
        %v4770 = vpop.xlane.xlu0 %4769
        %4771 = vadd.xlane.f32.xlu0 %v4724
        %v4772 = vpop.xlane.xlu0 %4771
        %4773 = vadd.xlane.f32.xlu0 %v4725
        %v4774 = vpop.xlane.xlu0 %4773
        %4775 = vadd.xlane.f32.xlu0 %v4726
        %v4776 = vpop.xlane.xlu0 %4775
        %4777 = vadd.xlane.f32.xlu0 %v4727
        %v4778 = vpop.xlane.xlu0 %4777
        %4779 = vadd.xlane.f32.xlu0 %v4728
        %v4780 = vpop.xlane.xlu0 %4779
        %4781 = vadd.xlane.f32.xlu0 %v4729
        %v4782 = vpop.xlane.xlu0 %4781
        %4783 = vadd.xlane.f32.xlu0 %v4730
        %v4784 = vpop.xlane.xlu0 %4783
        %4785 = vadd.xlane.f32.xlu0 %v4731
        %v4786 = vpop.xlane.xlu0 %4785
        %4787 = vadd.xlane.f32.xlu0 %v4732
        %v4788 = vpop.xlane.xlu0 %4787
        %4789 = vadd.xlane.f32.xlu0 %v4733
        %v4790 = vpop.xlane.xlu0 %4789
        %4791 = vadd.xlane.f32.xlu0 %v4734
        %v4792 = vpop.xlane.xlu0 %4791
        %4793 = vadd.xlane.f32.xlu0 %v4735
        %v4794 = vpop.xlane.xlu0 %4793
        %4795 = vadd.xlane.f32.xlu0 %v4736
        %v4796 = vpop.xlane.xlu0 %4795
        %4797 = vadd.xlane.f32.xlu0 %v4737
        %v4798 = vpop.xlane.xlu0 %4797
        %4799 = vadd.xlane.f32.xlu0 %v4738
        %v4800 = vpop.xlane.xlu0 %4799
        %4801 = vadd.xlane.f32.xlu0 %v4739
        %v4802 = vpop.xlane.xlu0 %4801
        %4803 = vadd.xlane.f32.xlu0 %v4740
        %v4804 = vpop.xlane.xlu0 %4803
        %v4805 = vmul.f32 %v4742, %v671
        %v4806 = vmul.f32 %v4744, %v671
        %v4807 = vmul.f32 %v4746, %v671
        %v4808 = vmul.f32 %v4748, %v671
        %v4809 = vmul.f32 %v4750, %v671
        %v4810 = vmul.f32 %v4752, %v671
        %v4811 = vmul.f32 %v4754, %v671
        %v4812 = vmul.f32 %v4756, %v671
        %v4813 = vmul.f32 %v4758, %v671
        %v4814 = vmul.f32 %v4760, %v671
        %v4815 = vmul.f32 %v4762, %v671
        %v4816 = vmul.f32 %v4764, %v671
        %v4817 = vmul.f32 %v4766, %v671
        %v4818 = vmul.f32 %v4768, %v671
        %v4819 = vmul.f32 %v4770, %v671
        %v4820 = vmul.f32 %v4772, %v671
        %v4821 = vmul.f32 %v4774, %v671
        %v4822 = vmul.f32 %v4776, %v671
        %v4823 = vmul.f32 %v4778, %v671
        %v4824 = vmul.f32 %v4780, %v671
        %v4825 = vmul.f32 %v4782, %v671
        %v4826 = vmul.f32 %v4784, %v671
        %v4827 = vmul.f32 %v4786, %v671
        %v4828 = vmul.f32 %v4788, %v671
        %v4829 = vmul.f32 %v4790, %v671
        %v4830 = vmul.f32 %v4792, %v671
        %v4831 = vmul.f32 %v4794, %v671
        %v4832 = vmul.f32 %v4796, %v671
        %v4833 = vmul.f32 %v4798, %v671
        %v4834 = vmul.f32 %v4800, %v671
        %v4835 = vmul.f32 %v4802, %v671
        %v4836 = vmul.f32 %v4804, %v671
        %v4837 = vadd.f32 %v4805, 1e-05
        %v4838 = vadd.f32 %v4806, 1e-05
        %v4839 = vadd.f32 %v4807, 1e-05
        %v4840 = vadd.f32 %v4808, 1e-05
        %v4841 = vadd.f32 %v4809, 1e-05
        %v4842 = vadd.f32 %v4810, 1e-05
        %v4843 = vadd.f32 %v4811, 1e-05
        %v4844 = vadd.f32 %v4812, 1e-05
        %v4845 = vadd.f32 %v4813, 1e-05
        %v4846 = vadd.f32 %v4814, 1e-05
        %v4847 = vadd.f32 %v4815, 1e-05
        %v4848 = vadd.f32 %v4816, 1e-05
        %v4849 = vadd.f32 %v4817, 1e-05
        %v4850 = vadd.f32 %v4818, 1e-05
        %v4851 = vadd.f32 %v4819, 1e-05
        %v4852 = vadd.f32 %v4820, 1e-05
        %v4853 = vadd.f32 %v4821, 1e-05
        %v4854 = vadd.f32 %v4822, 1e-05
        %v4855 = vadd.f32 %v4823, 1e-05
        %v4856 = vadd.f32 %v4824, 1e-05
        %v4857 = vadd.f32 %v4825, 1e-05
        %v4858 = vadd.f32 %v4826, 1e-05
        %v4859 = vadd.f32 %v4827, 1e-05
        %v4860 = vadd.f32 %v4828, 1e-05
        %v4861 = vadd.f32 %v4829, 1e-05
        %v4862 = vadd.f32 %v4830, 1e-05
        %v4863 = vadd.f32 %v4831, 1e-05
        %v4864 = vadd.f32 %v4832, 1e-05
        %v4865 = vadd.f32 %v4833, 1e-05
        %v4866 = vadd.f32 %v4834, 1e-05
        %v4867 = vadd.f32 %v4835, 1e-05
        %v4868 = vadd.f32 %v4836, 1e-05
        %v4869 = vrsqrt.pop %v4837
        %v4870 = vrsqrt.pop %v4838
        %v4871 = vrsqrt.pop %v4839
        %v4872 = vrsqrt.pop %v4840
        %v4873 = vrsqrt.pop %v4841
        %v4874 = vrsqrt.pop %v4842
        %v4875 = vrsqrt.pop %v4843
        %v4876 = vrsqrt.pop %v4844
        %v4877 = vrsqrt.pop %v4845
        %v4878 = vrsqrt.pop %v4846
        %v4879 = vrsqrt.pop %v4847
        %v4880 = vrsqrt.pop %v4848
        %v4881 = vrsqrt.pop %v4849
        %v4882 = vrsqrt.pop %v4850
        %v4883 = vrsqrt.pop %v4851
        %v4884 = vrsqrt.pop %v4852
        %v4885 = vrsqrt.pop %v4853
        %v4886 = vrsqrt.pop %v4854
        %v4887 = vrsqrt.pop %v4855
        %v4888 = vrsqrt.pop %v4856
        %v4889 = vrsqrt.pop %v4857
        %v4890 = vrsqrt.pop %v4858
        %v4891 = vrsqrt.pop %v4859
        %v4892 = vrsqrt.pop %v4860
        %v4893 = vrsqrt.pop %v4861
        %v4894 = vrsqrt.pop %v4862
        %v4895 = vrsqrt.pop %v4863
        %v4896 = vrsqrt.pop %v4864
        %v4897 = vrsqrt.pop %v4865
        %v4898 = vrsqrt.pop %v4866
        %v4899 = vrsqrt.pop %v4867
        %v4900 = vrsqrt.pop %v4868
        %v4901 = vmul.f32 %v4677, %v4869
        %v4902 = vmul.f32 %v4678, %v4870
        %v4903 = vmul.f32 %v4679, %v4871
        %v4904 = vmul.f32 %v4680, %v4872
        %v4905 = vmul.f32 %v4681, %v4873
        %v4906 = vmul.f32 %v4682, %v4874
        %v4907 = vmul.f32 %v4683, %v4875
        %v4908 = vmul.f32 %v4684, %v4876
        %v4909 = vmul.f32 %v4685, %v4877
        %v4910 = vmul.f32 %v4686, %v4878
        %v4911 = vmul.f32 %v4687, %v4879
        %v4912 = vmul.f32 %v4688, %v4880
        %v4913 = vmul.f32 %v4689, %v4881
        %v4914 = vmul.f32 %v4690, %v4882
        %v4915 = vmul.f32 %v4691, %v4883
        %v4916 = vmul.f32 %v4692, %v4884
        %v4917 = vmul.f32 %v4693, %v4885
        %v4918 = vmul.f32 %v4694, %v4886
        %v4919 = vmul.f32 %v4695, %v4887
        %v4920 = vmul.f32 %v4696, %v4888
        %v4921 = vmul.f32 %v4697, %v4889
        %v4922 = vmul.f32 %v4698, %v4890
        %v4923 = vmul.f32 %v4699, %v4891
        %v4924 = vmul.f32 %v4700, %v4892
        %v4925 = vmul.f32 %v4701, %v4893
        %v4926 = vmul.f32 %v4702, %v4894
        %v4927 = vmul.f32 %v4703, %v4895
        %v4928 = vmul.f32 %v4704, %v4896
        %v4929 = vmul.f32 %v4705, %v4897
        %v4930 = vmul.f32 %v4706, %v4898
        %v4931 = vmul.f32 %v4707, %v4899
        %v4932 = vmul.f32 %v4708, %v4900
        %v4934 = vlaneseq
        %v4935 = vshrl.u32 %v4934, 7
        %v4936 = vsub.s32 0, %v4935
        %v4937 = vrot.slane %v4578, %v4936
        %v4939 = vmul.f32 %v4901, %v4937
        %v4940 = vmul.f32 %v4902, %v4937
        %v4941 = vmul.f32 %v4903, %v4937
        %v4942 = vmul.f32 %v4904, %v4937
        %v4943 = vmul.f32 %v4905, %v4937
        %v4944 = vmul.f32 %v4906, %v4937
        %v4945 = vmul.f32 %v4907, %v4937
        %v4946 = vmul.f32 %v4908, %v4937
        %v4947 = vmul.f32 %v4909, %v4937
        %v4948 = vmul.f32 %v4910, %v4937
        %v4949 = vmul.f32 %v4911, %v4937
        %v4950 = vmul.f32 %v4912, %v4937
        %v4951 = vmul.f32 %v4913, %v4937
        %v4952 = vmul.f32 %v4914, %v4937
        %v4953 = vmul.f32 %v4915, %v4937
        %v4954 = vmul.f32 %v4916, %v4937
        %v4955 = vmul.f32 %v4917, %v4937
        %v4956 = vmul.f32 %v4918, %v4937
        %v4957 = vmul.f32 %v4919, %v4937
        %v4958 = vmul.f32 %v4920, %v4937
        %v4959 = vmul.f32 %v4921, %v4937
        %v4960 = vmul.f32 %v4922, %v4937
        %v4961 = vmul.f32 %v4923, %v4937
        %v4962 = vmul.f32 %v4924, %v4937
        %v4963 = vmul.f32 %v4925, %v4937
        %v4964 = vmul.f32 %v4926, %v4937
        %v4965 = vmul.f32 %v4927, %v4937
        %v4966 = vmul.f32 %v4928, %v4937
        %v4967 = vmul.f32 %v4929, %v4937
        %v4968 = vmul.f32 %v4930, %v4937
        %v4969 = vmul.f32 %v4931, %v4937
        %v4970 = vmul.f32 %v4932, %v4937
        %v4972 = vlaneseq
        %v4973 = vshrl.u32 %v4972, 7
        %v4974 = vsub.s32 0, %v4973
        %v4975 = vrot.slane %v4580, %v4974
        %v4977 = vadd.f32 %v4939, %v4975
        %v4978 = vadd.f32 %v4940, %v4975
        %v4979 = vadd.f32 %v4941, %v4975
        %v4980 = vadd.f32 %v4942, %v4975
        %v4981 = vadd.f32 %v4943, %v4975
        %v4982 = vadd.f32 %v4944, %v4975
        %v4983 = vadd.f32 %v4945, %v4975
        %v4984 = vadd.f32 %v4946, %v4975
        %v4985 = vadd.f32 %v4947, %v4975
        %v4986 = vadd.f32 %v4948, %v4975
        %v4987 = vadd.f32 %v4949, %v4975
        %v4988 = vadd.f32 %v4950, %v4975
        %v4989 = vadd.f32 %v4951, %v4975
        %v4990 = vadd.f32 %v4952, %v4975
        %v4991 = vadd.f32 %v4953, %v4975
        %v4992 = vadd.f32 %v4954, %v4975
        %v4993 = vadd.f32 %v4955, %v4975
        %v4994 = vadd.f32 %v4956, %v4975
        %v4995 = vadd.f32 %v4957, %v4975
        %v4996 = vadd.f32 %v4958, %v4975
        %v4997 = vadd.f32 %v4959, %v4975
        %v4998 = vadd.f32 %v4960, %v4975
        %v4999 = vadd.f32 %v4961, %v4975
        %v5000 = vadd.f32 %v4962, %v4975
        %v5001 = vadd.f32 %v4963, %v4975
        %v5002 = vadd.f32 %v4964, %v4975
        %v5003 = vadd.f32 %v4965, %v4975
        %v5004 = vadd.f32 %v4966, %v4975
        %v5005 = vadd.f32 %v4967, %v4975
        %v5006 = vadd.f32 %v4968, %v4975
        %v5007 = vadd.f32 %v4969, %v4975
        %v5008 = vadd.f32 %v4970, %v4975
        %v5009 = vpack.c.bf16 %v4978, %v4977
        %v5010 = vpack.c.bf16 %v4980, %v4979
        %v5011 = vpack.c.bf16 %v4982, %v4981
        %v5012 = vpack.c.bf16 %v4984, %v4983
        %v5013 = vpack.c.bf16 %v4986, %v4985
        %v5014 = vpack.c.bf16 %v4988, %v4987
        %v5015 = vpack.c.bf16 %v4990, %v4989
        %v5016 = vpack.c.bf16 %v4992, %v4991
        %v5017 = vpack.c.bf16 %v4994, %v4993
        %v5018 = vpack.c.bf16 %v4996, %v4995
        %v5019 = vpack.c.bf16 %v4998, %v4997
        %v5020 = vpack.c.bf16 %v5000, %v4999
        %v5021 = vpack.c.bf16 %v5002, %v5001
        %v5022 = vpack.c.bf16 %v5004, %v5003
        %v5023 = vpack.c.bf16 %v5006, %v5005
        %v5024 = vpack.c.bf16 %v5008, %v5007
        %s5025 = smul.u32 %s36, 16
        %s5026 = smul.addr %s5025, 4
        %s5027 = scalar_lea.vmem [#allocation5], %s5026
        %v5028 = vld [vmem:[%s5027] sm:$0xf]
        %v5029 = vld [vmem:[%s5027 + $0x4] sm:$0xf]
        %v5030 = vld [vmem:[%s5027 + $0x8] sm:$0xf]
        %v5031 = vld [vmem:[%s5027 + $0xc] sm:$0xf]
        %v5032 = vld [vmem:[%s5027 + $0x10] sm:$0xf]
        %v5033 = vld [vmem:[%s5027 + $0x14] sm:$0xf]
        %v5034 = vld [vmem:[%s5027 + $0x18] sm:$0xf]
        %v5035 = vld [vmem:[%s5027 + $0x1c] sm:$0xf]
        %v5036 = vld [vmem:[%s5027 + $0x20] sm:$0xf]
        %v5037 = vld [vmem:[%s5027 + $0x24] sm:$0xf]
        %v5038 = vld [vmem:[%s5027 + $0x28] sm:$0xf]
        %v5039 = vld [vmem:[%s5027 + $0x2c] sm:$0xf]
        %v5040 = vld [vmem:[%s5027 + $0x30] sm:$0xf]
        %v5041 = vld [vmem:[%s5027 + $0x34] sm:$0xf]
        %v5042 = vld [vmem:[%s5027 + $0x38] sm:$0xf]
        %v5043 = vld [vmem:[%s5027 + $0x3c] sm:$0xf]
        %s5044 = scalar_lea.vmem %s10, %s36
        %v5045 = vld [vmem:[%s5044] sm:$0x1]
        %v5047 = vlaneseq
        %v5048 = vshrl.u32 %v5047, 7
        %v5049 = vsub.s32 0, %v5048
        %v5050 = vrot.slane %v5045, %v5049
        %v5068 = vunpack.c.l.b16 %v5028
        %v5069 = vunpack.c.l.b16 %v5029
        %v5070 = vunpack.c.l.b16 %v5030
        %v5071 = vunpack.c.l.b16 %v5031
        %v5072 = vunpack.c.l.b16 %v5032
        %v5073 = vunpack.c.l.b16 %v5033
        %v5074 = vunpack.c.l.b16 %v5034
        %v5075 = vunpack.c.l.b16 %v5035
        %v5076 = vunpack.c.l.b16 %v5036
        %v5077 = vunpack.c.l.b16 %v5037
        %v5078 = vunpack.c.l.b16 %v5038
        %v5079 = vunpack.c.l.b16 %v5039
        %v5080 = vunpack.c.l.b16 %v5040
        %v5081 = vunpack.c.l.b16 %v5041
        %v5082 = vunpack.c.l.b16 %v5042
        %v5083 = vunpack.c.l.b16 %v5043
        %v5084 = vpack.c.b16 %v5069, %v5068
        %v5085 = vpack.c.b16 %v5071, %v5070
        %v5086 = vpack.c.b16 %v5073, %v5072
        %v5087 = vpack.c.b16 %v5075, %v5074
        %v5088 = vpack.c.b16 %v5077, %v5076
        %v5089 = vpack.c.b16 %v5079, %v5078
        %v5090 = vpack.c.b16 %v5081, %v5080
        %v5091 = vpack.c.b16 %v5083, %v5082
        %5100 = vmatprep.subr.bf16.mxu0 0
        %5101 = vmatpush1.bf16.msra.mxu0 %v5084
        %5102 = vmatprep.subr.bf16.mxu0 0
        %5103 = vmatpush1.bf16.msra.mxu0 %v5085
        %5104 = vmatprep.subr.bf16.mxu0 0
        %5105 = vmatpush1.bf16.msra.mxu0 %v5086
        %5106 = vmatprep.subr.bf16.mxu0 0
        %5107 = vmatpush1.bf16.msra.mxu0 %v5087
        %5108 = vmatprep.subr.bf16.mxu0 0
        %5109 = vmatpush1.bf16.msra.mxu0 %v5088
        %5110 = vmatprep.subr.bf16.mxu0 0
        %5111 = vmatpush1.bf16.msra.mxu0 %v5089
        %5112 = vmatprep.subr.bf16.mxu0 0
        %5113 = vmatpush1.bf16.msra.mxu0 %v5090
        %5114 = vmatprep.subr.bf16.mxu0 0
        %5115 = vmatpush1.bf16.msra.mxu0 %v5091
        %5116 = vmatprep.subr.bf16.mxu0 0
        %5117 = vmatpush1.bf16.msra.mxu0 0
        %5118 = vmatprep.subr.bf16.mxu0 0
        %5119 = vmatpush1.bf16.msra.mxu0 0
        %5120 = vmatprep.subr.bf16.mxu0 0
        %5121 = vmatpush1.bf16.msra.mxu0 0
        %5122 = vmatprep.subr.bf16.mxu0 0
        %5123 = vmatpush1.bf16.msra.mxu0 0
        %5124 = vmatprep.subr.bf16.mxu0 0
        %5125 = vmatpush1.bf16.msra.mxu0 0
        %5126 = vmatprep.subr.bf16.mxu0 0
        %5127 = vmatpush1.bf16.msra.mxu0 0
        %5128 = vmatprep.subr.bf16.mxu0 0
        %5129 = vmatpush1.bf16.msra.mxu0 0
        %5130 = vmatprep.subr.bf16.mxu0 0
        %5131 = vmatpush1.bf16.msra.mxu0 0
        %5132 = vmatprep.mubr.bf16.mxu0 0
        %5133 = vmatmul.mubr.bf16.gmra.mrb[0].mxu0 %v5009
        %v5134 = vpop.f32.mrb[0].mxu0
        %v5135 = vadd.f32 %v5050, %v5134
        %v5136 = vpop.f32.mrb[0].mxu0
        %v5137 = vpop.f32.mrb[0].mxu0
        %v5138 = vadd.f32 %v5050, %v5137
        %v5139 = vpop.f32.mrb[0].mxu0
        %5140 = vmatprep.mubr.bf16.mxu0 0
        %5141 = vmatmul.mubr.bf16.gmra.mrb[0].mxu0 %v5010
        %v5142 = vpop.f32.mrb[0].mxu0
        %v5143 = vadd.f32 %v5050, %v5142
        %v5144 = vpop.f32.mrb[0].mxu0
        %v5145 = vpop.f32.mrb[0].mxu0
        %v5146 = vadd.f32 %v5050, %v5145
        %v5147 = vpop.f32.mrb[0].mxu0
        %5148 = vmatprep.mubr.bf16.mxu0 0
        %5149 = vmatmul.mubr.bf16.gmra.mrb[0].mxu0 %v5011
        %v5150 = vpop.f32.mrb[0].mxu0
        %v5151 = vadd.f32 %v5050, %v5150
        %v5152 = vpop.f32.mrb[0].mxu0
        %v5153 = vpop.f32.mrb[0].mxu0
        %v5154 = vadd.f32 %v5050, %v5153
        %v5155 = vpop.f32.mrb[0].mxu0
        %5156 = vmatprep.mubr.bf16.mxu0 0
        %5157 = vmatmul.mubr.bf16.gmra.mrb[0].mxu0 %v5012
        %v5158 = vpop.f32.mrb[0].mxu0
        %v5159 = vadd.f32 %v5050, %v5158
        %v5160 = vpop.f32.mrb[0].mxu0
        %v5161 = vpop.f32.mrb[0].mxu0
        %v5162 = vadd.f32 %v5050, %v5161
        %v5163 = vpop.f32.mrb[0].mxu0
        %5164 = vmatprep.mubr.bf16.mxu0 0
        %5165 = vmatmul.mubr.bf16.gmra.mrb[0].mxu0 %v5013
        %v5166 = vpop.f32.mrb[0].mxu0
        %v5167 = vadd.f32 %v5050, %v5166
        %v5168 = vpop.f32.mrb[0].mxu0
        %v5169 = vpop.f32.mrb[0].mxu0
        %v5170 = vadd.f32 %v5050, %v5169
        %v5171 = vpop.f32.mrb[0].mxu0
        %5172 = vmatprep.mubr.bf16.mxu0 0
        %5173 = vmatmul.mubr.bf16.gmra.mrb[0].mxu0 %v5014
        %v5174 = vpop.f32.mrb[0].mxu0
        %v5175 = vadd.f32 %v5050, %v5174
        %v5176 = vpop.f32.mrb[0].mxu0
        %v5177 = vpop.f32.mrb[0].mxu0
        %v5178 = vadd.f32 %v5050, %v5177
        %v5179 = vpop.f32.mrb[0].mxu0
        %5180 = vmatprep.mubr.bf16.mxu0 0
        %5181 = vmatmul.mubr.bf16.gmra.mrb[0].mxu0 %v5015
        %v5182 = vpop.f32.mrb[0].mxu0
        %v5183 = vadd.f32 %v5050, %v5182
        %v5184 = vpop.f32.mrb[0].mxu0
        %v5185 = vpop.f32.mrb[0].mxu0
        %v5186 = vadd.f32 %v5050, %v5185
        %v5187 = vpop.f32.mrb[0].mxu0
        %5188 = vmatprep.mubr.bf16.mxu0 0
        %5189 = vmatmul.mubr.bf16.gmra.mrb[0].mxu0 %v5016
        %v5190 = vpop.f32.mrb[0].mxu0
        %v5191 = vadd.f32 %v5050, %v5190
        %v5192 = vpop.f32.mrb[0].mxu0
        %v5193 = vpop.f32.mrb[0].mxu0
        %v5194 = vadd.f32 %v5050, %v5193
        %v5195 = vpop.f32.mrb[0].mxu0
        %5196 = vmatprep.mubr.bf16.mxu0 0
        %5197 = vmatmul.mubr.bf16.gmra.mrb[0].mxu0 %v5017
        %v5198 = vpop.f32.mrb[0].mxu0
        %v5199 = vadd.f32 %v5050, %v5198
        %v5200 = vpop.f32.mrb[0].mxu0
        %v5201 = vpop.f32.mrb[0].mxu0
        %v5202 = vadd.f32 %v5050, %v5201
        %v5203 = vpop.f32.mrb[0].mxu0
        %5204 = vmatprep.mubr.bf16.mxu0 0
        %5205 = vmatmul.mubr.bf16.gmra.mrb[0].mxu0 %v5018
        %v5206 = vpop.f32.mrb[0].mxu0
        %v5207 = vadd.f32 %v5050, %v5206
        %v5208 = vpop.f32.mrb[0].mxu0
        %v5209 = vpop.f32.mrb[0].mxu0
        %v5210 = vadd.f32 %v5050, %v5209
        %v5211 = vpop.f32.mrb[0].mxu0
        %5212 = vmatprep.mubr.bf16.mxu0 0
        %5213 = vmatmul.mubr.bf16.gmra.mrb[0].mxu0 %v5019
        %v5214 = vpop.f32.mrb[0].mxu0
        %v5215 = vadd.f32 %v5050, %v5214
        %v5216 = vpop.f32.mrb[0].mxu0
        %v5217 = vpop.f32.mrb[0].mxu0
        %v5218 = vadd.f32 %v5050, %v5217
        %v5219 = vpop.f32.mrb[0].mxu0
        %5220 = vmatprep.mubr.bf16.mxu0 0
        %5221 = vmatmul.mubr.bf16.gmra.mrb[0].mxu0 %v5020
        %v5222 = vpop.f32.mrb[0].mxu0
        %v5223 = vadd.f32 %v5050, %v5222
        %v5224 = vpop.f32.mrb[0].mxu0
        %v5225 = vpop.f32.mrb[0].mxu0
        %v5226 = vadd.f32 %v5050, %v5225
        %v5227 = vpop.f32.mrb[0].mxu0
        %5228 = vmatprep.mubr.bf16.mxu0 0
        %5229 = vmatmul.mubr.bf16.gmra.mrb[0].mxu0 %v5021
        %v5230 = vpop.f32.mrb[0].mxu0
        %v5231 = vadd.f32 %v5050, %v5230
        %v5232 = vpop.f32.mrb[0].mxu0
        %v5233 = vpop.f32.mrb[0].mxu0
        %v5234 = vadd.f32 %v5050, %v5233
        %v5235 = vpop.f32.mrb[0].mxu0
        %5236 = vmatprep.mubr.bf16.mxu0 0
        %5237 = vmatmul.mubr.bf16.gmra.mrb[0].mxu0 %v5022
        %v5238 = vpop.f32.mrb[0].mxu0
        %v5239 = vadd.f32 %v5050, %v5238
        %v5240 = vpop.f32.mrb[0].mxu0
        %v5241 = vpop.f32.mrb[0].mxu0
        %v5242 = vadd.f32 %v5050, %v5241
        %v5243 = vpop.f32.mrb[0].mxu0
        %5244 = vmatprep.mubr.bf16.mxu0 0
        %5245 = vmatmul.mubr.bf16.gmra.mrb[0].mxu0 %v5023
        %v5246 = vpop.f32.mrb[0].mxu0
        %v5247 = vadd.f32 %v5050, %v5246
        %v5248 = vpop.f32.mrb[0].mxu0
        %v5249 = vpop.f32.mrb[0].mxu0
        %v5250 = vadd.f32 %v5050, %v5249
        %v5251 = vpop.f32.mrb[0].mxu0
        %5252 = vmatprep.mubr.bf16.mxu0 0
        %5253 = vmatmul.mubr.bf16.gmra.mrb[0].mxu0 %v5024
        %v5254 = vpop.f32.mrb[0].mxu0
        %v5255 = vadd.f32 %v5050, %v5254
        %v5256 = vpop.f32.mrb[0].mxu0
        %v5257 = vpop.f32.mrb[0].mxu0
        %v5258 = vadd.f32 %v5050, %v5257
        %v5259 = vpop.f32.mrb[0].mxu0
        %5260 = vdwg.mxu0
        %v5261 = vmul.f32 %v5135, 0.5
        %v5262 = vmul.f32 %v5138, 0.5
        %v5263 = vmul.f32 %v5143, 0.5
        %v5264 = vmul.f32 %v5146, 0.5
        %v5265 = vmul.f32 %v5151, 0.5
        %v5266 = vmul.f32 %v5154, 0.5
        %v5267 = vmul.f32 %v5159, 0.5
        %v5268 = vmul.f32 %v5162, 0.5
        %v5269 = vmul.f32 %v5167, 0.5
        %v5270 = vmul.f32 %v5170, 0.5
        %v5271 = vmul.f32 %v5175, 0.5
        %v5272 = vmul.f32 %v5178, 0.5
        %v5273 = vmul.f32 %v5183, 0.5
        %v5274 = vmul.f32 %v5186, 0.5
        %v5275 = vmul.f32 %v5191, 0.5
        %v5276 = vmul.f32 %v5194, 0.5
        %v5277 = vmul.f32 %v5199, 0.5
        %v5278 = vmul.f32 %v5202, 0.5
        %v5279 = vmul.f32 %v5207, 0.5
        %v5280 = vmul.f32 %v5210, 0.5
        %v5281 = vmul.f32 %v5215, 0.5
        %v5282 = vmul.f32 %v5218, 0.5
        %v5283 = vmul.f32 %v5223, 0.5
        %v5284 = vmul.f32 %v5226, 0.5
        %v5285 = vmul.f32 %v5231, 0.5
        %v5286 = vmul.f32 %v5234, 0.5
        %v5287 = vmul.f32 %v5239, 0.5
        %v5288 = vmul.f32 %v5242, 0.5
        %v5289 = vmul.f32 %v5247, 0.5
        %v5290 = vmul.f32 %v5250, 0.5
        %v5291 = vmul.f32 %v5255, 0.5
        %v5292 = vmul.f32 %v5258, 0.5
        %v5293 = vmul.f32 %v5135, 0.044715
        %v5294 = vmul.f32 %v5138, 0.044715
        %v5295 = vmul.f32 %v5143, 0.044715
        %v5296 = vmul.f32 %v5146, 0.044715
        %v5297 = vmul.f32 %v5151, 0.044715
        %v5298 = vmul.f32 %v5154, 0.044715
        %v5299 = vmul.f32 %v5159, 0.044715
        %v5300 = vmul.f32 %v5162, 0.044715
        %v5301 = vmul.f32 %v5167, 0.044715
        %v5302 = vmul.f32 %v5170, 0.044715
        %v5303 = vmul.f32 %v5175, 0.044715
        %v5304 = vmul.f32 %v5178, 0.044715
        %v5305 = vmul.f32 %v5183, 0.044715
        %v5306 = vmul.f32 %v5186, 0.044715
        %v5307 = vmul.f32 %v5191, 0.044715
        %v5308 = vmul.f32 %v5194, 0.044715
        %v5309 = vmul.f32 %v5199, 0.044715
        %v5310 = vmul.f32 %v5202, 0.044715
        %v5311 = vmul.f32 %v5207, 0.044715
        %v5312 = vmul.f32 %v5210, 0.044715
        %v5313 = vmul.f32 %v5215, 0.044715
        %v5314 = vmul.f32 %v5218, 0.044715
        %v5315 = vmul.f32 %v5223, 0.044715
        %v5316 = vmul.f32 %v5226, 0.044715
        %v5317 = vmul.f32 %v5231, 0.044715
        %v5318 = vmul.f32 %v5234, 0.044715
        %v5319 = vmul.f32 %v5239, 0.044715
        %v5320 = vmul.f32 %v5242, 0.044715
        %v5321 = vmul.f32 %v5247, 0.044715
        %v5322 = vmul.f32 %v5250, 0.044715
        %v5323 = vmul.f32 %v5255, 0.044715
        %v5324 = vmul.f32 %v5258, 0.044715
        %v5325 = vmul.f32 %v5293, %v5135
        %v5326 = vmul.f32 %v5294, %v5138
        %v5327 = vmul.f32 %v5295, %v5143
        %v5328 = vmul.f32 %v5296, %v5146
        %v5329 = vmul.f32 %v5297, %v5151
        %v5330 = vmul.f32 %v5298, %v5154
        %v5331 = vmul.f32 %v5299, %v5159
        %v5332 = vmul.f32 %v5300, %v5162
        %v5333 = vmul.f32 %v5301, %v5167
        %v5334 = vmul.f32 %v5302, %v5170
        %v5335 = vmul.f32 %v5303, %v5175
        %v5336 = vmul.f32 %v5304, %v5178
        %v5337 = vmul.f32 %v5305, %v5183
        %v5338 = vmul.f32 %v5306, %v5186
        %v5339 = vmul.f32 %v5307, %v5191
        %v5340 = vmul.f32 %v5308, %v5194
        %v5341 = vmul.f32 %v5309, %v5199
        %v5342 = vmul.f32 %v5310, %v5202
        %v5343 = vmul.f32 %v5311, %v5207
        %v5344 = vmul.f32 %v5312, %v5210
        %v5345 = vmul.f32 %v5313, %v5215
        %v5346 = vmul.f32 %v5314, %v5218
        %v5347 = vmul.f32 %v5315, %v5223
        %v5348 = vmul.f32 %v5316, %v5226
        %v5349 = vmul.f32 %v5317, %v5231
        %v5350 = vmul.f32 %v5318, %v5234
        %v5351 = vmul.f32 %v5319, %v5239
        %v5352 = vmul.f32 %v5320, %v5242
        %v5353 = vmul.f32 %v5321, %v5247
        %v5354 = vmul.f32 %v5322, %v5250
        %v5355 = vmul.f32 %v5323, %v5255
        %v5356 = vmul.f32 %v5324, %v5258
        %v5357 = vmul.f32 %v5325, %v5135
        %v5358 = vmul.f32 %v5326, %v5138
        %v5359 = vmul.f32 %v5327, %v5143
        %v5360 = vmul.f32 %v5328, %v5146
        %v5361 = vmul.f32 %v5329, %v5151
        %v5362 = vmul.f32 %v5330, %v5154
        %v5363 = vmul.f32 %v5331, %v5159
        %v5364 = vmul.f32 %v5332, %v5162
        %v5365 = vmul.f32 %v5333, %v5167
        %v5366 = vmul.f32 %v5334, %v5170
        %v5367 = vmul.f32 %v5335, %v5175
        %v5368 = vmul.f32 %v5336, %v5178
        %v5369 = vmul.f32 %v5337, %v5183
        %v5370 = vmul.f32 %v5338, %v5186
        %v5371 = vmul.f32 %v5339, %v5191
        %v5372 = vmul.f32 %v5340, %v5194
        %v5373 = vmul.f32 %v5341, %v5199
        %v5374 = vmul.f32 %v5342, %v5202
        %v5375 = vmul.f32 %v5343, %v5207
        %v5376 = vmul.f32 %v5344, %v5210
        %v5377 = vmul.f32 %v5345, %v5215
        %v5378 = vmul.f32 %v5346, %v5218
        %v5379 = vmul.f32 %v5347, %v5223
        %v5380 = vmul.f32 %v5348, %v5226
        %v5381 = vmul.f32 %v5349, %v5231
        %v5382 = vmul.f32 %v5350, %v5234
        %v5383 = vmul.f32 %v5351, %v5239
        %v5384 = vmul.f32 %v5352, %v5242
        %v5385 = vmul.f32 %v5353, %v5247
        %v5386 = vmul.f32 %v5354, %v5250
        %v5387 = vmul.f32 %v5355, %v5255
        %v5388 = vmul.f32 %v5356, %v5258
        %v5389 = vadd.f32 %v5135, %v5357
        %v5390 = vadd.f32 %v5138, %v5358
        %v5391 = vadd.f32 %v5143, %v5359
        %v5392 = vadd.f32 %v5146, %v5360
        %v5393 = vadd.f32 %v5151, %v5361
        %v5394 = vadd.f32 %v5154, %v5362
        %v5395 = vadd.f32 %v5159, %v5363
        %v5396 = vadd.f32 %v5162, %v5364
        %v5397 = vadd.f32 %v5167, %v5365
        %v5398 = vadd.f32 %v5170, %v5366
        %v5399 = vadd.f32 %v5175, %v5367
        %v5400 = vadd.f32 %v5178, %v5368
        %v5401 = vadd.f32 %v5183, %v5369
        %v5402 = vadd.f32 %v5186, %v5370
        %v5403 = vadd.f32 %v5191, %v5371
        %v5404 = vadd.f32 %v5194, %v5372
        %v5405 = vadd.f32 %v5199, %v5373
        %v5406 = vadd.f32 %v5202, %v5374
        %v5407 = vadd.f32 %v5207, %v5375
        %v5408 = vadd.f32 %v5210, %v5376
        %v5409 = vadd.f32 %v5215, %v5377
        %v5410 = vadd.f32 %v5218, %v5378
        %v5411 = vadd.f32 %v5223, %v5379
        %v5412 = vadd.f32 %v5226, %v5380
        %v5413 = vadd.f32 %v5231, %v5381
        %v5414 = vadd.f32 %v5234, %v5382
        %v5415 = vadd.f32 %v5239, %v5383
        %v5416 = vadd.f32 %v5242, %v5384
        %v5417 = vadd.f32 %v5247, %v5385
        %v5418 = vadd.f32 %v5250, %v5386
        %v5419 = vadd.f32 %v5255, %v5387
        %v5420 = vadd.f32 %v5258, %v5388
        %v5421 = vmul.f32 %v5389, 0.7978846
        %v5422 = vmul.f32 %v5390, 0.7978846
        %v5423 = vmul.f32 %v5391, 0.7978846
        %v5424 = vmul.f32 %v5392, 0.7978846
        %v5425 = vmul.f32 %v5393, 0.7978846
        %v5426 = vmul.f32 %v5394, 0.7978846
        %v5427 = vmul.f32 %v5395, 0.7978846
        %v5428 = vmul.f32 %v5396, 0.7978846
        %v5429 = vmul.f32 %v5397, 0.7978846
        %v5430 = vmul.f32 %v5398, 0.7978846
        %v5431 = vmul.f32 %v5399, 0.7978846
        %v5432 = vmul.f32 %v5400, 0.7978846
        %v5433 = vmul.f32 %v5401, 0.7978846
        %v5434 = vmul.f32 %v5402, 0.7978846
        %v5435 = vmul.f32 %v5403, 0.7978846
        %v5436 = vmul.f32 %v5404, 0.7978846
        %v5437 = vmul.f32 %v5405, 0.7978846
        %v5438 = vmul.f32 %v5406, 0.7978846
        %v5439 = vmul.f32 %v5407, 0.7978846
        %v5440 = vmul.f32 %v5408, 0.7978846
        %v5441 = vmul.f32 %v5409, 0.7978846
        %v5442 = vmul.f32 %v5410, 0.7978846
        %v5443 = vmul.f32 %v5411, 0.7978846
        %v5444 = vmul.f32 %v5412, 0.7978846
        %v5445 = vmul.f32 %v5413, 0.7978846
        %v5446 = vmul.f32 %v5414, 0.7978846
        %v5447 = vmul.f32 %v5415, 0.7978846
        %v5448 = vmul.f32 %v5416, 0.7978846
        %v5449 = vmul.f32 %v5417, 0.7978846
        %v5450 = vmul.f32 %v5418, 0.7978846
        %v5451 = vmul.f32 %v5419, 0.7978846
        %v5452 = vmul.f32 %v5420, 0.7978846
        %v5453 = vtanh.pop %v5421
        %v5454 = vtanh.pop %v5422
        %v5455 = vtanh.pop %v5423
        %v5456 = vtanh.pop %v5424
        %v5457 = vtanh.pop %v5425
        %v5458 = vtanh.pop %v5426
        %v5459 = vtanh.pop %v5427
        %v5460 = vtanh.pop %v5428
        %v5461 = vtanh.pop %v5429
        %v5462 = vtanh.pop %v5430
        %v5463 = vtanh.pop %v5431
        %v5464 = vtanh.pop %v5432
        %v5465 = vtanh.pop %v5433
        %v5466 = vtanh.pop %v5434
        %v5467 = vtanh.pop %v5435
        %v5468 = vtanh.pop %v5436
        %v5469 = vtanh.pop %v5437
        %v5470 = vtanh.pop %v5438
        %v5471 = vtanh.pop %v5439
        %v5472 = vtanh.pop %v5440
        %v5473 = vtanh.pop %v5441
        %v5474 = vtanh.pop %v5442
        %v5475 = vtanh.pop %v5443
        %v5476 = vtanh.pop %v5444
        %v5477 = vtanh.pop %v5445
        %v5478 = vtanh.pop %v5446
        %v5479 = vtanh.pop %v5447
        %v5480 = vtanh.pop %v5448
        %v5481 = vtanh.pop %v5449
        %v5482 = vtanh.pop %v5450
        %v5483 = vtanh.pop %v5451
        %v5484 = vtanh.pop %v5452
        %v5485 = vadd.f32 %v5453, 1.0
        %v5486 = vadd.f32 %v5454, 1.0
        %v5487 = vadd.f32 %v5455, 1.0
        %v5488 = vadd.f32 %v5456, 1.0
        %v5489 = vadd.f32 %v5457, 1.0
        %v5490 = vadd.f32 %v5458, 1.0
        %v5491 = vadd.f32 %v5459, 1.0
        %v5492 = vadd.f32 %v5460, 1.0
        %v5493 = vadd.f32 %v5461, 1.0
        %v5494 = vadd.f32 %v5462, 1.0
        %v5495 = vadd.f32 %v5463, 1.0
        %v5496 = vadd.f32 %v5464, 1.0
        %v5497 = vadd.f32 %v5465, 1.0
        %v5498 = vadd.f32 %v5466, 1.0
        %v5499 = vadd.f32 %v5467, 1.0
        %v5500 = vadd.f32 %v5468, 1.0
        %v5501 = vadd.f32 %v5469, 1.0
        %v5502 = vadd.f32 %v5470, 1.0
        %v5503 = vadd.f32 %v5471, 1.0
        %v5504 = vadd.f32 %v5472, 1.0
        %v5505 = vadd.f32 %v5473, 1.0
        %v5506 = vadd.f32 %v5474, 1.0
        %v5507 = vadd.f32 %v5475, 1.0
        %v5508 = vadd.f32 %v5476, 1.0
        %v5509 = vadd.f32 %v5477, 1.0
        %v5510 = vadd.f32 %v5478, 1.0
        %v5511 = vadd.f32 %v5479, 1.0
        %v5512 = vadd.f32 %v5480, 1.0
        %v5513 = vadd.f32 %v5481, 1.0
        %v5514 = vadd.f32 %v5482, 1.0
        %v5515 = vadd.f32 %v5483, 1.0
        %v5516 = vadd.f32 %v5484, 1.0
        %v5517 = vmul.f32 %v5261, %v5485
        %v5518 = vmul.f32 %v5262, %v5486
        %v5519 = vmul.f32 %v5263, %v5487
        %v5520 = vmul.f32 %v5264, %v5488
        %v5521 = vmul.f32 %v5265, %v5489
        %v5522 = vmul.f32 %v5266, %v5490
        %v5523 = vmul.f32 %v5267, %v5491
        %v5524 = vmul.f32 %v5268, %v5492
        %v5525 = vmul.f32 %v5269, %v5493
        %v5526 = vmul.f32 %v5270, %v5494
        %v5527 = vmul.f32 %v5271, %v5495
        %v5528 = vmul.f32 %v5272, %v5496
        %v5529 = vmul.f32 %v5273, %v5497
        %v5530 = vmul.f32 %v5274, %v5498
        %v5531 = vmul.f32 %v5275, %v5499
        %v5532 = vmul.f32 %v5276, %v5500
        %v5533 = vmul.f32 %v5277, %v5501
        %v5534 = vmul.f32 %v5278, %v5502
        %v5535 = vmul.f32 %v5279, %v5503
        %v5536 = vmul.f32 %v5280, %v5504
        %v5537 = vmul.f32 %v5281, %v5505
        %v5538 = vmul.f32 %v5282, %v5506
        %v5539 = vmul.f32 %v5283, %v5507
        %v5540 = vmul.f32 %v5284, %v5508
        %v5541 = vmul.f32 %v5285, %v5509
        %v5542 = vmul.f32 %v5286, %v5510
        %v5543 = vmul.f32 %v5287, %v5511
        %v5544 = vmul.f32 %v5288, %v5512
        %v5545 = vmul.f32 %v5289, %v5513
        %v5546 = vmul.f32 %v5290, %v5514
        %v5547 = vmul.f32 %v5291, %v5515
        %v5548 = vmul.f32 %v5292, %v5516
        %v5549 = vpack.c.bf16 %v5518, %v5517
        %v5550 = vpack.c.bf16 %v5520, %v5519
        %v5551 = vpack.c.bf16 %v5522, %v5521
        %v5552 = vpack.c.bf16 %v5524, %v5523
        %v5553 = vpack.c.bf16 %v5526, %v5525
        %v5554 = vpack.c.bf16 %v5528, %v5527
        %v5555 = vpack.c.bf16 %v5530, %v5529
        %v5556 = vpack.c.bf16 %v5532, %v5531
        %v5557 = vpack.c.bf16 %v5534, %v5533
        %v5558 = vpack.c.bf16 %v5536, %v5535
        %v5559 = vpack.c.bf16 %v5538, %v5537
        %v5560 = vpack.c.bf16 %v5540, %v5539
        %v5561 = vpack.c.bf16 %v5542, %v5541
        %v5562 = vpack.c.bf16 %v5544, %v5543
        %v5563 = vpack.c.bf16 %v5546, %v5545
        %v5564 = vpack.c.bf16 %v5548, %v5547
        %s5565 = smul.addr %s5025, 4
        %s5566 = scalar_lea.vmem [#allocation7], %s5565
        %v5567 = vld [vmem:[%s5566] sm:$0xf]
        %v5568 = vld [vmem:[%s5566 + $0x4] sm:$0xf]
        %v5569 = vld [vmem:[%s5566 + $0x8] sm:$0xf]
        %v5570 = vld [vmem:[%s5566 + $0xc] sm:$0xf]
        %v5571 = vld [vmem:[%s5566 + $0x10] sm:$0xf]
        %v5572 = vld [vmem:[%s5566 + $0x14] sm:$0xf]
        %v5573 = vld [vmem:[%s5566 + $0x18] sm:$0xf]
        %v5574 = vld [vmem:[%s5566 + $0x1c] sm:$0xf]
        %v5575 = vld [vmem:[%s5566 + $0x20] sm:$0xf]
        %v5576 = vld [vmem:[%s5566 + $0x24] sm:$0xf]
        %v5577 = vld [vmem:[%s5566 + $0x28] sm:$0xf]
        %v5578 = vld [vmem:[%s5566 + $0x2c] sm:$0xf]
        %v5579 = vld [vmem:[%s5566 + $0x30] sm:$0xf]
        %v5580 = vld [vmem:[%s5566 + $0x34] sm:$0xf]
        %v5581 = vld [vmem:[%s5566 + $0x38] sm:$0xf]
        %v5582 = vld [vmem:[%s5566 + $0x3c] sm:$0xf]
        %s5583 = scalar_lea.vmem %s12, %s36
        %v5584 = vld [vmem:[%s5583] sm:$0x1]
        %v5586 = vlaneseq
        %v5587 = vshrl.u32 %v5586, 7
        %v5588 = vsub.s32 0, %v5587
        %v5589 = vrot.slane %v5584, %v5588
        %v5607 = vunpack.c.l.b16 %v5567
        %v5608 = vunpack.c.l.b16 %v5568
        %v5609 = vunpack.c.l.b16 %v5569
        %v5610 = vunpack.c.l.b16 %v5570
        %v5611 = vunpack.c.l.b16 %v5571
        %v5612 = vunpack.c.l.b16 %v5572
        %v5613 = vunpack.c.l.b16 %v5573
        %v5614 = vunpack.c.l.b16 %v5574
        %v5615 = vunpack.c.l.b16 %v5575
        %v5616 = vunpack.c.l.b16 %v5576
        %v5617 = vunpack.c.l.b16 %v5577
        %v5618 = vunpack.c.l.b16 %v5578
        %v5619 = vunpack.c.l.b16 %v5579
        %v5620 = vunpack.c.l.b16 %v5580
        %v5621 = vunpack.c.l.b16 %v5581
        %v5622 = vunpack.c.l.b16 %v5582
        %v5623 = vpack.c.b16 %v5608, %v5607
        %v5624 = vpack.c.b16 %v5610, %v5609
        %v5625 = vpack.c.b16 %v5612, %v5611
        %v5626 = vpack.c.b16 %v5614, %v5613
        %v5627 = vpack.c.b16 %v5616, %v5615
        %v5628 = vpack.c.b16 %v5618, %v5617
        %v5629 = vpack.c.b16 %v5620, %v5619
        %v5630 = vpack.c.b16 %v5622, %v5621
        %5639 = vmatprep.subr.bf16.mxu0 0
        %5640 = vmatpush1.bf16.msra.mxu0 %v5623
        %5641 = vmatprep.subr.bf16.mxu0 0
        %5642 = vmatpush1.bf16.msra.mxu0 %v5624
        %5643 = vmatprep.subr.bf16.mxu0 0
        %5644 = vmatpush1.bf16.msra.mxu0 %v5625
        %5645 = vmatprep.subr.bf16.mxu0 0
        %5646 = vmatpush1.bf16.msra.mxu0 %v5626
        %5647 = vmatprep.subr.bf16.mxu0 0
        %5648 = vmatpush1.bf16.msra.mxu0 %v5627
        %5649 = vmatprep.subr.bf16.mxu0 0
        %5650 = vmatpush1.bf16.msra.mxu0 %v5628
        %5651 = vmatprep.subr.bf16.mxu0 0
        %5652 = vmatpush1.bf16.msra.mxu0 %v5629
        %5653 = vmatprep.subr.bf16.mxu0 0
        %5654 = vmatpush1.bf16.msra.mxu0 %v5630
        %5655 = vmatprep.subr.bf16.mxu0 0
        %5656 = vmatpush1.bf16.msra.mxu0 0
        %5657 = vmatprep.subr.bf16.mxu0 0
        %5658 = vmatpush1.bf16.msra.mxu0 0
        %5659 = vmatprep.subr.bf16.mxu0 0
        %5660 = vmatpush1.bf16.msra.mxu0 0
        %5661 = vmatprep.subr.bf16.mxu0 0
        %5662 = vmatpush1.bf16.msra.mxu0 0
        %5663 = vmatprep.subr.bf16.mxu0 0
        %5664 = vmatpush1.bf16.msra.mxu0 0
        %5665 = vmatprep.subr.bf16.mxu0 0
        %5666 = vmatpush1.bf16.msra.mxu0 0
        %5667 = vmatprep.subr.bf16.mxu0 0
        %5668 = vmatpush1.bf16.msra.mxu0 0
        %5669 = vmatprep.subr.bf16.mxu0 0
        %5670 = vmatpush1.bf16.msra.mxu0 0
        %5671 = vmatprep.mubr.bf16.mxu0 0
        %5672 = vmatmul.mubr.bf16.gmra.mrb[0].mxu0 %v5549
        %v5673 = vpop.f32.mrb[0].mxu0
        %v5674 = vadd.f32 %v5589, %v5673
        %v5675 = vpop.f32.mrb[0].mxu0
        %v5676 = vpop.f32.mrb[0].mxu0
        %v5677 = vadd.f32 %v5589, %v5676
        %v5678 = vpop.f32.mrb[0].mxu0
        %5679 = vmatprep.mubr.bf16.mxu0 0
        %5680 = vmatmul.mubr.bf16.gmra.mrb[0].mxu0 %v5550
        %v5681 = vpop.f32.mrb[0].mxu0
        %v5682 = vadd.f32 %v5589, %v5681
        %v5683 = vpop.f32.mrb[0].mxu0
        %v5684 = vpop.f32.mrb[0].mxu0
        %v5685 = vadd.f32 %v5589, %v5684
        %v5686 = vpop.f32.mrb[0].mxu0
        %5687 = vmatprep.mubr.bf16.mxu0 0
        %5688 = vmatmul.mubr.bf16.gmra.mrb[0].mxu0 %v5551
        %v5689 = vpop.f32.mrb[0].mxu0
        %v5690 = vadd.f32 %v5589, %v5689
        %v5691 = vpop.f32.mrb[0].mxu0
        %v5692 = vpop.f32.mrb[0].mxu0
        %v5693 = vadd.f32 %v5589, %v5692
        %v5694 = vpop.f32.mrb[0].mxu0
        %5695 = vmatprep.mubr.bf16.mxu0 0
        %5696 = vmatmul.mubr.bf16.gmra.mrb[0].mxu0 %v5552
        %v5697 = vpop.f32.mrb[0].mxu0
        %v5698 = vadd.f32 %v5589, %v5697
        %v5699 = vpop.f32.mrb[0].mxu0
        %v5700 = vpop.f32.mrb[0].mxu0
        %v5701 = vadd.f32 %v5589, %v5700
        %v5702 = vpop.f32.mrb[0].mxu0
        %5703 = vmatprep.mubr.bf16.mxu0 0
        %5704 = vmatmul.mubr.bf16.gmra.mrb[0].mxu0 %v5553
        %v5705 = vpop.f32.mrb[0].mxu0
        %v5706 = vadd.f32 %v5589, %v5705
        %v5707 = vpop.f32.mrb[0].mxu0
        %v5708 = vpop.f32.mrb[0].mxu0
        %v5709 = vadd.f32 %v5589, %v5708
        %v5710 = vpop.f32.mrb[0].mxu0
        %5711 = vmatprep.mubr.bf16.mxu0 0
        %5712 = vmatmul.mubr.bf16.gmra.mrb[0].mxu0 %v5554
        %v5713 = vpop.f32.mrb[0].mxu0
        %v5714 = vadd.f32 %v5589, %v5713
        %v5715 = vpop.f32.mrb[0].mxu0
        %v5716 = vpop.f32.mrb[0].mxu0
        %v5717 = vadd.f32 %v5589, %v5716
        %v5718 = vpop.f32.mrb[0].mxu0
        %5719 = vmatprep.mubr.bf16.mxu0 0
        %5720 = vmatmul.mubr.bf16.gmra.mrb[0].mxu0 %v5555
        %v5721 = vpop.f32.mrb[0].mxu0
        %v5722 = vadd.f32 %v5589, %v5721
        %v5723 = vpop.f32.mrb[0].mxu0
        %v5724 = vpop.f32.mrb[0].mxu0
        %v5725 = vadd.f32 %v5589, %v5724
        %v5726 = vpop.f32.mrb[0].mxu0
        %5727 = vmatprep.mubr.bf16.mxu0 0
        %5728 = vmatmul.mubr.bf16.gmra.mrb[0].mxu0 %v5556
        %v5729 = vpop.f32.mrb[0].mxu0
        %v5730 = vadd.f32 %v5589, %v5729
        %v5731 = vpop.f32.mrb[0].mxu0
        %v5732 = vpop.f32.mrb[0].mxu0
        %v5733 = vadd.f32 %v5589, %v5732
        %v5734 = vpop.f32.mrb[0].mxu0
        %5735 = vmatprep.mubr.bf16.mxu0 0
        %5736 = vmatmul.mubr.bf16.gmra.mrb[0].mxu0 %v5557
        %v5737 = vpop.f32.mrb[0].mxu0
        %v5738 = vadd.f32 %v5589, %v5737
        %v5739 = vpop.f32.mrb[0].mxu0
        %v5740 = vpop.f32.mrb[0].mxu0
        %v5741 = vadd.f32 %v5589, %v5740
        %v5742 = vpop.f32.mrb[0].mxu0
        %5743 = vmatprep.mubr.bf16.mxu0 0
        %5744 = vmatmul.mubr.bf16.gmra.mrb[0].mxu0 %v5558
        %v5745 = vpop.f32.mrb[0].mxu0
        %v5746 = vadd.f32 %v5589, %v5745
        %v5747 = vpop.f32.mrb[0].mxu0
        %v5748 = vpop.f32.mrb[0].mxu0
        %v5749 = vadd.f32 %v5589, %v5748
        %v5750 = vpop.f32.mrb[0].mxu0
        %5751 = vmatprep.mubr.bf16.mxu0 0
        %5752 = vmatmul.mubr.bf16.gmra.mrb[0].mxu0 %v5559
        %v5753 = vpop.f32.mrb[0].mxu0
        %v5754 = vadd.f32 %v5589, %v5753
        %v5755 = vpop.f32.mrb[0].mxu0
        %v5756 = vpop.f32.mrb[0].mxu0
        %v5757 = vadd.f32 %v5589, %v5756
        %v5758 = vpop.f32.mrb[0].mxu0
        %5759 = vmatprep.mubr.bf16.mxu0 0
        %5760 = vmatmul.mubr.bf16.gmra.mrb[0].mxu0 %v5560
        %v5761 = vpop.f32.mrb[0].mxu0
        %v5762 = vadd.f32 %v5589, %v5761
        %v5763 = vpop.f32.mrb[0].mxu0
        %v5764 = vpop.f32.mrb[0].mxu0
        %v5765 = vadd.f32 %v5589, %v5764
        %v5766 = vpop.f32.mrb[0].mxu0
        %5767 = vmatprep.mubr.bf16.mxu0 0
        %5768 = vmatmul.mubr.bf16.gmra.mrb[0].mxu0 %v5561
        %v5769 = vpop.f32.mrb[0].mxu0
        %v5770 = vadd.f32 %v5589, %v5769
        %v5771 = vpop.f32.mrb[0].mxu0
        %v5772 = vpop.f32.mrb[0].mxu0
        %v5773 = vadd.f32 %v5589, %v5772
        %v5774 = vpop.f32.mrb[0].mxu0
        %5775 = vmatprep.mubr.bf16.mxu0 0
        %5776 = vmatmul.mubr.bf16.gmra.mrb[0].mxu0 %v5562
        %v5777 = vpop.f32.mrb[0].mxu0
        %v5778 = vadd.f32 %v5589, %v5777
        %v5779 = vpop.f32.mrb[0].mxu0
        %v5780 = vpop.f32.mrb[0].mxu0
        %v5781 = vadd.f32 %v5589, %v5780
        %v5782 = vpop.f32.mrb[0].mxu0
        %5783 = vmatprep.mubr.bf16.mxu0 0
        %5784 = vmatmul.mubr.bf16.gmra.mrb[0].mxu0 %v5563
        %v5785 = vpop.f32.mrb[0].mxu0
        %v5786 = vadd.f32 %v5589, %v5785
        %v5787 = vpop.f32.mrb[0].mxu0
        %v5788 = vpop.f32.mrb[0].mxu0
        %v5789 = vadd.f32 %v5589, %v5788
        %v5790 = vpop.f32.mrb[0].mxu0
        %5791 = vmatprep.mubr.bf16.mxu0 0
        %5792 = vmatmul.mubr.bf16.gmra.mrb[0].mxu0 %v5564
        %v5793 = vpop.f32.mrb[0].mxu0
        %v5794 = vadd.f32 %v5589, %v5793
        %v5795 = vpop.f32.mrb[0].mxu0
        %v5796 = vpop.f32.mrb[0].mxu0
        %v5797 = vadd.f32 %v5589, %v5796
        %v5798 = vpop.f32.mrb[0].mxu0
        %5799 = vdwg.mxu0
        %v5800 = vadd.f32 %v5674, %v4545
        %v5801 = vadd.f32 %v5677, %v4546
        %v5802 = vadd.f32 %v5682, %v4547
        %v5803 = vadd.f32 %v5685, %v4548
        %v5804 = vadd.f32 %v5690, %v4549
        %v5805 = vadd.f32 %v5693, %v4550
        %v5806 = vadd.f32 %v5698, %v4551
        %v5807 = vadd.f32 %v5701, %v4552
        %v5808 = vadd.f32 %v5706, %v4553
        %v5809 = vadd.f32 %v5709, %v4554
        %v5810 = vadd.f32 %v5714, %v4555
        %v5811 = vadd.f32 %v5717, %v4556
        %v5812 = vadd.f32 %v5722, %v4557
        %v5813 = vadd.f32 %v5725, %v4558
        %v5814 = vadd.f32 %v5730, %v4559
        %v5815 = vadd.f32 %v5733, %v4560
        %v5816 = vadd.f32 %v5738, %v4561
        %v5817 = vadd.f32 %v5741, %v4562
        %v5818 = vadd.f32 %v5746, %v4563
        %v5819 = vadd.f32 %v5749, %v4564
        %v5820 = vadd.f32 %v5754, %v4565
        %v5821 = vadd.f32 %v5757, %v4566
        %v5822 = vadd.f32 %v5762, %v4567
        %v5823 = vadd.f32 %v5765, %v4568
        %v5824 = vadd.f32 %v5770, %v4569
        %v5825 = vadd.f32 %v5773, %v4570
        %v5826 = vadd.f32 %v5778, %v4571
        %v5827 = vadd.f32 %v5781, %v4572
        %v5828 = vadd.f32 %v5786, %v4573
        %v5829 = vadd.f32 %v5789, %v4574
        %v5830 = vadd.f32 %v5794, %v4575
        %v5831 = vadd.f32 %v5797, %v4576
        %5832 = vst [vmem:[%s499] sm:$0xff] %v5800
        %5833 = vst [vmem:[%s499 + $0x8] sm:$0xff] %v5801
        %5834 = vst [vmem:[%s499 + $0x10] sm:$0xff] %v5802
        %5835 = vst [vmem:[%s499 + $0x18] sm:$0xff] %v5803
        %5836 = vst [vmem:[%s499 + $0x20] sm:$0xff] %v5804
        %5837 = vst [vmem:[%s499 + $0x28] sm:$0xff] %v5805
        %5838 = vst [vmem:[%s499 + $0x30] sm:$0xff] %v5806
        %5839 = vst [vmem:[%s499 + $0x38] sm:$0xff] %v5807
        %5840 = vst [vmem:[%s499 + $0x40] sm:$0xff] %v5808
        %5841 = vst [vmem:[%s499 + $0x48] sm:$0xff] %v5809
        %5842 = vst [vmem:[%s499 + $0x50] sm:$0xff] %v5810
        %5843 = vst [vmem:[%s499 + $0x58] sm:$0xff] %v5811
        %5844 = vst [vmem:[%s499 + $0x60] sm:$0xff] %v5812
        %5845 = vst [vmem:[%s499 + $0x68] sm:$0xff] %v5813
        %5846 = vst [vmem:[%s499 + $0x70] sm:$0xff] %v5814
        %5847 = vst [vmem:[%s499 + $0x78] sm:$0xff] %v5815
        %5848 = vst [vmem:[%s499 + $0x80] sm:$0xff] %v5816
        %5849 = vst [vmem:[%s499 + $0x88] sm:$0xff] %v5817
        %5850 = vst [vmem:[%s499 + $0x90] sm:$0xff] %v5818
        %5851 = vst [vmem:[%s499 + $0x98] sm:$0xff] %v5819
        %5852 = vst [vmem:[%s499 + $0xa0] sm:$0xff] %v5820
        %5853 = vst [vmem:[%s499 + $0xa8] sm:$0xff] %v5821
        %5854 = vst [vmem:[%s499 + $0xb0] sm:$0xff] %v5822
        %5855 = vst [vmem:[%s499 + $0xb8] sm:$0xff] %v5823
        %5856 = vst [vmem:[%s499 + $0xc0] sm:$0xff] %v5824
        %5857 = vst [vmem:[%s499 + $0xc8] sm:$0xff] %v5825
        %5858 = vst [vmem:[%s499 + $0xd0] sm:$0xff] %v5826
        %5859 = vst [vmem:[%s499 + $0xd8] sm:$0xff] %v5827
        %5860 = vst [vmem:[%s499 + $0xe0] sm:$0xff] %v5828
        %5861 = vst [vmem:[%s499 + $0xe8] sm:$0xff] %v5829
        %5862 = vst [vmem:[%s499 + $0xf0] sm:$0xff] %v5830
        %5863 = vst [vmem:[%s499 + $0xf8] sm:$0xff] %v5831
        %s5864 = sand.u32 %s329, 1
        %s5865 = scalar_lea.sflag [#allocation4], %s5864
        %s5866 = sand.u32 %s329, 1
        %s5867 = smul.addr %s5866, 256
        %s5868 = scalar_lea.vmem [#allocation8], %s5867
        // Predicated region
        $region89: #{tpu_custom_call.1} parent=71 // pred_check
          %p5869 = pneg %p339
        $region90: #{tpu_custom_call.1} parent=71 // pred_check_branch
          %5871 = sbr.rel (%p5869) target = $region92
        $region91: #{tpu_custom_call.1} parent=71 // pred_region
          %s5872 = smul.u32 32, %s35
          %s5874 = ssub.s32 4096, 4096
          %5875 = vsyncadd %s5865, %s5874
          %s5876 = smul.addr %s5872, 128
          %s5877 = scalar_lea.hbm %s13, %s5876
          %s5878 = sshll.u32 %s5868, 4
          %s5879 = int_to_ptr.vmem [resolvable:$true] %s5878
          %5884 = dma.vmem_to_hbm [thread:$0]  %s5879, 4096, %s5877, %s5865, 128, 128, 8
        $region92: #{tpu_custom_call.1} parent=71 // pred_fallthru
          _
      $region72: #{tpu_custom_call.1} parent=5 // pred_fallthru
        _
      %p5885 = scmp.le.s32.totalorder 2, %s26
      // Predicated region
      $region93: #{tpu_custom_call.1} parent=5 // pred_check
        %p5886 = pneg %p5885
      $region94: #{tpu_custom_call.1} parent=5 // pred_check_branch
        %5888 = sbr.rel (%p5886) target = $region96
      $region95: #{tpu_custom_call.1} parent=5 // pred_region
        %s5889 = ssub.s32 %s26, 2
        // Predicated region
        $region97: #{tpu_custom_call.1} parent=95 // pred_check
          %p5890 = pneg %p345
        $region98: #{tpu_custom_call.1} parent=95 // pred_check_branch
          %5892 = sbr.rel (%p5890) target = $region100
        $region99: #{tpu_custom_call.1} parent=95 // pred_region
          %s5893 = sand.u32 %s330, 1
          %s5894 = scalar_lea.sflag [#allocation4], %s5893
          %s5895 = sand.u32 %s330, 1
          %s5896 = smul.addr %s5895, 256
          %s5897 = scalar_lea.vmem [#allocation8], %s5896
          %5898 = dma.done %s5894, 4096
        $region100: #{tpu_custom_call.1} parent=95 // pred_fallthru
          _
      $region96: #{tpu_custom_call.1} parent=5 // pred_fallthru
        _
    $region6: #{tpu_custom_call.1} parent=1 // loop_footer
      %s30 = sadd.s32 1, %s26
    $region7: #{tpu_custom_call.1} parent=1 // loop_footer_branch
      %25 = sbr.rel target = $region3
    $region8: #{tpu_custom_call.1} parent=1 // loop_exit
      _
    %5899 = vsyncpa [#allocation3], 1
    %s5900 = scalar_lea.sflag [#allocation3], 1
    %5901 = vsyncpa %s5900, 1
    %5902 = vsyncpa [#allocation6], 1
    %5903 = vsyncpa [#allocation4], 1
    %s5904 = scalar_lea.sflag [#allocation4], 1
    %5905 = vsyncpa %s5904, 1

</llo_original>
